<compile_context>
chip_gen: v7x
topology: tpu7x:2x2x1
jax: 0.10.0
libtpu: 0.0.40
codegen_flags: <defaults>
</compile_context>

<pallas_src>
import math
import functools

import jax
import jax.numpy as jnp
from jax import lax
from jax.experimental import pallas as pl
from jax.experimental.pallas import tpu as pltpu

# ---------------- model hyper-parameters (fixed by the PyTorch spec) -----------
D_MODEL = 32            # d_model == emb_dim (required by the PyTorch forward)
N_HEAD = 4
HEAD_DIM = D_MODEL // N_HEAD          # 8
N_LAYERS = 3
DIM_FF = 2 * D_MODEL                  # 64
VOCAB = 50
SEQ = 8
BATCH = 2
LN_EPS = 1e-5

N_TOK = BATCH * SEQ                   # 16 flattened (batch-major) token rows
NBLK = BATCH * N_HEAD * SEQ           # 64 attention block rows (b, h, j)
KV_W = 2 * D_MODEL                    # 64 lanes: [K | V]
EMB_PAD = 64                          # vocab padded to 64 -> one MXU pass
NEG_INF = -1e30

# ---------------- packed weight slab: per-layer bands, all lane-0 aligned ------
WR_Q = 0                  # rows [0,32)   : Wq^T           (32 x 32)
WR_KV = 32                # rows [32,64)  : [Wk^T | Wv^T]  (32 x 64)
WR_O = 64                 # rows [64,128) : Wo_pad         (64 x 32), rows [64,96) zero
WR_F1 = 128               # rows [128,160): W1^T           (32 x 64)
WR_F2 = 160               # rows [160,224): W2^T           (64 x 32)
W_ROWS = 224
W_COLS = 64

# ---------------- packed vector / constant slab (width 64) ---------------------
VL_STRIDE = 16            # rows per layer (padded to a sublane multiple)
VR_BQ, VR_BKV, VR_BO, VR_B1, VR_B2, VR_LN1W, VR_LN1B, VR_LN2W, VR_LN2B = range(9)
VR_LNFW = 48
VR_LNFB = 49
VR_WOUT = 50
VR_BOUT = 51
VR_PE = 56                # rows [56,72)   : positional encoding, row b*S+s = pe[s]
VR_EMB = 72               # rows [72,136)  : embedding table (VOCAB rows used)
VR_KVM = 136              # rows [136,200) : head mask for [K|V] block rows  (64 x 64)
VR_SUMM = 200             # rows [200,264) : same-head summation mask        (64 x 64)
VR_SBIAS = 264            # rows [264,280) : cross-batch additive score bias (16 x 64)
VR_G = 280                # rows [280,344) : row-replication gather matrix   (64 x 16)
VR_SEL = 344              # rows [344,346) : selects rows {0, S} (== x[0])   ( 2 x 16)
VC_ROWS = 352


def _layernorm(x, w, b):
    mu = jnp.mean(x, axis=-1, keepdims=True)
    xc = x - mu
    var = jnp.mean(xc * xc, axis=-1, keepdims=True)
    return xc * lax.rsqrt(var + LN_EPS) * w + b


# ---------------- stride-0 (sublane broadcast) load probe ----------------------
_STRIDE0_OK = None


def _stride0_supported():
    """One-time probe: do stride-0 broadcast ref loads lower (and behave) here?"""
    global _STRIDE0_OK
    if _STRIDE0_OK is None:
        def _probe(x_ref, o_ref):
            o_ref[...] = x_ref[pl.ds(0, 8, stride=0), :]
        try:
            x = jnp.arange(8 * 128, dtype=jnp.float32).reshape(8, 128)
            y = pl.pallas_call(
                _probe,
                out_shape=jax.ShapeDtypeStruct((8, 128), jnp.float32),
                in_specs=[pl.BlockSpec(memory_space=pltpu.MemorySpace.VMEM)],
                out_specs=pl.BlockSpec(memory_space=pltpu.MemorySpace.VMEM),
            )(x)
            _STRIDE0_OK = bool(jnp.allclose(
                jax.block_until_ready(y),
                jnp.broadcast_to(x[0:1, :], (8, 128))))
        except Exception:
            _STRIDE0_OK = False
    return _STRIDE0_OK


# ------------------------------- the kernel ------------------------------------
def model_kernel(tok_ref, w_ref, vc_ref, out_ref, *, use_stride0):
    D, FF, S, N = D_MODEL, DIM_FF, SEQ, N_TOK
    f32 = jnp.float32
    scale = 1.0 / math.sqrt(HEAD_DIM)

    def brow(row, n, width):
        # broadcast one slab row to n rows
        if use_stride0:
            v = vc_ref[pl.ds(row, n, stride=0), :]       # stride-0 vld (load slot)
        else:
            v = vc_ref[row:row + 1, :]                   # (1, 64) + implicit broadcast
        return v[:, :width]

    # ---- fused embedding gather (one-hot @ table, K=64) + positional encoding ----
    tok = tok_ref[...]                                                  # (16, 1) int32
    onehot = (lax.broadcasted_iota(jnp.int32, (N, EMB_PAD), 1) == tok).astype(f32)
    emb = vc_ref[VR_EMB:VR_EMB + EMB_PAD, 0:D]                          # (64, 32)
    x = jnp.dot(onehot, emb, preferred_element_type=f32)
    x = x + vc_ref[VR_PE:VR_PE + N, 0:D]                                # (16, 32)

    for l in range(N_LAYERS):                          # static unroll over 3 layers
        r0 = VL_STRIDE * l
        wq = w_ref[l, WR_Q:WR_Q + D, 0:D]              # (32, 32)
        wkv = w_ref[l, WR_KV:WR_KV + D, :]             # (32, 64)
        wo = w_ref[l, WR_O:WR_O + KV_W, 0:D]           # (64, 32)  rows [0,32) are zero
        w1 = w_ref[l, WR_F1:WR_F1 + D, :]              # (32, 64)
        w2 = w_ref[l, WR_F2:WR_F2 + FF, 0:D]           # (64, 32)
        kvm = vc_ref[VR_KVM:VR_KVM + NBLK, :]          # (64, 64) head mask for [K|V]
        summ = vc_ref[VR_SUMM:VR_SUMM + NBLK, :]       # (64, 64) same-head sum mask
        sbias = vc_ref[VR_SBIAS:VR_SBIAS + N, :]       # (16, 64) cross-batch -> -1e30
        gmat = vc_ref[VR_G:VR_G + NBLK, 0:N]           # (64, 16) row replication

        # ---- multi-head self-attention: all heads AND both batch rows at once ----
        q = jnp.dot(x, wq, preferred_element_type=f32) + brow(r0 + VR_BQ, N, D)
        kv = jnp.dot(x, wkv, preferred_element_type=f32) + brow(r0 + VR_BKV, N, KV_W)
        # Block-row expansion: row b*H*S + h*S + j holds (K|V) of token (b, j),
        # masked to the lanes of head h.  One tiny MXU gather, no concats.
        kvblk = jnp.dot(gmat, kv, preferred_element_type=f32) * kvm        # (64, 64)
        # scores[i, b*H*S + h*S + j] = <q_h[i], k_h[b, j]>; cross-batch cols -> -1e30
        s = lax.dot_general(q, kvblk[:, 0:D], (((1,), (1,)), ((), ())),
                            preferred_element_type=f32) * scale + sbias    # (16, 64)
        s = s - jnp.max(s, axis=-1, keepdims=True)     # per-row shift cancels per head
        p = jnp.exp(s)                                 # cross-batch cols become exactly 0
        denom = jnp.dot(p, summ, preferred_element_type=f32)   # per-head softmax denom
        p = p * pl.reciprocal(denom, approx=True)
        # ctx lands in lanes [D, 2D); lanes [0, D) are killed by Wo_pad's zero rows.
        ctx = jnp.dot(p, kvblk, preferred_element_type=f32)                # (16, 64)
        attn = jnp.dot(ctx, wo, preferred_element_type=f32) + brow(r0 + VR_BO, N, D)
        x = _layernorm(x + attn,
                       brow(r0 + VR_LN1W, N, D), brow(r0 + VR_LN1B, N, D))

        # ---- feed-forward (ReLU) ----
        ff = jnp.maximum(jnp.dot(x, w1, preferred_element_type=f32)
                         + brow(r0 + VR_B1, N, FF), 0.0)
        ff = jnp.dot(ff, w2, preferred_element_type=f32) + brow(r0 + VR_B2, N, D)
        x = _layernorm(x + ff,
                       brow(r0 + VR_LN2W, N, D), brow(r0 + VR_LN2B, N, D))

    # ---- pick x[0] of each sequence, final LayerNorm, linear head, exact sigmoid ----
    sel2 = vc_ref[VR_SEL:VR_SEL + BATCH, 0:N]                           # (2, 16)
    x0 = jnp.dot(sel2, x, preferred_element_type=f32)                   # (2, 32)
    x0 = _layernorm(x0, brow(VR_LNFW, BATCH, D), brow(VR_LNFB, BATCH, D))
    logit = jnp.sum(x0 * brow(VR_WOUT, BATCH, D), axis=-1, keepdims=True) \
        + brow(VR_BOUT, BATCH, 1)                                       # (2, 1)
    out_ref[...] = 1.0 / (1.0 + jnp.exp(-logit))                        # exact sigmoid


# ------------------------- parameter construction -------------------------
def make_positional_encoding(d_model, max_len=512):
    position = jnp.arange(max_len, dtype=jnp.float32)[:, None]
    div_term = jnp.exp(jnp.arange(0, d_model, 2, dtype=jnp.float32)
                       * (-math.log(10000.0) / d_model))
    pe_sin = jnp.sin(position * div_term)
    pe_cos = jnp.cos(position * div_term)
    pe = jnp.stack([pe_sin, pe_cos], axis=-1).reshape(max_len, d_model)
    return pe[:, None, :]                    # (max_len, 1, d_model)


def make_params(key):
    d, ff, V, L = D_MODEL, DIM_FF, VOCAB, N_LAYERS
    ks = jax.random.split(key, 10)
    u = lambda k, shape, s=0.1: jax.random.uniform(k, shape, jnp.float32, -s, s)
    # weights stored pre-transposed ("*_t") so forward does x @ W
    return dict(
        emb=u(ks[0], (V, d)),                               # uniform(-0.1, 0.1)
        wqkv_t=u(ks[1], (L, d, 3 * d)),
        bqkv=u(ks[2], (L, 3 * d), 0.01),
        wo_t=u(ks[3], (L, d, d)),
        bo=u(ks[4], (L, d), 0.01),
        w1_t=u(ks[5], (L, d, ff)),
        b1=u(ks[6], (L, ff), 0.01),
        w2_t=u(ks[7], (L, ff, d)),
        b2=u(ks[8], (L, d), 0.01),
        ln1w=jnp.ones((L, d), jnp.float32), ln1b=jnp.zeros((L, d), jnp.float32),
        ln2w=jnp.ones((L, d), jnp.float32), ln2b=jnp.zeros((L, d), jnp.float32),
        lnfw=jnp.ones((d,), jnp.float32), lnfb=jnp.zeros((d,), jnp.float32),
        wout_t=u(ks[9], (d, 1)),                            # l_out weight
        bout=jnp.zeros((1,), jnp.float32),                  # l_out bias (zeroed)
    )


def pack_buffers(params, pe):
    """Pack the parameter tensors + attention constants into two slabs."""
    d, ff, V, L = D_MODEL, DIM_FF, VOCAB, N_LAYERS
    hd, H, S, B = HEAD_DIM, N_HEAD, SEQ, BATCH

    W = jnp.zeros((L, W_ROWS, W_COLS), jnp.float32)
    for l in range(L):
        wqkv = params['wqkv_t'][l]                      # (d, 3d): [q | k | v]
        W = W.at[l, WR_Q:WR_Q + d, 0:d].set(wqkv[:, 0:d])
        W = W.at[l, WR_KV:WR_KV + d, 0:d].set(wqkv[:, d:2 * d])
        W = W.at[l, WR_KV:WR_KV + d, d:2 * d].set(wqkv[:, 2 * d:3 * d])
        W = W.at[l, WR_O + d:WR_O + 2 * d, 0:d].set(params['wo_t'][l])  # rows [0,d)=0
        W = W.at[l, WR_F1:WR_F1 + d, 0:ff].set(params['w1_t'][l])
        W = W.at[l, WR_F2:WR_F2 + ff, 0:d].set(params['w2_t'][l])

    VC = jnp.zeros((VC_ROWS, W_COLS), jnp.float32)
    for l in range(L):
        r0 = VL_STRIDE * l
        VC = VC.at[r0 + VR_BQ, 0:d].set(params['bqkv'][l][0:d])
        VC = VC.at[r0 + VR_BKV, 0:2 * d].set(params['bqkv'][l][d:3 * d])
        VC = VC.at[r0 + VR_BO, 0:d].set(params['bo'][l])
        VC = VC.at[r0 + VR_B1, 0:ff].set(params['b1'][l])
        VC = VC.at[r0 + VR_B2, 0:d].set(params['b2'][l])
        VC = VC.at[r0 + VR_LN1W, 0:d].set(params['ln1w'][l])
        VC = VC.at[r0 + VR_LN1B, 0:d].set(params['ln1b'][l])
        VC = VC.at[r0 + VR_LN2W, 0:d].set(params['ln2w'][l])
        VC = VC.at[r0 + VR_LN2B, 0:d].set(params['ln2b'][l])
    VC = VC.at[VR_LNFW, 0:d].set(params['lnfw'])
    VC = VC.at[VR_LNFB, 0:d].set(params['lnfb'])
    VC = VC.at[VR_WOUT, 0:d].set(params['wout_t'][:, 0])
    VC = VC.at[VR_BOUT, 0].set(params['bout'][0])
    VC = VC.at[VR_PE:VR_PE + B * S, 0:d].set(jnp.tile(pe[:S, 0, :], (B, 1)))
    VC = VC.at[VR_EMB:VR_EMB + V, 0:d].set(params['emb'])

    # ---- precomputed attention constants (host-built, DMA'd once) ----
    blk = jnp.arange(NBLK)                      # block row = b*H*S + h*S + j
    h_blk = (blk // S) % H                      # head of each block row
    src = (blk // (H * S)) * S + (blk % S)      # flattened token row (b*S + j)
    feat = jnp.arange(KV_W)
    h_feat = (feat % d) // hd                   # head of each [K|V] lane
    kvm = (h_blk[:, None] == h_feat[None, :]).astype(jnp.float32)           # (64, 64)
    summ = (h_blk[:, None] == h_blk[None, :]).astype(jnp.float32)           # (64, 64)
    rows = jnp.arange(B * S)
    sbias = jnp.where(rows[:, None] // S == blk[None, :] // (H * S),
                      0.0, NEG_INF).astype(jnp.float32)                     # (16, 64)
    gmat = (src[:, None] == rows[None, :]).astype(jnp.float32)              # (64, 16)
    sel2 = ((jnp.arange(B) * S)[:, None] == rows[None, :]).astype(jnp.float32)  # (2,16)
    VC = VC.at[VR_KVM:VR_KVM + NBLK, 0:KV_W].set(kvm)
    VC = VC.at[VR_SUMM:VR_SUMM + NBLK, 0:NBLK].set(summ)
    VC = VC.at[VR_SBIAS:VR_SBIAS + B * S, 0:NBLK].set(sbias)
    VC = VC.at[VR_G:VR_G + NBLK, 0:B * S].set(gmat)
    VC = VC.at[VR_SEL:VR_SEL + B, 0:B * S].set(sel2)
    return W, VC


def model_forward(tokens, w_packed, vc_packed):
    # tokens: (S, B) int32, PyTorch seq-first convention
    S, B = tokens.shape
    tok_flat = jnp.transpose(tokens).reshape(B * S, 1).astype(jnp.int32)
    kernel = functools.partial(model_kernel, use_stride0=_stride0_supported())
    out = pl.pallas_call(
        kernel,
        out_shape=jax.ShapeDtypeStruct((B, 1), jnp.float32),
        in_specs=[pl.BlockSpec(memory_space=pltpu.MemorySpace.VMEM)] * 3,
        out_specs=pl.BlockSpec(memory_space=pltpu.MemorySpace.VMEM),
    )(tok_flat, w_packed, vc_packed)
    return jnp.squeeze(out, axis=-1)                # (B,)  == torch .squeeze()


# ------------------------- plain-JAX reference -------------------------
def reference_forward(tokens, p, pe):
    S, B = tokens.shape
    H, hd = N_HEAD, HEAD_DIM
    x = p['emb'][tokens] + pe[:S]                   # (S, B, D)
    x = jnp.transpose(x, (1, 0, 2))                 # (B, S, D)
    for l in range(N_LAYERS):
        qkv = x @ p['wqkv_t'][l] + p['bqkv'][l]
        q, k, v = jnp.split(qkv, 3, axis=-1)
        q = q.reshape(B, S, H, hd).transpose(0, 2, 1, 3)
        k = k.reshape(B, S, H, hd).transpose(0, 2, 1, 3)
        v = v.reshape(B, S, H, hd).transpose(0, 2, 1, 3)
        s = (q @ jnp.swapaxes(k, -1, -2)) / math.sqrt(hd)
        pr = jax.nn.softmax(s, axis=-1)
        ctx = (pr @ v).transpose(0, 2, 1, 3).reshape(B, S, D_MODEL)
        attn = ctx @ p['wo_t'][l] + p['bo'][l]
        x = _layernorm(x + attn, p['ln1w'][l], p['ln1b'][l])
        h1 = jnp.maximum(x @ p['w1_t'][l] + p['b1'][l], 0.0)
        h2 = h1 @ p['w2_t'][l] + p['b2'][l]
        x = _layernorm(x + h2, p['ln2w'][l], p['ln2b'][l])
    x = _layernorm(x, p['lnfw'], p['lnfb'])
    logit = x[:, 0, :] @ p['wout_t'] + p['bout']
    return jax.nn.sigmoid(logit)[:, 0]


if __name__ == "__main__":
    key = jax.random.PRNGKey(0)
    k_tok, k_par = jax.random.split(key)

    params = make_params(k_par)
    pe = make_positional_encoding(D_MODEL)
    w_packed, vc_packed = pack_buffers(params, pe)

    tokens = jax.random.randint(k_tok, (SEQ, BATCH), 0, VOCAB, dtype=jnp.int32)

    out = jax.block_until_ready(model_forward(tokens, w_packed, vc_packed))
    assert out.shape == (BATCH,)
    assert bool(jnp.all(jnp.isfinite(out)))

    # correctness check against a plain-JAX reference (eval-mode semantics)
    with jax.default_matmul_precision('highest'):
        ref = jax.block_until_ready(reference_forward(tokens, params, pe))
    assert jnp.allclose(out, ref, atol=5e-3, rtol=5e-3), (out, ref)

    print("KERNEL_OK")
</pallas_src>

<mosaic_0001>
module attributes {stable_mosaic.version = 11 : i64} {
  func.func @_probe(%arg0: memref<8x128xf32, #tpu.memory_space<vmem>>, %arg1: memref<8x128xf32, #tpu.memory_space<vmem>>) attributes {dimension_semantics = [], scalar_prefetch = 0 : i64, scratch_operands = 0 : i64, tpu.core_type = #tpu.core_type<tc>} {
    %c0 = arith.constant 0 : index
    %c0_0 = arith.constant 0 : index
    %0 = tpu.strided_load %arg0[%c0, %c0_0] {strides = array<i32: 0, 1>} : memref<8x128xf32, #tpu.memory_space<vmem>>, vector<8x128xf32>
    %c0_1 = arith.constant 0 : index
    %c0_2 = arith.constant 0 : index
    %1 = vector.load %arg1[%c0_1, %c0_2] : memref<8x128xf32, #tpu.memory_space<vmem>>, vector<8x128xf32>
    tpu.vector_store %arg1[%c0_1, %c0_2], %0 {strides = array<i32>} : memref<8x128xf32, #tpu.memory_space<vmem>>, vector<8x128xf32>,
    return
  }
}

module attributes {stable_mosaic.version = 11 : i64} {
  func.func @model_kernel(%arg0: memref<16x1xi32, #tpu.memory_space<vmem>>, %arg1: memref<3x224x64xf32, #tpu.memory_space<vmem>>, %arg2: memref<352x64xf32, #tpu.memory_space<vmem>>, %arg3: memref<2x1xf32, #tpu.memory_space<vmem>>) attributes {dimension_semantics = [], scalar_prefetch = 0 : i64, scratch_operands = 0 : i64, tpu.core_type = #tpu.core_type<tc>} {
    %c0 = arith.constant 0 : index
    %c0_0 = arith.constant 0 : index
    %0 = vector.load %arg0[%c0, %c0_0] : memref<16x1xi32, #tpu.memory_space<vmem>>, vector<16x1xi32>
    %1 = tpu.iota {dimensions = array<i32: 1>} : vector<16x64xi32>
    %2 = vector.broadcast %0 : vector<16x1xi32> to vector<16x64xi32>
    %3 = arith.cmpi eq, %1, %2 : vector<16x64xi32>
    %4 = arith.extui %3 : vector<16x64xi1> to vector<16x64xi32>
    %5 = arith.sitofp %4 : vector<16x64xi32> to vector<16x64xf32>
    %c72 = arith.constant 72 : index
    %c0_1 = arith.constant 0 : index
    %6 = vector.load %arg2[%c72, %c0_1] : memref<352x64xf32, #tpu.memory_space<vmem>>, vector<64x32xf32>
    %cst = arith.constant dense<0.000000e+00> : vector<16x32xf32>
    %7 = tpu.matmul %5, %6, %cst {dimension_numbers = #tpu.dot_dimension_numbers<[1], [0], [0], [1], [0, 0, 1, 1], [], []>} : vector<16x64xf32>, vector<64x32xf32>, vector<16x32xf32> -> vector<16x32xf32>
    %c56 = arith.constant 56 : index
    %c0_2 = arith.constant 0 : index
    %8 = vector.load %arg2[%c56, %c0_2] : memref<352x64xf32, #tpu.memory_space<vmem>>, vector<16x32xf32>
    %9 = arith.addf %7, %8 : vector<16x32xf32>
    %c0_3 = arith.constant 0 : index
    %c0_4 = arith.constant 0 : index
    %c0_5 = arith.constant 0 : index
    %10 = vector.load %arg1[%c0_3, %c0_4, %c0_5] : memref<3x224x64xf32, #tpu.memory_space<vmem>>, vector<1x32x32xf32>
    %11 = vector.shape_cast %10 : vector<1x32x32xf32> to vector<32x32xf32>
    %c0_6 = arith.constant 0 : index
    %c32 = arith.constant 32 : index
    %c0_7 = arith.constant 0 : index
    %12 = vector.load %arg1[%c0_6, %c32, %c0_7] : memref<3x224x64xf32, #tpu.memory_space<vmem>>, vector<1x32x64xf32>
    %13 = vector.shape_cast %12 : vector<1x32x64xf32> to vector<32x64xf32>
    %c0_8 = arith.constant 0 : index
    %c64 = arith.constant 64 : index
    %c0_9 = arith.constant 0 : index
    %14 = vector.load %arg1[%c0_8, %c64, %c0_9] : memref<3x224x64xf32, #tpu.memory_space<vmem>>, vector<1x64x32xf32>
    %15 = vector.shape_cast %14 : vector<1x64x32xf32> to vector<64x32xf32>
    %c0_10 = arith.constant 0 : index
    %c128 = arith.constant 128 : index
    %c0_11 = arith.constant 0 : index
    %16 = vector.load %arg1[%c0_10, %c128, %c0_11] : memref<3x224x64xf32, #tpu.memory_space<vmem>>, vector<1x32x64xf32>
    %17 = vector.shape_cast %16 : vector<1x32x64xf32> to vector<32x64xf32>
    %c0_12 = arith.constant 0 : index
    %c160 = arith.constant 160 : index
    %c0_13 = arith.constant 0 : index
    %18 = vector.load %arg1[%c0_12, %c160, %c0_13] : memref<3x224x64xf32, #tpu.memory_space<vmem>>, vector<1x64x32xf32>
    %19 = vector.shape_cast %18 : vector<1x64x32xf32> to vector<64x32xf32>
    %c136 = arith.constant 136 : index
    %c0_14 = arith.constant 0 : index
    %20 = vector.load %arg2[%c136, %c0_14] : memref<352x64xf32, #tpu.memory_space<vmem>>, vector<64x64xf32>
    %c200 = arith.constant 200 : index
    %c0_15 = arith.constant 0 : index
    %21 = vector.load %arg2[%c200, %c0_15] : memref<352x64xf32, #tpu.memory_space<vmem>>, vector<64x64xf32>
    %c264 = arith.constant 264 : index
    %c0_16 = arith.constant 0 : index
    %22 = vector.load %arg2[%c264, %c0_16] : memref<352x64xf32, #tpu.memory_space<vmem>>, vector<16x64xf32>
    %c280 = arith.constant 280 : index
    %c0_17 = arith.constant 0 : index
    %23 = vector.load %arg2[%c280, %c0_17] : memref<352x64xf32, #tpu.memory_space<vmem>>, vector<64x16xf32>
    %cst_18 = arith.constant dense<0.000000e+00> : vector<16x32xf32>
    %24 = tpu.matmul %9, %11, %cst_18 {dimension_numbers = #tpu.dot_dimension_numbers<[1], [0], [0], [1], [0, 0, 1, 1], [], []>} : vector<16x32xf32>, vector<32x32xf32>, vector<16x32xf32> -> vector<16x32xf32>
    %c0_19 = arith.constant 0 : index
    %c0_20 = arith.constant 0 : index
    %25 = vector.load %arg2[%c0_19, %c0_20] : memref<352x64xf32, #tpu.memory_space<vmem>>, vector<1x64xf32>
    %26 = vector.extract_strided_slice %25 {offsets = [0, 0], sizes = [1, 32], strides = [1, 1]} : vector<1x64xf32> to vector<1x32xf32>
    %27 = vector.broadcast %26 : vector<1x32xf32> to vector<16x32xf32>
    %28 = arith.addf %24, %27 : vector<16x32xf32>
    %cst_21 = arith.constant dense<0.000000e+00> : vector<16x64xf32>
    %29 = tpu.matmul %9, %13, %cst_21 {dimension_numbers = #tpu.dot_dimension_numbers<[1], [0], [0], [1], [0, 0, 1, 1], [], []>} : vector<16x32xf32>, vector<32x64xf32>, vector<16x64xf32> -> vector<16x64xf32>
    %c1 = arith.constant 1 : index
    %c0_22 = arith.constant 0 : index
    %30 = vector.load %arg2[%c1, %c0_22] : memref<352x64xf32, #tpu.memory_space<vmem>>, vector<1x64xf32>
    %31 = vector.broadcast %30 : vector<1x64xf32> to vector<16x64xf32>
    %32 = arith.addf %29, %31 : vector<16x64xf32>
    %cst_23 = arith.constant dense<0.000000e+00> : vector<64x64xf32>
    %33 = tpu.matmul %23, %32, %cst_23 {dimension_numbers = #tpu.dot_dimension_numbers<[1], [0], [0], [1], [0, 0, 1, 1], [], []>} : vector<64x16xf32>, vector<16x64xf32>, vector<64x64xf32> -> vector<64x64xf32>
    %34 = arith.mulf %33, %20 : vector<64x64xf32>
    %35 = vector.extract_strided_slice %34 {offsets = [0, 0], sizes = [64, 32], strides = [1, 1]} : vector<64x64xf32> to vector<64x32xf32>
    %cst_24 = arith.constant dense<0.000000e+00> : vector<16x64xf32>
    %36 = tpu.matmul %28, %35, %cst_24 {dimension_numbers = #tpu.dot_dimension_numbers<[1], [1], [0], [0], [0, 0, 1, 0], [], []>} : vector<16x32xf32>, vector<64x32xf32>, vector<16x64xf32> -> vector<16x64xf32>
    %cst_25 = arith.constant 0.353553385 : f32
    %37 = vector.broadcast %cst_25 : f32 to vector<16x64xf32>
    %38 = arith.mulf %36, %37 : vector<16x64xf32>
    %39 = arith.addf %38, %22 : vector<16x64xf32>
    %cst_26 = arith.constant dense<0xFF800000> : vector<16xf32>
    %40 = vector.multi_reduction <maximumf>, %39, %cst_26 [1] : vector<16x64xf32> to vector<16xf32>
    %41 = vector.shape_cast %40 : vector<16xf32> to vector<16x1xf32>
    %42 = vector.broadcast %41 : vector<16x1xf32> to vector<16x64xf32>
    %43 = arith.subf %39, %42 : vector<16x64xf32>
    %44 = math.exp %43 : vector<16x64xf32>
    %cst_27 = arith.constant dense<0.000000e+00> : vector<16x64xf32>
    %45 = tpu.matmul %44, %21, %cst_27 {dimension_numbers = #tpu.dot_dimension_numbers<[1], [0], [0], [1], [0, 0, 1, 1], [], []>} : vector<16x64xf32>, vector<64x64xf32>, vector<16x64xf32> -> vector<16x64xf32>
    %46 = tpu.reciprocal %45 {approx = true} : vector<16x64xf32> -> vector<16x64xf32>
    %47 = arith.mulf %44, %46 : vector<16x64xf32>
    %cst_28 = arith.constant dense<0.000000e+00> : vector<16x64xf32>
    %48 = tpu.matmul %47, %34, %cst_28 {dimension_numbers = #tpu.dot_dimension_numbers<[1], [0], [0], [1], [0, 0, 1, 1], [], []>} : vector<16x64xf32>, vector<64x64xf32>, vector<16x64xf32> -> vector<16x64xf32>
    %cst_29 = arith.constant dense<0.000000e+00> : vector<16x32xf32>
    %49 = tpu.matmul %48, %15, %cst_29 {dimension_numbers = #tpu.dot_dimension_numbers<[1], [0], [0], [1], [0, 0, 1, 1], [], []>} : vector<16x64xf32>, vector<64x32xf32>, vector<16x32xf32> -> vector<16x32xf32>
    %c2 = arith.constant 2 : index
    %c0_30 = arith.constant 0 : index
    %50 = vector.load %arg2[%c2, %c0_30] : memref<352x64xf32, #tpu.memory_space<vmem>>, vector<1x64xf32>
    %51 = vector.extract_strided_slice %50 {offsets = [0, 0], sizes = [1, 32], strides = [1, 1]} : vector<1x64xf32> to vector<1x32xf32>
    %52 = vector.broadcast %51 : vector<1x32xf32> to vector<16x32xf32>
    %53 = arith.addf %49, %52 : vector<16x32xf32>
    %54 = arith.addf %9, %53 : vector<16x32xf32>
    %c5 = arith.constant 5 : index
    %c0_31 = arith.constant 0 : index
    %55 = vector.load %arg2[%c5, %c0_31] : memref<352x64xf32, #tpu.memory_space<vmem>>, vector<1x64xf32>
    %56 = vector.extract_strided_slice %55 {offsets = [0, 0], sizes = [1, 32], strides = [1, 1]} : vector<1x64xf32> to vector<1x32xf32>
    %c6 = arith.constant 6 : index
    %c0_32 = arith.constant 0 : index
    %57 = vector.load %arg2[%c6, %c0_32] : memref<352x64xf32, #tpu.memory_space<vmem>>, vector<1x64xf32>
    %58 = vector.extract_strided_slice %57 {offsets = [0, 0], sizes = [1, 32], strides = [1, 1]} : vector<1x64xf32> to vector<1x32xf32>
    %cst_33 = arith.constant dense<0.000000e+00> : vector<16xf32>
    %59 = vector.multi_reduction <add>, %54, %cst_33 [1] : vector<16x32xf32> to vector<16xf32>
    %60 = vector.shape_cast %59 : vector<16xf32> to vector<16x1xf32>
    %cst_34 = arith.constant 3.200000e+01 : f32
    %61 = vector.broadcast %cst_34 : f32 to vector<16x1xf32>
    %62 = arith.divf %60, %61 : vector<16x1xf32>
    %63 = vector.broadcast %62 : vector<16x1xf32> to vector<16x32xf32>
    %64 = arith.subf %54, %63 : vector<16x32xf32>
    %65 = arith.mulf %64, %64 : vector<16x32xf32>
    %cst_35 = arith.constant dense<0.000000e+00> : vector<16xf32>
    %66 = vector.multi_reduction <add>, %65, %cst_35 [1] : vector<16x32xf32> to vector<16xf32>
    %67 = vector.shape_cast %66 : vector<16xf32> to vector<16x1xf32>
    %cst_36 = arith.constant 3.200000e+01 : f32
    %68 = vector.broadcast %cst_36 : f32 to vector<16x1xf32>
    %69 = arith.divf %67, %68 : vector<16x1xf32>
    %cst_37 = arith.constant 9.99999974E-6 : f32
    %70 = vector.broadcast %cst_37 : f32 to vector<16x1xf32>
    %71 = arith.addf %69, %70 : vector<16x1xf32>
    %72 = math.rsqrt %71 : vector<16x1xf32>
    %73 = vector.broadcast %72 : vector<16x1xf32> to vector<16x32xf32>
    %74 = arith.mulf %64, %73 : vector<16x32xf32>
    %75 = vector.broadcast %56 : vector<1x32xf32> to vector<16x32xf32>
    %76 = arith.mulf %74, %75 : vector<16x32xf32>
    %77 = vector.broadcast %58 : vector<1x32xf32> to vector<16x32xf32>
    %78 = arith.addf %76, %77 : vector<16x32xf32>
    %cst_38 = arith.constant dense<0.000000e+00> : vector<16x64xf32>
    %79 = tpu.matmul %78, %17, %cst_38 {dimension_numbers = #tpu.dot_dimension_numbers<[1], [0], [0], [1], [0, 0, 1, 1], [], []>} : vector<16x32xf32>, vector<32x64xf32>, vector<16x64xf32> -> vector<16x64xf32>
    %c3 = arith.constant 3 : index
    %c0_39 = arith.constant 0 : index
    %80 = vector.load %arg2[%c3, %c0_39] : memref<352x64xf32, #tpu.memory_space<vmem>>, vector<1x64xf32>
    %81 = vector.broadcast %80 : vector<1x64xf32> to vector<16x64xf32>
    %82 = arith.addf %79, %81 : vector<16x64xf32>
    %cst_40 = arith.constant 0.000000e+00 : f32
    %83 = vector.broadcast %cst_40 : f32 to vector<16x64xf32>
    %84 = arith.maximumf %82, %83 : vector<16x64xf32>
    %cst_41 = arith.constant dense<0.000000e+00> : vector<16x32xf32>
    %85 = tpu.matmul %84, %19, %cst_41 {dimension_numbers = #tpu.dot_dimension_numbers<[1], [0], [0], [1], [0, 0, 1, 1], [], []>} : vector<16x64xf32>, vector<64x32xf32>, vector<16x32xf32> -> vector<16x32xf32>
    %c4 = arith.constant 4 : index
    %c0_42 = arith.constant 0 : index
    %86 = vector.load %arg2[%c4, %c0_42] : memref<352x64xf32, #tpu.memory_space<vmem>>, vector<1x64xf32>
    %87 = vector.extract_strided_slice %86 {offsets = [0, 0], sizes = [1, 32], strides = [1, 1]} : vector<1x64xf32> to vector<1x32xf32>
    %88 = vector.broadcast %87 : vector<1x32xf32> to vector<16x32xf32>
    %89 = arith.addf %85, %88 : vector<16x32xf32>
    %90 = arith.addf %78, %89 : vector<16x32xf32>
    %c7 = arith.constant 7 : index
    %c0_43 = arith.constant 0 : index
    %91 = vector.load %arg2[%c7, %c0_43] : memref<352x64xf32, #tpu.memory_space<vmem>>, vector<1x64xf32>
    %92 = vector.extract_strided_slice %91 {offsets = [0, 0], sizes = [1, 32], strides = [1, 1]} : vector<1x64xf32> to vector<1x32xf32>
    %c8 = arith.constant 8 : index
    %c0_44 = arith.constant 0 : index
    %93 = vector.load %arg2[%c8, %c0_44] : memref<352x64xf32, #tpu.memory_space<vmem>>, vector<1x64xf32>
    %94 = vector.extract_strided_slice %93 {offsets = [0, 0], sizes = [1, 32], strides = [1, 1]} : vector<1x64xf32> to vector<1x32xf32>
    %cst_45 = arith.constant dense<0.000000e+00> : vector<16xf32>
    %95 = vector.multi_reduction <add>, %90, %cst_45 [1] : vector<16x32xf32> to vector<16xf32>
    %96 = vector.shape_cast %95 : vector<16xf32> to vector<16x1xf32>
    %cst_46 = arith.constant 3.200000e+01 : f32
    %97 = vector.broadcast %cst_46 : f32 to vector<16x1xf32>
    %98 = arith.divf %96, %97 : vector<16x1xf32>
    %99 = vector.broadcast %98 : vector<16x1xf32> to vector<16x32xf32>
    %100 = arith.subf %90, %99 : vector<16x32xf32>
    %101 = arith.mulf %100, %100 : vector<16x32xf32>
    %cst_47 = arith.constant dense<0.000000e+00> : vector<16xf32>
    %102 = vector.multi_reduction <add>, %101, %cst_47 [1] : vector<16x32xf32> to vector<16xf32>
    %103 = vector.shape_cast %102 : vector<16xf32> to vector<16x1xf32>
    %cst_48 = arith.constant 3.200000e+01 : f32
    %104 = vector.broadcast %cst_48 : f32 to vector<16x1xf32>
    %105 = arith.divf %103, %104 : vector<16x1xf32>
    %cst_49 = arith.constant 9.99999974E-6 : f32
    %106 = vector.broadcast %cst_49 : f32 to vector<16x1xf32>
    %107 = arith.addf %105, %106 : vector<16x1xf32>
    %108 = math.rsqrt %107 : vector<16x1xf32>
    %109 = vector.broadcast %108 : vector<16x1xf32> to vector<16x32xf32>
    %110 = arith.mulf %100, %109 : vector<16x32xf32>
    %111 = vector.broadcast %92 : vector<1x32xf32> to vector<16x32xf32>
    %112 = arith.mulf %110, %111 : vector<16x32xf32>
    %113 = vector.broadcast %94 : vector<1x32xf32> to vector<16x32xf32>
    %114 = arith.addf %112, %113 : vector<16x32xf32>
    %c1_50 = arith.constant 1 : index
    %c0_51 = arith.constant 0 : index
    %c0_52 = arith.constant 0 : index
    %115 = vector.load %arg1[%c1_50, %c0_51, %c0_52] : memref<3x224x64xf32, #tpu.memory_space<vmem>>, vector<1x32x32xf32>
    %116 = vector.shape_cast %115 : vector<1x32x32xf32> to vector<32x32xf32>
    %c1_53 = arith.constant 1 : index
    %c32_54 = arith.constant 32 : index
    %c0_55 = arith.constant 0 : index
    %117 = vector.load %arg1[%c1_53, %c32_54, %c0_55] : memref<3x224x64xf32, #tpu.memory_space<vmem>>, vector<1x32x64xf32>
    %118 = vector.shape_cast %117 : vector<1x32x64xf32> to vector<32x64xf32>
    %c1_56 = arith.constant 1 : index
    %c64_57 = arith.constant 64 : index
    %c0_58 = arith.constant 0 : index
    %119 = vector.load %arg1[%c1_56, %c64_57, %c0_58] : memref<3x224x64xf32, #tpu.memory_space<vmem>>, vector<1x64x32xf32>
    %120 = vector.shape_cast %119 : vector<1x64x32xf32> to vector<64x32xf32>
    %c1_59 = arith.constant 1 : index
    %c128_60 = arith.constant 128 : index
    %c0_61 = arith.constant 0 : index
    %121 = vector.load %arg1[%c1_59, %c128_60, %c0_61] : memref<3x224x64xf32, #tpu.memory_space<vmem>>, vector<1x32x64xf32>
    %122 = vector.shape_cast %121 : vector<1x32x64xf32> to vector<32x64xf32>
    %c1_62 = arith.constant 1 : index
    %c160_63 = arith.constant 160 : index
    %c0_64 = arith.constant 0 : index
    %123 = vector.load %arg1[%c1_62, %c160_63, %c0_64] : memref<3x224x64xf32, #tpu.memory_space<vmem>>, vector<1x64x32xf32>
    %124 = vector.shape_cast %123 : vector<1x64x32xf32> to vector<64x32xf32>
    %c136_65 = arith.constant 136 : index
    %c0_66 = arith.constant 0 : index
    %125 = vector.load %arg2[%c136_65, %c0_66] : memref<352x64xf32, #tpu.memory_space<vmem>>, vector<64x64xf32>
    %c200_67 = arith.constant 200 : index
    %c0_68 = arith.constant 0 : index
    %126 = vector.load %arg2[%c200_67, %c0_68] : memref<352x64xf32, #tpu.memory_space<vmem>>, vector<64x64xf32>
    %c264_69 = arith.constant 264 : index
    %c0_70 = arith.constant 0 : index
    %127 = vector.load %arg2[%c264_69, %c0_70] : memref<352x64xf32, #tpu.memory_space<vmem>>, vector<16x64xf32>
    %c280_71 = arith.constant 280 : index
    %c0_72 = arith.constant 0 : index
    %128 = vector.load %arg2[%c280_71, %c0_72] : memref<352x64xf32, #tpu.memory_space<vmem>>, vector<64x16xf32>
    %cst_73 = arith.constant dense<0.000000e+00> : vector<16x32xf32>
    %129 = tpu.matmul %114, %116, %cst_73 {dimension_numbers = #tpu.dot_dimension_numbers<[1], [0], [0], [1], [0, 0, 1, 1], [], []>} : vector<16x32xf32>, vector<32x32xf32>, vector<16x32xf32> -> vector<16x32xf32>
    %c16 = arith.constant 16 : index
    %c0_74 = arith.constant 0 : index
    %130 = vector.load %arg2[%c16, %c0_74] : memref<352x64xf32, #tpu.memory_space<vmem>>, vector<1x64xf32>
    %131 = vector.extract_strided_slice %130 {offsets = [0, 0], sizes = [1, 32], strides = [1, 1]} : vector<1x64xf32> to vector<1x32xf32>
    %132 = vector.broadcast %131 : vector<1x32xf32> to vector<16x32xf32>
    %133 = arith.addf %129, %132 : vector<16x32xf32>
    %cst_75 = arith.constant dense<0.000000e+00> : vector<16x64xf32>
    %134 = tpu.matmul %114, %118, %cst_75 {dimension_numbers = #tpu.dot_dimension_numbers<[1], [0], [0], [1], [0, 0, 1, 1], [], []>} : vector<16x32xf32>, vector<32x64xf32>, vector<16x64xf32> -> vector<16x64xf32>
    %c17 = arith.constant 17 : index
    %c0_76 = arith.constant 0 : index
    %135 = vector.load %arg2[%c17, %c0_76] : memref<352x64xf32, #tpu.memory_space<vmem>>, vector<1x64xf32>
    %136 = vector.broadcast %135 : vector<1x64xf32> to vector<16x64xf32>
    %137 = arith.addf %134, %136 : vector<16x64xf32>
    %cst_77 = arith.constant dense<0.000000e+00> : vector<64x64xf32>
    %138 = tpu.matmul %128, %137, %cst_77 {dimension_numbers = #tpu.dot_dimension_numbers<[1], [0], [0], [1], [0, 0, 1, 1], [], []>} : vector<64x16xf32>, vector<16x64xf32>, vector<64x64xf32> -> vector<64x64xf32>
    %139 = arith.mulf %138, %125 : vector<64x64xf32>
    %140 = vector.extract_strided_slice %139 {offsets = [0, 0], sizes = [64, 32], strides = [1, 1]} : vector<64x64xf32> to vector<64x32xf32>
    %cst_78 = arith.constant dense<0.000000e+00> : vector<16x64xf32>
    %141 = tpu.matmul %133, %140, %cst_78 {dimension_numbers = #tpu.dot_dimension_numbers<[1], [1], [0], [0], [0, 0, 1, 0], [], []>} : vector<16x32xf32>, vector<64x32xf32>, vector<16x64xf32> -> vector<16x64xf32>
    %cst_79 = arith.constant 0.353553385 : f32
    %142 = vector.broadcast %cst_79 : f32 to vector<16x64xf32>
    %143 = arith.mulf %141, %142 : vector<16x64xf32>
    %144 = arith.addf %143, %127 : vector<16x64xf32>
    %cst_80 = arith.constant dense<0xFF800000> : vector<16xf32>
    %145 = vector.multi_reduction <maximumf>, %144, %cst_80 [1] : vector<16x64xf32> to vector<16xf32>
    %146 = vector.shape_cast %145 : vector<16xf32> to vector<16x1xf32>
    %147 = vector.broadcast %146 : vector<16x1xf32> to vector<16x64xf32>
    %148 = arith.subf %144, %147 : vector<16x64xf32>
    %149 = math.exp %148 : vector<16x64xf32>
    %cst_81 = arith.constant dense<0.000000e+00> : vector<16x64xf32>
    %150 = tpu.matmul %149, %126, %cst_81 {dimension_numbers = #tpu.dot_dimension_numbers<[1], [0], [0], [1], [0, 0, 1, 1], [], []>} : vector<16x64xf32>, vector<64x64xf32>, vector<16x64xf32> -> vector<16x64xf32>
    %151 = tpu.reciprocal %150 {approx = true} : vector<16x64xf32> -> vector<16x64xf32>
    %152 = arith.mulf %149, %151 : vector<16x64xf32>
    %cst_82 = arith.constant dense<0.000000e+00> : vector<16x64xf32>
    %153 = tpu.matmul %152, %139, %cst_82 {dimension_numbers = #tpu.dot_dimension_numbers<[1], [0], [0], [1], [0, 0, 1, 1], [], []>} : vector<16x64xf32>, vector<64x64xf32>, vector<16x64xf32> -> vector<16x64xf32>
    %cst_83 = arith.constant dense<0.000000e+00> : vector<16x32xf32>
    %154 = tpu.matmul %153, %120, %cst_83 {dimension_numbers = #tpu.dot_dimension_numbers<[1], [0], [0], [1], [0, 0, 1, 1], [], []>} : vector<16x64xf32>, vector<64x32xf32>, vector<16x32xf32> -> vector<16x32xf32>
    %c18 = arith.constant 18 : index
    %c0_84 = arith.constant 0 : index
    %155 = vector.load %arg2[%c18, %c0_84] : memref<352x64xf32, #tpu.memory_space<vmem>>, vector<1x64xf32>
    %156 = vector.extract_strided_slice %155 {offsets = [0, 0], sizes = [1, 32], strides = [1, 1]} : vector<1x64xf32> to vector<1x32xf32>
    %157 = vector.broadcast %156 : vector<1x32xf32> to vector<16x32xf32>
    %158 = arith.addf %154, %157 : vector<16x32xf32>
    %159 = arith.addf %114, %158 : vector<16x32xf32>
    %c21 = arith.constant 21 : index
    %c0_85 = arith.constant 0 : index
    %160 = vector.load %arg2[%c21, %c0_85] : memref<352x64xf32, #tpu.memory_space<vmem>>, vector<1x64xf32>
    %161 = vector.extract_strided_slice %160 {offsets = [0, 0], sizes = [1, 32], strides = [1, 1]} : vector<1x64xf32> to vector<1x32xf32>
    %c22 = arith.constant 22 : index
    %c0_86 = arith.constant 0 : index
    %162 = vector.load %arg2[%c22, %c0_86] : memref<352x64xf32, #tpu.memory_space<vmem>>, vector<1x64xf32>
    %163 = vector.extract_strided_slice %162 {offsets = [0, 0], sizes = [1, 32], strides = [1, 1]} : vector<1x64xf32> to vector<1x32xf32>
    %cst_87 = arith.constant dense<0.000000e+00> : vector<16xf32>
    %164 = vector.multi_reduction <add>, %159, %cst_87 [1] : vector<16x32xf32> to vector<16xf32>
    %165 = vector.shape_cast %164 : vector<16xf32> to vector<16x1xf32>
    %cst_88 = arith.constant 3.200000e+01 : f32
    %166 = vector.broadcast %cst_88 : f32 to vector<16x1xf32>
    %167 = arith.divf %165, %166 : vector<16x1xf32>
    %168 = vector.broadcast %167 : vector<16x1xf32> to vector<16x32xf32>
    %169 = arith.subf %159, %168 : vector<16x32xf32>
    %170 = arith.mulf %169, %169 : vector<16x32xf32>
    %cst_89 = arith.constant dense<0.000000e+00> : vector<16xf32>
    %171 = vector.multi_reduction <add>, %170, %cst_89 [1] : vector<16x32xf32> to vector<16xf32>
    %172 = vector.shape_cast %171 : vector<16xf32> to vector<16x1xf32>
    %cst_90 = arith.constant 3.200000e+01 : f32
    %173 = vector.broadcast %cst_90 : f32 to vector<16x1xf32>
    %174 = arith.divf %172, %173 : vector<16x1xf32>
    %cst_91 = arith.constant 9.99999974E-6 : f32
    %175 = vector.broadcast %cst_91 : f32 to vector<16x1xf32>
    %176 = arith.addf %174, %175 : vector<16x1xf32>
    %177 = math.rsqrt %176 : vector<16x1xf32>
    %178 = vector.broadcast %177 : vector<16x1xf32> to vector<16x32xf32>
    %179 = arith.mulf %169, %178 : vector<16x32xf32>
    %180 = vector.broadcast %161 : vector<1x32xf32> to vector<16x32xf32>
    %181 = arith.mulf %179, %180 : vector<16x32xf32>
    %182 = vector.broadcast %163 : vector<1x32xf32> to vector<16x32xf32>
    %183 = arith.addf %181, %182 : vector<16x32xf32>
    %cst_92 = arith.constant dense<0.000000e+00> : vector<16x64xf32>
    %184 = tpu.matmul %183, %122, %cst_92 {dimension_numbers = #tpu.dot_dimension_numbers<[1], [0], [0], [1], [0, 0, 1, 1], [], []>} : vector<16x32xf32>, vector<32x64xf32>, vector<16x64xf32> -> vector<16x64xf32>
    %c19 = arith.constant 19 : index
    %c0_93 = arith.constant 0 : index
    %185 = vector.load %arg2[%c19, %c0_93] : memref<352x64xf32, #tpu.memory_space<vmem>>, vector<1x64xf32>
    %186 = vector.broadcast %185 : vector<1x64xf32> to vector<16x64xf32>
    %187 = arith.addf %184, %186 : vector<16x64xf32>
    %cst_94 = arith.constant 0.000000e+00 : f32
    %188 = vector.broadcast %cst_94 : f32 to vector<16x64xf32>
    %189 = arith.maximumf %187, %188 : vector<16x64xf32>
    %cst_95 = arith.constant dense<0.000000e+00> : vector<16x32xf32>
    %190 = tpu.matmul %189, %124, %cst_95 {dimension_numbers = #tpu.dot_dimension_numbers<[1], [0], [0], [1], [0, 0, 1, 1], [], []>} : vector<16x64xf32>, vector<64x32xf32>, vector<16x32xf32> -> vector<16x32xf32>
    %c20 = arith.constant 20 : index
    %c0_96 = arith.constant 0 : index
    %191 = vector.load %arg2[%c20, %c0_96] : memref<352x64xf32, #tpu.memory_space<vmem>>, vector<1x64xf32>
    %192 = vector.extract_strided_slice %191 {offsets = [0, 0], sizes = [1, 32], strides = [1, 1]} : vector<1x64xf32> to vector<1x32xf32>
    %193 = vector.broadcast %192 : vector<1x32xf32> to vector<16x32xf32>
    %194 = arith.addf %190, %193 : vector<16x32xf32>
    %195 = arith.addf %183, %194 : vector<16x32xf32>
    %c23 = arith.constant 23 : index
    %c0_97 = arith.constant 0 : index
    %196 = vector.load %arg2[%c23, %c0_97] : memref<352x64xf32, #tpu.memory_space<vmem>>, vector<1x64xf32>
    %197 = vector.extract_strided_slice %196 {offsets = [0, 0], sizes = [1, 32], strides = [1, 1]} : vector<1x64xf32> to vector<1x32xf32>
    %c24 = arith.constant 24 : index
    %c0_98 = arith.constant 0 : index
    %198 = vector.load %arg2[%c24, %c0_98] : memref<352x64xf32, #tpu.memory_space<vmem>>, vector<1x64xf32>
    %199 = vector.extract_strided_slice %198 {offsets = [0, 0], sizes = [1, 32], strides = [1, 1]} : vector<1x64xf32> to vector<1x32xf32>
    %cst_99 = arith.constant dense<0.000000e+00> : vector<16xf32>
    %200 = vector.multi_reduction <add>, %195, %cst_99 [1] : vector<16x32xf32> to vector<16xf32>
    %201 = vector.shape_cast %200 : vector<16xf32> to vector<16x1xf32>
    %cst_100 = arith.constant 3.200000e+01 : f32
    %202 = vector.broadcast %cst_100 : f32 to vector<16x1xf32>
    %203 = arith.divf %201, %202 : vector<16x1xf32>
    %204 = vector.broadcast %203 : vector<16x1xf32> to vector<16x32xf32>
    %205 = arith.subf %195, %204 : vector<16x32xf32>
    %206 = arith.mulf %205, %205 : vector<16x32xf32>
    %cst_101 = arith.constant dense<0.000000e+00> : vector<16xf32>
    %207 = vector.multi_reduction <add>, %206, %cst_101 [1] : vector<16x32xf32> to vector<16xf32>
    %208 = vector.shape_cast %207 : vector<16xf32> to vector<16x1xf32>
    %cst_102 = arith.constant 3.200000e+01 : f32
    %209 = vector.broadcast %cst_102 : f32 to vector<16x1xf32>
    %210 = arith.divf %208, %209 : vector<16x1xf32>
    %cst_103 = arith.constant 9.99999974E-6 : f32
    %211 = vector.broadcast %cst_103 : f32 to vector<16x1xf32>
    %212 = arith.addf %210, %211 : vector<16x1xf32>
    %213 = math.rsqrt %212 : vector<16x1xf32>
    %214 = vector.broadcast %213 : vector<16x1xf32> to vector<16x32xf32>
    %215 = arith.mulf %205, %214 : vector<16x32xf32>
    %216 = vector.broadcast %197 : vector<1x32xf32> to vector<16x32xf32>
    %217 = arith.mulf %215, %216 : vector<16x32xf32>
    %218 = vector.broadcast %199 : vector<1x32xf32> to vector<16x32xf32>
    %219 = arith.addf %217, %218 : vector<16x32xf32>
    %c2_104 = arith.constant 2 : index
    %c0_105 = arith.constant 0 : index
    %c0_106 = arith.constant 0 : index
    %220 = vector.load %arg1[%c2_104, %c0_105, %c0_106] : memref<3x224x64xf32, #tpu.memory_space<vmem>>, vector<1x32x32xf32>
    %221 = vector.shape_cast %220 : vector<1x32x32xf32> to vector<32x32xf32>
    %c2_107 = arith.constant 2 : index
    %c32_108 = arith.constant 32 : index
    %c0_109 = arith.constant 0 : index
    %222 = vector.load %arg1[%c2_107, %c32_108, %c0_109] : memref<3x224x64xf32, #tpu.memory_space<vmem>>, vector<1x32x64xf32>
    %223 = vector.shape_cast %222 : vector<1x32x64xf32> to vector<32x64xf32>
    %c2_110 = arith.constant 2 : index
    %c64_111 = arith.constant 64 : index
    %c0_112 = arith.constant 0 : index
    %224 = vector.load %arg1[%c2_110, %c64_111, %c0_112] : memref<3x224x64xf32, #tpu.memory_space<vmem>>, vector<1x64x32xf32>
    %225 = vector.shape_cast %224 : vector<1x64x32xf32> to vector<64x32xf32>
    %c2_113 = arith.constant 2 : index
    %c128_114 = arith.constant 128 : index
    %c0_115 = arith.constant 0 : index
    %226 = vector.load %arg1[%c2_113, %c128_114, %c0_115] : memref<3x224x64xf32, #tpu.memory_space<vmem>>, vector<1x32x64xf32>
    %227 = vector.shape_cast %226 : vector<1x32x64xf32> to vector<32x64xf32>
    %c2_116 = arith.constant 2 : index
    %c160_117 = arith.constant 160 : index
    %c0_118 = arith.constant 0 : index
    %228 = vector.load %arg1[%c2_116, %c160_117, %c0_118] : memref<3x224x64xf32, #tpu.memory_space<vmem>>, vector<1x64x32xf32>
    %229 = vector.shape_cast %228 : vector<1x64x32xf32> to vector<64x32xf32>
    %c136_119 = arith.constant 136 : index
    %c0_120 = arith.constant 0 : index
    %230 = vector.load %arg2[%c136_119, %c0_120] : memref<352x64xf32, #tpu.memory_space<vmem>>, vector<64x64xf32>
    %c200_121 = arith.constant 200 : index
    %c0_122 = arith.constant 0 : index
    %231 = vector.load %arg2[%c200_121, %c0_122] : memref<352x64xf32, #tpu.memory_space<vmem>>, vector<64x64xf32>
    %c264_123 = arith.constant 264 : index
    %c0_124 = arith.constant 0 : index
    %232 = vector.load %arg2[%c264_123, %c0_124] : memref<352x64xf32, #tpu.memory_space<vmem>>, vector<16x64xf32>
    %c280_125 = arith.constant 280 : index
    %c0_126 = arith.constant 0 : index
    %233 = vector.load %arg2[%c280_125, %c0_126] : memref<352x64xf32, #tpu.memory_space<vmem>>, vector<64x16xf32>
    %cst_127 = arith.constant dense<0.000000e+00> : vector<16x32xf32>
    %234 = tpu.matmul %219, %221, %cst_127 {dimension_numbers = #tpu.dot_dimension_numbers<[1], [0], [0], [1], [0, 0, 1, 1], [], []>} : vector<16x32xf32>, vector<32x32xf32>, vector<16x32xf32> -> vector<16x32xf32>
    %c32_128 = arith.constant 32 : index
    %c0_129 = arith.constant 0 : index
    %235 = vector.load %arg2[%c32_128, %c0_129] : memref<352x64xf32, #tpu.memory_space<vmem>>, vector<1x64xf32>
    %236 = vector.extract_strided_slice %235 {offsets = [0, 0], sizes = [1, 32], strides = [1, 1]} : vector<1x64xf32> to vector<1x32xf32>
    %237 = vector.broadcast %236 : vector<1x32xf32> to vector<16x32xf32>
    %238 = arith.addf %234, %237 : vector<16x32xf32>
    %cst_130 = arith.constant dense<0.000000e+00> : vector<16x64xf32>
    %239 = tpu.matmul %219, %223, %cst_130 {dimension_numbers = #tpu.dot_dimension_numbers<[1], [0], [0], [1], [0, 0, 1, 1], [], []>} : vector<16x32xf32>, vector<32x64xf32>, vector<16x64xf32> -> vector<16x64xf32>
    %c33 = arith.constant 33 : index
    %c0_131 = arith.constant 0 : index
    %240 = vector.load %arg2[%c33, %c0_131] : memref<352x64xf32, #tpu.memory_space<vmem>>, vector<1x64xf32>
    %241 = vector.broadcast %240 : vector<1x64xf32> to vector<16x64xf32>
    %242 = arith.addf %239, %241 : vector<16x64xf32>
    %cst_132 = arith.constant dense<0.000000e+00> : vector<64x64xf32>
    %243 = tpu.matmul %233, %242, %cst_132 {dimension_numbers = #tpu.dot_dimension_numbers<[1], [0], [0], [1], [0, 0, 1, 1], [], []>} : vector<64x16xf32>, vector<16x64xf32>, vector<64x64xf32> -> vector<64x64xf32>
    %244 = arith.mulf %243, %230 : vector<64x64xf32>
    %245 = vector.extract_strided_slice %244 {offsets = [0, 0], sizes = [64, 32], strides = [1, 1]} : vector<64x64xf32> to vector<64x32xf32>
    %cst_133 = arith.constant dense<0.000000e+00> : vector<16x64xf32>
    %246 = tpu.matmul %238, %245, %cst_133 {dimension_numbers = #tpu.dot_dimension_numbers<[1], [1], [0], [0], [0, 0, 1, 0], [], []>} : vector<16x32xf32>, vector<64x32xf32>, vector<16x64xf32> -> vector<16x64xf32>
    %cst_134 = arith.constant 0.353553385 : f32
    %247 = vector.broadcast %cst_134 : f32 to vector<16x64xf32>
    %248 = arith.mulf %246, %247 : vector<16x64xf32>
    %249 = arith.addf %248, %232 : vector<16x64xf32>
    %cst_135 = arith.constant dense<0xFF800000> : vector<16xf32>
    %250 = vector.multi_reduction <maximumf>, %249, %cst_135 [1] : vector<16x64xf32> to vector<16xf32>
    %251 = vector.shape_cast %250 : vector<16xf32> to vector<16x1xf32>
    %252 = vector.broadcast %251 : vector<16x1xf32> to vector<16x64xf32>
    %253 = arith.subf %249, %252 : vector<16x64xf32>
    %254 = math.exp %253 : vector<16x64xf32>
    %cst_136 = arith.constant dense<0.000000e+00> : vector<16x64xf32>
    %255 = tpu.matmul %254, %231, %cst_136 {dimension_numbers = #tpu.dot_dimension_numbers<[1], [0], [0], [1], [0, 0, 1, 1], [], []>} : vector<16x64xf32>, vector<64x64xf32>, vector<16x64xf32> -> vector<16x64xf32>
    %256 = tpu.reciprocal %255 {approx = true} : vector<16x64xf32> -> vector<16x64xf32>
    %257 = arith.mulf %254, %256 : vector<16x64xf32>
    %cst_137 = arith.constant dense<0.000000e+00> : vector<16x64xf32>
    %258 = tpu.matmul %257, %244, %cst_137 {dimension_numbers = #tpu.dot_dimension_numbers<[1], [0], [0], [1], [0, 0, 1, 1], [], []>} : vector<16x64xf32>, vector<64x64xf32>, vector<16x64xf32> -> vector<16x64xf32>
    %cst_138 = arith.constant dense<0.000000e+00> : vector<16x32xf32>
    %259 = tpu.matmul %258, %225, %cst_138 {dimension_numbers = #tpu.dot_dimension_numbers<[1], [0], [0], [1], [0, 0, 1, 1], [], []>} : vector<16x64xf32>, vector<64x32xf32>, vector<16x32xf32> -> vector<16x32xf32>
    %c34 = arith.constant 34 : index
    %c0_139 = arith.constant 0 : index
    %260 = vector.load %arg2[%c34, %c0_139] : memref<352x64xf32, #tpu.memory_space<vmem>>, vector<1x64xf32>
    %261 = vector.extract_strided_slice %260 {offsets = [0, 0], sizes = [1, 32], strides = [1, 1]} : vector<1x64xf32> to vector<1x32xf32>
    %262 = vector.broadcast %261 : vector<1x32xf32> to vector<16x32xf32>
    %263 = arith.addf %259, %262 : vector<16x32xf32>
    %264 = arith.addf %219, %263 : vector<16x32xf32>
    %c37 = arith.constant 37 : index
    %c0_140 = arith.constant 0 : index
    %265 = vector.load %arg2[%c37, %c0_140] : memref<352x64xf32, #tpu.memory_space<vmem>>, vector<1x64xf32>
    %266 = vector.extract_strided_slice %265 {offsets = [0, 0], sizes = [1, 32], strides = [1, 1]} : vector<1x64xf32> to vector<1x32xf32>
    %c38 = arith.constant 38 : index
    %c0_141 = arith.constant 0 : index
    %267 = vector.load %arg2[%c38, %c0_141] : memref<352x64xf32, #tpu.memory_space<vmem>>, vector<1x64xf32>
    %268 = vector.extract_strided_slice %267 {offsets = [0, 0], sizes = [1, 32], strides = [1, 1]} : vector<1x64xf32> to vector<1x32xf32>
    %cst_142 = arith.constant dense<0.000000e+00> : vector<16xf32>
    %269 = vector.multi_reduction <add>, %264, %cst_142 [1] : vector<16x32xf32> to vector<16xf32>
    %270 = vector.shape_cast %269 : vector<16xf32> to vector<16x1xf32>
    %cst_143 = arith.constant 3.200000e+01 : f32
    %271 = vector.broadcast %cst_143 : f32 to vector<16x1xf32>
    %272 = arith.divf %270, %271 : vector<16x1xf32>
    %273 = vector.broadcast %272 : vector<16x1xf32> to vector<16x32xf32>
    %274 = arith.subf %264, %273 : vector<16x32xf32>
    %275 = arith.mulf %274, %274 : vector<16x32xf32>
    %cst_144 = arith.constant dense<0.000000e+00> : vector<16xf32>
    %276 = vector.multi_reduction <add>, %275, %cst_144 [1] : vector<16x32xf32> to vector<16xf32>
    %277 = vector.shape_cast %276 : vector<16xf32> to vector<16x1xf32>
    %cst_145 = arith.constant 3.200000e+01 : f32
    %278 = vector.broadcast %cst_145 : f32 to vector<16x1xf32>
    %279 = arith.divf %277, %278 : vector<16x1xf32>
    %cst_146 = arith.constant 9.99999974E-6 : f32
    %280 = vector.broadcast %cst_146 : f32 to vector<16x1xf32>
    %281 = arith.addf %279, %280 : vector<16x1xf32>
    %282 = math.rsqrt %281 : vector<16x1xf32>
    %283 = vector.broadcast %282 : vector<16x1xf32> to vector<16x32xf32>
    %284 = arith.mulf %274, %283 : vector<16x32xf32>
    %285 = vector.broadcast %266 : vector<1x32xf32> to vector<16x32xf32>
    %286 = arith.mulf %284, %285 : vector<16x32xf32>
    %287 = vector.broadcast %268 : vector<1x32xf32> to vector<16x32xf32>
    %288 = arith.addf %286, %287 : vector<16x32xf32>
    %cst_147 = arith.constant dense<0.000000e+00> : vector<16x64xf32>
    %289 = tpu.matmul %288, %227, %cst_147 {dimension_numbers = #tpu.dot_dimension_numbers<[1], [0], [0], [1], [0, 0, 1, 1], [], []>} : vector<16x32xf32>, vector<32x64xf32>, vector<16x64xf32> -> vector<16x64xf32>
    %c35 = arith.constant 35 : index
    %c0_148 = arith.constant 0 : index
    %290 = vector.load %arg2[%c35, %c0_148] : memref<352x64xf32, #tpu.memory_space<vmem>>, vector<1x64xf32>
    %291 = vector.broadcast %290 : vector<1x64xf32> to vector<16x64xf32>
    %292 = arith.addf %289, %291 : vector<16x64xf32>
    %cst_149 = arith.constant 0.000000e+00 : f32
    %293 = vector.broadcast %cst_149 : f32 to vector<16x64xf32>
    %294 = arith.maximumf %292, %293 : vector<16x64xf32>
    %cst_150 = arith.constant dense<0.000000e+00> : vector<16x32xf32>
    %295 = tpu.matmul %294, %229, %cst_150 {dimension_numbers = #tpu.dot_dimension_numbers<[1], [0], [0], [1], [0, 0, 1, 1], [], []>} : vector<16x64xf32>, vector<64x32xf32>, vector<16x32xf32> -> vector<16x32xf32>
    %c36 = arith.constant 36 : index
    %c0_151 = arith.constant 0 : index
    %296 = vector.load %arg2[%c36, %c0_151] : memref<352x64xf32, #tpu.memory_space<vmem>>, vector<1x64xf32>
    %297 = vector.extract_strided_slice %296 {offsets = [0, 0], sizes = [1, 32], strides = [1, 1]} : vector<1x64xf32> to vector<1x32xf32>
    %298 = vector.broadcast %297 : vector<1x32xf32> to vector<16x32xf32>
    %299 = arith.addf %295, %298 : vector<16x32xf32>
    %300 = arith.addf %288, %299 : vector<16x32xf32>
    %c39 = arith.constant 39 : index
    %c0_152 = arith.constant 0 : index
    %301 = vector.load %arg2[%c39, %c0_152] : memref<352x64xf32, #tpu.memory_space<vmem>>, vector<1x64xf32>
    %302 = vector.extract_strided_slice %301 {offsets = [0, 0], sizes = [1, 32], strides = [1, 1]} : vector<1x64xf32> to vector<1x32xf32>
    %c40 = arith.constant 40 : index
    %c0_153 = arith.constant 0 : index
    %303 = vector.load %arg2[%c40, %c0_153] : memref<352x64xf32, #tpu.memory_space<vmem>>, vector<1x64xf32>
    %304 = vector.extract_strided_slice %303 {offsets = [0, 0], sizes = [1, 32], strides = [1, 1]} : vector<1x64xf32> to vector<1x32xf32>
    %cst_154 = arith.constant dense<0.000000e+00> : vector<16xf32>
    %305 = vector.multi_reduction <add>, %300, %cst_154 [1] : vector<16x32xf32> to vector<16xf32>
    %306 = vector.shape_cast %305 : vector<16xf32> to vector<16x1xf32>
    %cst_155 = arith.constant 3.200000e+01 : f32
    %307 = vector.broadcast %cst_155 : f32 to vector<16x1xf32>
    %308 = arith.divf %306, %307 : vector<16x1xf32>
    %309 = vector.broadcast %308 : vector<16x1xf32> to vector<16x32xf32>
    %310 = arith.subf %300, %309 : vector<16x32xf32>
    %311 = arith.mulf %310, %310 : vector<16x32xf32>
    %cst_156 = arith.constant dense<0.000000e+00> : vector<16xf32>
    %312 = vector.multi_reduction <add>, %311, %cst_156 [1] : vector<16x32xf32> to vector<16xf32>
    %313 = vector.shape_cast %312 : vector<16xf32> to vector<16x1xf32>
    %cst_157 = arith.constant 3.200000e+01 : f32
    %314 = vector.broadcast %cst_157 : f32 to vector<16x1xf32>
    %315 = arith.divf %313, %314 : vector<16x1xf32>
    %cst_158 = arith.constant 9.99999974E-6 : f32
    %316 = vector.broadcast %cst_158 : f32 to vector<16x1xf32>
    %317 = arith.addf %315, %316 : vector<16x1xf32>
    %318 = math.rsqrt %317 : vector<16x1xf32>
    %319 = vector.broadcast %318 : vector<16x1xf32> to vector<16x32xf32>
    %320 = arith.mulf %310, %319 : vector<16x32xf32>
    %321 = vector.broadcast %302 : vector<1x32xf32> to vector<16x32xf32>
    %322 = arith.mulf %320, %321 : vector<16x32xf32>
    %323 = vector.broadcast %304 : vector<1x32xf32> to vector<16x32xf32>
    %324 = arith.addf %322, %323 : vector<16x32xf32>
    %c344 = arith.constant 344 : index
    %c0_159 = arith.constant 0 : index
    %325 = vector.load %arg2[%c344, %c0_159] : memref<352x64xf32, #tpu.memory_space<vmem>>, vector<2x16xf32>
    %cst_160 = arith.constant dense<0.000000e+00> : vector<2x32xf32>
    %326 = tpu.matmul %325, %324, %cst_160 {dimension_numbers = #tpu.dot_dimension_numbers<[1], [0], [0], [1], [0, 0, 1, 1], [], []>} : vector<2x16xf32>, vector<16x32xf32>, vector<2x32xf32> -> vector<2x32xf32>
    %c48 = arith.constant 48 : index
    %c0_161 = arith.constant 0 : index
    %327 = vector.load %arg2[%c48, %c0_161] : memref<352x64xf32, #tpu.memory_space<vmem>>, vector<1x64xf32>
    %328 = vector.extract_strided_slice %327 {offsets = [0, 0], sizes = [1, 32], strides = [1, 1]} : vector<1x64xf32> to vector<1x32xf32>
    %c49 = arith.constant 49 : index
    %c0_162 = arith.constant 0 : index
    %329 = vector.load %arg2[%c49, %c0_162] : memref<352x64xf32, #tpu.memory_space<vmem>>, vector<1x64xf32>
    %330 = vector.extract_strided_slice %329 {offsets = [0, 0], sizes = [1, 32], strides = [1, 1]} : vector<1x64xf32> to vector<1x32xf32>
    %cst_163 = arith.constant dense<0.000000e+00> : vector<2xf32>
    %331 = vector.multi_reduction <add>, %326, %cst_163 [1] : vector<2x32xf32> to vector<2xf32>
    %332 = vector.shape_cast %331 : vector<2xf32> to vector<2x1xf32>
    %cst_164 = arith.constant 3.200000e+01 : f32
    %333 = vector.broadcast %cst_164 : f32 to vector<2x1xf32>
    %334 = arith.divf %332, %333 : vector<2x1xf32>
    %335 = vector.broadcast %334 : vector<2x1xf32> to vector<2x32xf32>
    %336 = arith.subf %326, %335 : vector<2x32xf32>
    %337 = arith.mulf %336, %336 : vector<2x32xf32>
    %cst_165 = arith.constant dense<0.000000e+00> : vector<2xf32>
    %338 = vector.multi_reduction <add>, %337, %cst_165 [1] : vector<2x32xf32> to vector<2xf32>
    %339 = vector.shape_cast %338 : vector<2xf32> to vector<2x1xf32>
    %cst_166 = arith.constant 3.200000e+01 : f32
    %340 = vector.broadcast %cst_166 : f32 to vector<2x1xf32>
    %341 = arith.divf %339, %340 : vector<2x1xf32>
    %cst_167 = arith.constant 9.99999974E-6 : f32
    %342 = vector.broadcast %cst_167 : f32 to vector<2x1xf32>
    %343 = arith.addf %341, %342 : vector<2x1xf32>
    %344 = math.rsqrt %343 : vector<2x1xf32>
    %345 = vector.broadcast %344 : vector<2x1xf32> to vector<2x32xf32>
    %346 = arith.mulf %336, %345 : vector<2x32xf32>
    %347 = vector.broadcast %328 : vector<1x32xf32> to vector<2x32xf32>
    %348 = arith.mulf %346, %347 : vector<2x32xf32>
    %349 = vector.broadcast %330 : vector<1x32xf32> to vector<2x32xf32>
    %350 = arith.addf %348, %349 : vector<2x32xf32>
    %c50 = arith.constant 50 : index
    %c0_168 = arith.constant 0 : index
    %351 = vector.load %arg2[%c50, %c0_168] : memref<352x64xf32, #tpu.memory_space<vmem>>, vector<1x64xf32>
    %352 = vector.extract_strided_slice %351 {offsets = [0, 0], sizes = [1, 32], strides = [1, 1]} : vector<1x64xf32> to vector<1x32xf32>
    %353 = vector.broadcast %352 : vector<1x32xf32> to vector<2x32xf32>
    %354 = arith.mulf %350, %353 : vector<2x32xf32>
    %cst_169 = arith.constant dense<0.000000e+00> : vector<2xf32>
    %355 = vector.multi_reduction <add>, %354, %cst_169 [1] : vector<2x32xf32> to vector<2xf32>
    %356 = vector.shape_cast %355 : vector<2xf32> to vector<2x1xf32>
    %c51 = arith.constant 51 : index
    %c0_170 = arith.constant 0 : index
    %357 = vector.load %arg2[%c51, %c0_170] : memref<352x64xf32, #tpu.memory_space<vmem>>, vector<1x64xf32>
    %358 = vector.extract_strided_slice %357 {offsets = [0, 0], sizes = [1, 1], strides = [1, 1]} : vector<1x64xf32> to vector<1x1xf32>
    %359 = vector.broadcast %358 : vector<1x1xf32> to vector<2x1xf32>
    %360 = arith.addf %356, %359 : vector<2x1xf32>
    %cst_171 = arith.constant 0.000000e+00 : f32
    %361 = vector.broadcast %cst_171 : f32 to vector<2x1xf32>
    %362 = arith.subf %361, %360 : vector<2x1xf32>
    %363 = math.exp %362 : vector<2x1xf32>
    %cst_172 = arith.constant 1.000000e+00 : f32
    %364 = vector.broadcast %cst_172 : f32 to vector<2x1xf32>
    %365 = arith.addf %364, %363 : vector<2x1xf32>
    %cst_173 = arith.constant 1.000000e+00 : f32
    %366 = vector.broadcast %cst_173 : f32 to vector<2x1xf32>
    %367 = arith.divf %366, %365 : vector<2x1xf32>
    %c0_174 = arith.constant 0 : index
    %c0_175 = arith.constant 0 : index
    %368 = vector.load %arg3[%c0_174, %c0_175] : memref<2x1xf32, #tpu.memory_space<vmem>>, vector<2x1xf32>
    tpu.vector_store %arg3[%c0_174, %c0_175], %367 {strides = array<i32>} : memref<2x1xf32, #tpu.memory_space<vmem>>, vector<2x1xf32>,
    return
  }
}

</mosaic_0001>

<llo_original>
// kernel: tpu_custom_call.1
$region0: #{tpu_custom_call.1}
  #allocation0 [shape = 'u32[]', space=smem, size = 0x4, offset = 0x4, fixed_abs, tag = 'smem constant byte address 0x4 - core index']
  #allocation1 [shape = 'u32[144,128]{1,0:T(1,128)}', space=vmem, size = 0x12000, scoped, tag = 'internal scratch']
  %s0 = inlined_call_operand.hbm [shape: f32[8,128], index: 0, kind: input, shape index: {}]
  %s1 = inlined_call_operand.hbm [shape: f32[8,128], index: 1, kind: output, shape index: {}]
  %s2 = sld [smem:[#allocation0]]
  $region18: #{tpu_custom_call.1} parent=0
    _
  %s4 = ssub.s32 1, %s2
  %s5 = scalar_select 0, %s4, %s2
  $region1: #{tpu_custom_call.1} parent=0
    #allocation2 [shape = 'u8[4096]{0}', space=vmem, size = 0x1000, scoped, tag = 'input window, operand 0, single buffered']
    #allocation3 [shape = 's32[1]{0}', space=sflag, size = 0x4, scoped, tag = 'scoped memory for tpu_custom_call.1']
    #allocation4 [shape = 's32[1]{0}', space=sflag, size = 0x4, scoped, tag = 'scoped memory for tpu_custom_call.1']
    #allocation5 [shape = 'u8[4096]{0}', space=vmem, size = 0x1000, scoped, tag = 'output window, operand 0, single buffered']
    %6 = vsyncpa [#allocation3], 0
    %7 = vsyncpa [#allocation4], 0
    // Predicated region
    $region2: #{tpu_custom_call.1} parent=1 // pred_check
      _
    $region3: #{tpu_custom_call.1} parent=1 // pred_check_branch
      %9 = sbr.rel (0) target = $region5
    $region4: #{tpu_custom_call.1} parent=1 // pred_region
      %s11 = ssub.s32 128, 128
      %12 = vsyncadd [#allocation3], %s11
      %s14 = sshll.u32 [#allocation2], 4
      %s15 = int_to_ptr.vmem [resolvable:$true] %s14
      %17 = dma.hbm_to_vmem [thread:$0]  %s0, 128, %s15, [#allocation3]
    $region5: #{tpu_custom_call.1} parent=1 // pred_fallthru
      _
    // Predicated region
    $region6: #{tpu_custom_call.1} parent=1 // pred_check
      _
    $region7: #{tpu_custom_call.1} parent=1 // pred_check_branch
      %19 = sbr.rel (0) target = $region9
    $region8: #{tpu_custom_call.1} parent=1 // pred_region
      %20 = dma.done [#allocation3], 128
    $region9: #{tpu_custom_call.1} parent=1 // pred_fallthru
      _
    %v21 = vld [vmem:[#allocation2] ss:$0 sm:$0xff]
    %22 = vst [vmem:[#allocation5] sm:$0xff] %v21
    // Predicated region
    $region10: #{tpu_custom_call.1} parent=1 // pred_check
      _
    $region11: #{tpu_custom_call.1} parent=1 // pred_check_branch
      %24 = sbr.rel (0) target = $region13
    $region12: #{tpu_custom_call.1} parent=1 // pred_region
      %s26 = ssub.s32 128, 128
      %27 = vsyncadd [#allocation4], %s26
      %s29 = sshll.u32 [#allocation5], 4
      %s30 = int_to_ptr.vmem [resolvable:$true] %s29
      %32 = dma.vmem_to_hbm [thread:$0]  %s30, 128, %s1, [#allocation4]
    $region13: #{tpu_custom_call.1} parent=1 // pred_fallthru
      _
    // Predicated region
    $region14: #{tpu_custom_call.1} parent=1 // pred_check
      _
    $region15: #{tpu_custom_call.1} parent=1 // pred_check_branch
      %34 = sbr.rel (0) target = $region17
    $region16: #{tpu_custom_call.1} parent=1 // pred_region
      %35 = dma.done [#allocation4], 128
    $region17: #{tpu_custom_call.1} parent=1 // pred_fallthru
      _
    %36 = vsyncpa [#allocation3], 1
    %37 = vsyncpa [#allocation4], 1

// kernel: tpu_custom_call.1
$region0: #{tpu_custom_call.1}
  #allocation0 [shape = 'u32[]', space=smem, size = 0x4, offset = 0x4, fixed_abs, tag = 'smem constant byte address 0x4 - core index']
  #allocation1 [shape = 'u32[144,128]{1,0:T(1,128)}', space=vmem, size = 0x12000, scoped, tag = 'internal scratch']
  %s0 = inlined_call_operand.vmem [shape: s32[16,1], index: 0, kind: input, shape index: {}]
  %s1 = inlined_call_operand.vmem [shape: f32[3,224,64], index: 1, kind: input, shape index: {}]
  %s2 = inlined_call_operand.vmem [shape: f32[352,64], index: 2, kind: input, shape index: {}]
  %s3 = inlined_call_operand.vmem [shape: f32[2,1], index: 3, kind: output, shape index: {}]
  %s4 = sld [smem:[#allocation0]]
  $region22: #{tpu_custom_call.1} parent=0
    _
  %s6 = ssub.s32 1, %s4
  %s7 = scalar_select 0, %s6, %s4
  // Predicated region
  $region2: #{tpu_custom_call.1} parent=0 // pred_check
    _
  $region3: #{tpu_custom_call.1} parent=0 // pred_check_branch
    %9 = sbr.rel (0) target = $region5
  $region4: #{tpu_custom_call.1} parent=0 // pred_region
    _
  $region5: #{tpu_custom_call.1} parent=0 // pred_fallthru
    _
  // Predicated region
  $region6: #{tpu_custom_call.1} parent=0 // pred_check
    _
  $region7: #{tpu_custom_call.1} parent=0 // pred_check_branch
    %11 = sbr.rel (0) target = $region9
  $region8: #{tpu_custom_call.1} parent=0 // pred_region
    _
  $region9: #{tpu_custom_call.1} parent=0 // pred_fallthru
    _
  // Predicated region
  $region10: #{tpu_custom_call.1} parent=0 // pred_check
    _
  $region11: #{tpu_custom_call.1} parent=0 // pred_check_branch
    %13 = sbr.rel (0) target = $region13
  $region12: #{tpu_custom_call.1} parent=0 // pred_region
    _
  $region13: #{tpu_custom_call.1} parent=0 // pred_fallthru
    _
  %v14 = vld [vmem:[%s0] sm:$0xff]
  %v15 = vld [vmem:[%s0 + $0x8] sm:$0xff]
  %v16 = vlaneseq
  %v17 = vand.u32 %v16, 127
  %18 = vset.pattern.permute.xlu0 0
  %19 = vperm.xlu0 %18, %v14
  %v20 = vpop.permute.xlu0 %19
  %21 = vset.pattern.permute.xlu0 0
  %22 = vperm.xlu0 %21, %v15
  %v23 = vpop.permute.xlu0 %22
  %vm24 = vcmp.eq.s32.totalorder %v17, %v20
  %vm25 = vcmp.eq.s32.totalorder %v17, %v23
  %v26 = vsel %vm24, 1, 0
  %v27 = vsel %vm25, 1, 0
  %v28 = vcvt.s32.f32 %v26
  %v29 = vcvt.s32.f32 %v27
  %v30 = vld [vmem:[%s2 + $0x48] sm:$0xff]
  %v31 = vld [vmem:[%s2 + $0x50] sm:$0xff]
  %v32 = vld [vmem:[%s2 + $0x58] sm:$0xff]
  %v33 = vld [vmem:[%s2 + $0x60] sm:$0xff]
  %v34 = vld [vmem:[%s2 + $0x68] sm:$0xff]
  %v35 = vld [vmem:[%s2 + $0x70] sm:$0xff]
  %v36 = vld [vmem:[%s2 + $0x78] sm:$0xff]
  %v37 = vld [vmem:[%s2 + $0x80] sm:$0xff]
  %v38 = vld [vmem:[%s2 + $0x38] sm:$0xff]
  %v39 = vld [vmem:[%s2 + $0x40] sm:$0xff]
  %vm40 = vcmask 523264
  %v42 = vsel %vm40, %v28, 0
  %v45 = vsel %vm40, %v29, 0
  %47 = vmatprep.subr.mxu0 0.0
  %48 = vmatpush1.msra.mxu0 %v30
  %49 = vmatprep.subr.mxu0 0.0
  %50 = vmatpush1.msra.mxu0 %v31
  %51 = vmatprep.subr.mxu0 0.0
  %52 = vmatpush1.msra.mxu0 %v32
  %53 = vmatprep.subr.mxu0 0.0
  %54 = vmatpush1.msra.mxu0 %v33
  %55 = vmatprep.subr.mxu0 0.0
  %56 = vmatpush1.msra.mxu0 %v34
  %57 = vmatprep.subr.mxu0 0.0
  %58 = vmatpush1.msra.mxu0 %v35
  %59 = vmatprep.subr.mxu0 0.0
  %60 = vmatpush1.msra.mxu0 %v36
  %61 = vmatprep.subr.mxu0 0.0
  %62 = vmatpush1.msra.mxu0 %v37
  %63 = vmatprep.subr.mxu0 0.0
  %64 = vmatpush1.msra.mxu0 0.0
  %65 = vmatprep.subr.mxu0 0.0
  %66 = vmatpush1.msra.mxu0 0.0
  %67 = vmatprep.subr.mxu0 0.0
  %68 = vmatpush1.msra.mxu0 0.0
  %69 = vmatprep.subr.mxu0 0.0
  %70 = vmatpush1.msra.mxu0 0.0
  %71 = vmatprep.subr.mxu0 0.0
  %72 = vmatpush1.msra.mxu0 0.0
  %73 = vmatprep.subr.mxu0 0.0
  %74 = vmatpush1.msra.mxu0 0.0
  %75 = vmatprep.subr.mxu0 0.0
  %76 = vmatpush1.msra.mxu0 0.0
  %77 = vmatprep.subr.mxu0 0.0
  %78 = vmatpush1.msra.mxu0 0.0
  %79 = vmatprep.subr.mxu0 0.0
  %80 = vmatpush1.msra.mxu0 0.0
  %81 = vmatprep.subr.mxu0 0.0
  %82 = vmatpush1.msra.mxu0 0.0
  %83 = vmatprep.subr.mxu0 0.0
  %84 = vmatpush1.msra.mxu0 0.0
  %85 = vmatprep.subr.mxu0 0.0
  %86 = vmatpush1.msra.mxu0 0.0
  %87 = vmatprep.subr.mxu0 0.0
  %88 = vmatpush1.msra.mxu0 0.0
  %89 = vmatprep.subr.mxu0 0.0
  %90 = vmatpush1.msra.mxu0 0.0
  %91 = vmatprep.subr.mxu0 0.0
  %92 = vmatpush1.msra.mxu0 0.0
  %93 = vmatprep.subr.mxu0 0.0
  %94 = vmatpush1.msra.mxu0 0.0
  %95 = vmatprep.subr.mxu0 0.0
  %96 = vmatpush1.msra.mxu0 0.0
  %97 = vmatprep.subr.mxu0 0.0
  %98 = vmatpush1.msra.mxu0 0.0
  %99 = vmatprep.subr.mxu0 0.0
  %100 = vmatpush1.msra.mxu0 0.0
  %101 = vmatprep.subr.mxu0 0.0
  %102 = vmatpush1.msra.mxu0 0.0
  %103 = vmatprep.subr.mxu0 0.0
  %104 = vmatpush1.msra.mxu0 0.0
  %105 = vmatprep.subr.mxu0 0.0
  %106 = vmatpush1.msra.mxu0 0.0
  %107 = vmatprep.subr.mxu0 0.0
  %108 = vmatpush1.msra.mxu0 0.0
  %109 = vmatprep.subr.mxu0 0.0
  %110 = vmatpush1.msra.mxu0 0.0
  %111 = vmatprep.mubr.f32.mxu0 0.0
  %112 = vmatmul.mubr.f32.gmra.mrb[0].mxu0 %v42
  %v113 = vpop.f32.mrb[0].mxu0
  %v114 = vadd.f32 %v38, %v113
  %v115 = vpop.f32.mrb[0].mxu0
  %116 = vmatprep.mubr.f32.mxu0 0.0
  %117 = vmatmul.mubr.f32.gmra.mrb[0].mxu0 %v45
  %v118 = vpop.f32.mrb[0].mxu0
  %v119 = vadd.f32 %v39, %v118
  %v120 = vpop.f32.mrb[0].mxu0
  %121 = vdwg.mxu0
  %v122 = vld [vmem:[%s1] sm:$0xff]
  %v123 = vld [vmem:[%s1 + $0x8] sm:$0xff]
  %v124 = vld [vmem:[%s1 + $0x10] sm:$0xff]
  %v125 = vld [vmem:[%s1 + $0x18] sm:$0xff]
  %v126 = vld [vmem:[%s1 + $0x20] sm:$0xff]
  %v127 = vld [vmem:[%s1 + $0x28] sm:$0xff]
  %v128 = vld [vmem:[%s1 + $0x30] sm:$0xff]
  %v129 = vld [vmem:[%s1 + $0x38] sm:$0xff]
  %v130 = vld [vmem:[%s1 + $0x40] sm:$0xff]
  %v131 = vld [vmem:[%s1 + $0x48] sm:$0xff]
  %v132 = vld [vmem:[%s1 + $0x50] sm:$0xff]
  %v133 = vld [vmem:[%s1 + $0x58] sm:$0xff]
  %v134 = vld [vmem:[%s1 + $0x60] sm:$0xff]
  %v135 = vld [vmem:[%s1 + $0x68] sm:$0xff]
  %v136 = vld [vmem:[%s1 + $0x70] sm:$0xff]
  %v137 = vld [vmem:[%s1 + $0x78] sm:$0xff]
  %v138 = vld [vmem:[%s1 + $0x80] sm:$0xff]
  %v139 = vld [vmem:[%s1 + $0x88] sm:$0xff]
  %v140 = vld [vmem:[%s1 + $0x90] sm:$0xff]
  %v141 = vld [vmem:[%s1 + $0x98] sm:$0xff]
  %v142 = vld [vmem:[%s1 + $0xa0] sm:$0xff]
  %v143 = vld [vmem:[%s1 + $0xa8] sm:$0xff]
  %v144 = vld [vmem:[%s1 + $0xb0] sm:$0xff]
  %v145 = vld [vmem:[%s1 + $0xb8] sm:$0xff]
  %v146 = vld [vmem:[%s1 + $0xc0] sm:$0xff]
  %v147 = vld [vmem:[%s1 + $0xc8] sm:$0xff]
  %v148 = vld [vmem:[%s1 + $0xd0] sm:$0xff]
  %v149 = vld [vmem:[%s1 + $0xd8] sm:$0xff]
  %v150 = vld [vmem:[%s2 + $0x88] sm:$0xff]
  %v151 = vld [vmem:[%s2 + $0x90] sm:$0xff]
  %v152 = vld [vmem:[%s2 + $0x98] sm:$0xff]
  %v153 = vld [vmem:[%s2 + $0xa0] sm:$0xff]
  %v154 = vld [vmem:[%s2 + $0xa8] sm:$0xff]
  %v155 = vld [vmem:[%s2 + $0xb0] sm:$0xff]
  %v156 = vld [vmem:[%s2 + $0xb8] sm:$0xff]
  %v157 = vld [vmem:[%s2 + $0xc0] sm:$0xff]
  %v158 = vld [vmem:[%s2 + $0xc8] sm:$0xff]
  %v159 = vld [vmem:[%s2 + $0xd0] sm:$0xff]
  %v160 = vld [vmem:[%s2 + $0xd8] sm:$0xff]
  %v161 = vld [vmem:[%s2 + $0xe0] sm:$0xff]
  %v162 = vld [vmem:[%s2 + $0xe8] sm:$0xff]
  %v163 = vld [vmem:[%s2 + $0xf0] sm:$0xff]
  %v164 = vld [vmem:[%s2 + $0xf8] sm:$0xff]
  %v165 = vld [vmem:[%s2 + $0x100] sm:$0xff]
  %v166 = vld [vmem:[%s2 + $0x108] sm:$0xff]
  %v167 = vld [vmem:[%s2 + $0x110] sm:$0xff]
  %v168 = vld [vmem:[%s2 + $0x118] sm:$0xff]
  %v169 = vld [vmem:[%s2 + $0x120] sm:$0xff]
  %v170 = vld [vmem:[%s2 + $0x128] sm:$0xff]
  %v171 = vld [vmem:[%s2 + $0x130] sm:$0xff]
  %v172 = vld [vmem:[%s2 + $0x138] sm:$0xff]
  %v173 = vld [vmem:[%s2 + $0x140] sm:$0xff]
  %v174 = vld [vmem:[%s2 + $0x148] sm:$0xff]
  %v175 = vld [vmem:[%s2 + $0x150] sm:$0xff]
  %v176 = vld [vmem:[%s2] sm:$0x1]
  %v177 = vlaneseq
  %v178 = vshrl.u32 %v177, 7
  %v179 = vsub.s32 0, %v178
  %v180 = vrot.slane %v176, %v179
  %vm181 = vcmask 261120
  %v183 = vsel %vm181, %v114, 0
  %v186 = vsel %vm181, %v119, 0
  %188 = vmatprep.subr.mxu0 0.0
  %189 = vmatpush1.msra.mxu0 %v122
  %190 = vmatprep.subr.mxu0 0.0
  %191 = vmatpush1.msra.mxu0 %v123
  %192 = vmatprep.subr.mxu0 0.0
  %193 = vmatpush1.msra.mxu0 %v124
  %194 = vmatprep.subr.mxu0 0.0
  %195 = vmatpush1.msra.mxu0 %v125
  %196 = vmatprep.subr.mxu0 0.0
  %197 = vmatpush1.msra.mxu0 0.0
  %198 = vmatprep.subr.mxu0 0.0
  %199 = vmatpush1.msra.mxu0 0.0
  %200 = vmatprep.subr.mxu0 0.0
  %201 = vmatpush1.msra.mxu0 0.0
  %202 = vmatprep.subr.mxu0 0.0
  %203 = vmatpush1.msra.mxu0 0.0
  %204 = vmatprep.subr.mxu0 0.0
  %205 = vmatpush1.msra.mxu0 0.0
  %206 = vmatprep.subr.mxu0 0.0
  %207 = vmatpush1.msra.mxu0 0.0
  %208 = vmatprep.subr.mxu0 0.0
  %209 = vmatpush1.msra.mxu0 0.0
  %210 = vmatprep.subr.mxu0 0.0
  %211 = vmatpush1.msra.mxu0 0.0
  %212 = vmatprep.subr.mxu0 0.0
  %213 = vmatpush1.msra.mxu0 0.0
  %214 = vmatprep.subr.mxu0 0.0
  %215 = vmatpush1.msra.mxu0 0.0
  %216 = vmatprep.subr.mxu0 0.0
  %217 = vmatpush1.msra.mxu0 0.0
  %218 = vmatprep.subr.mxu0 0.0
  %219 = vmatpush1.msra.mxu0 0.0
  %220 = vmatprep.subr.mxu0 0.0
  %221 = vmatpush1.msra.mxu0 0.0
  %222 = vmatprep.subr.mxu0 0.0
  %223 = vmatpush1.msra.mxu0 0.0
  %224 = vmatprep.subr.mxu0 0.0
  %225 = vmatpush1.msra.mxu0 0.0
  %226 = vmatprep.subr.mxu0 0.0
  %227 = vmatpush1.msra.mxu0 0.0
  %228 = vmatprep.subr.mxu0 0.0
  %229 = vmatpush1.msra.mxu0 0.0
  %230 = vmatprep.subr.mxu0 0.0
  %231 = vmatpush1.msra.mxu0 0.0
  %232 = vmatprep.subr.mxu0 0.0
  %233 = vmatpush1.msra.mxu0 0.0
  %234 = vmatprep.subr.mxu0 0.0
  %235 = vmatpush1.msra.mxu0 0.0
  %236 = vmatprep.subr.mxu0 0.0
  %237 = vmatpush1.msra.mxu0 0.0
  %238 = vmatprep.subr.mxu0 0.0
  %239 = vmatpush1.msra.mxu0 0.0
  %240 = vmatprep.subr.mxu0 0.0
  %241 = vmatpush1.msra.mxu0 0.0
  %242 = vmatprep.subr.mxu0 0.0
  %243 = vmatpush1.msra.mxu0 0.0
  %244 = vmatprep.subr.mxu0 0.0
  %245 = vmatpush1.msra.mxu0 0.0
  %246 = vmatprep.subr.mxu0 0.0
  %247 = vmatpush1.msra.mxu0 0.0
  %248 = vmatprep.subr.mxu0 0.0
  %249 = vmatpush1.msra.mxu0 0.0
  %250 = vmatprep.subr.mxu0 0.0
  %251 = vmatpush1.msra.mxu0 0.0
  %252 = vmatprep.mubr.f32.mxu0 0.0
  %253 = vmatmul.mubr.f32.gmra.mrb[0].mxu0 %v183
  %v254 = vpop.f32.mrb[0].mxu0
  %v255 = vadd.f32 %v180, %v254
  %v256 = vpop.f32.mrb[0].mxu0
  %257 = vmatprep.mubr.f32.mxu0 0.0
  %258 = vmatmul.mubr.f32.gmra.mrb[0].mxu0 %v186
  %v259 = vpop.f32.mrb[0].mxu0
  %v260 = vadd.f32 %v180, %v259
  %v261 = vpop.f32.mrb[0].mxu0
  %262 = vdwg.mxu0
  %v263 = vld [vmem:[%s2 + $0x1] sm:$0x1]
  %v264 = vlaneseq
  %v265 = vshrl.u32 %v264, 7
  %v266 = vsub.s32 0, %v265
  %v267 = vrot.slane %v263, %v266
  %268 = vmatprep.subr.mxu0 0.0
  %269 = vmatpush1.msra.mxu0 %v126
  %270 = vmatprep.subr.mxu0 0.0
  %271 = vmatpush1.msra.mxu0 %v127
  %272 = vmatprep.subr.mxu0 0.0
  %273 = vmatpush1.msra.mxu0 %v128
  %274 = vmatprep.subr.mxu0 0.0
  %275 = vmatpush1.msra.mxu0 %v129
  %276 = vmatprep.subr.mxu0 0.0
  %277 = vmatpush1.msra.mxu0 0.0
  %278 = vmatprep.subr.mxu0 0.0
  %279 = vmatpush1.msra.mxu0 0.0
  %280 = vmatprep.subr.mxu0 0.0
  %281 = vmatpush1.msra.mxu0 0.0
  %282 = vmatprep.subr.mxu0 0.0
  %283 = vmatpush1.msra.mxu0 0.0
  %284 = vmatprep.subr.mxu0 0.0
  %285 = vmatpush1.msra.mxu0 0.0
  %286 = vmatprep.subr.mxu0 0.0
  %287 = vmatpush1.msra.mxu0 0.0
  %288 = vmatprep.subr.mxu0 0.0
  %289 = vmatpush1.msra.mxu0 0.0
  %290 = vmatprep.subr.mxu0 0.0
  %291 = vmatpush1.msra.mxu0 0.0
  %292 = vmatprep.subr.mxu0 0.0
  %293 = vmatpush1.msra.mxu0 0.0
  %294 = vmatprep.subr.mxu0 0.0
  %295 = vmatpush1.msra.mxu0 0.0
  %296 = vmatprep.subr.mxu0 0.0
  %297 = vmatpush1.msra.mxu0 0.0
  %298 = vmatprep.subr.mxu0 0.0
  %299 = vmatpush1.msra.mxu0 0.0
  %300 = vmatprep.subr.mxu0 0.0
  %301 = vmatpush1.msra.mxu0 0.0
  %302 = vmatprep.subr.mxu0 0.0
  %303 = vmatpush1.msra.mxu0 0.0
  %304 = vmatprep.subr.mxu0 0.0
  %305 = vmatpush1.msra.mxu0 0.0
  %306 = vmatprep.subr.mxu0 0.0
  %307 = vmatpush1.msra.mxu0 0.0
  %308 = vmatprep.subr.mxu0 0.0
  %309 = vmatpush1.msra.mxu0 0.0
  %310 = vmatprep.subr.mxu0 0.0
  %311 = vmatpush1.msra.mxu0 0.0
  %312 = vmatprep.subr.mxu0 0.0
  %313 = vmatpush1.msra.mxu0 0.0
  %314 = vmatprep.subr.mxu0 0.0
  %315 = vmatpush1.msra.mxu0 0.0
  %316 = vmatprep.subr.mxu0 0.0
  %317 = vmatpush1.msra.mxu0 0.0
  %318 = vmatprep.subr.mxu0 0.0
  %319 = vmatpush1.msra.mxu0 0.0
  %320 = vmatprep.subr.mxu0 0.0
  %321 = vmatpush1.msra.mxu0 0.0
  %322 = vmatprep.subr.mxu0 0.0
  %323 = vmatpush1.msra.mxu0 0.0
  %324 = vmatprep.subr.mxu0 0.0
  %325 = vmatpush1.msra.mxu0 0.0
  %326 = vmatprep.subr.mxu0 0.0
  %327 = vmatpush1.msra.mxu0 0.0
  %328 = vmatprep.subr.mxu0 0.0
  %329 = vmatpush1.msra.mxu0 0.0
  %330 = vmatprep.subr.mxu0 0.0
  %331 = vmatpush1.msra.mxu0 0.0
  %332 = vmatprep.mubr.f32.mxu0 0.0
  %333 = vmatmul.mubr.f32.gmra.mrb[0].mxu0 %v183
  %v334 = vpop.f32.mrb[0].mxu0
  %v335 = vadd.f32 %v267, %v334
  %v336 = vpop.f32.mrb[0].mxu0
  %337 = vmatprep.mubr.f32.mxu0 0.0
  %338 = vmatmul.mubr.f32.gmra.mrb[0].mxu0 %v186
  %v339 = vpop.f32.mrb[0].mxu0
  %v340 = vadd.f32 %v267, %v339
  %v341 = vpop.f32.mrb[0].mxu0
  %342 = vdwg.mxu0
  %vm343 = vcmask 130048
  %v345 = vsel %vm343, %v168, 0
  %v348 = vsel %vm343, %v169, 0
  %v351 = vsel %vm343, %v170, 0
  %v354 = vsel %vm343, %v171, 0
  %v357 = vsel %vm343, %v172, 0
  %v360 = vsel %vm343, %v173, 0
  %v363 = vsel %vm343, %v174, 0
  %v366 = vsel %vm343, %v175, 0
  %368 = vmatprep.subr.mxu0 0.0
  %369 = vmatpush1.msra.mxu0 %v335
  %370 = vmatprep.subr.mxu0 0.0
  %371 = vmatpush1.msra.mxu0 %v340
  %372 = vmatprep.subr.mxu0 0.0
  %373 = vmatpush1.msra.mxu0 0.0
  %374 = vmatprep.subr.mxu0 0.0
  %375 = vmatpush1.msra.mxu0 0.0
  %376 = vmatprep.subr.mxu0 0.0
  %377 = vmatpush1.msra.mxu0 0.0
  %378 = vmatprep.subr.mxu0 0.0
  %379 = vmatpush1.msra.mxu0 0.0
  %380 = vmatprep.subr.mxu0 0.0
  %381 = vmatpush1.msra.mxu0 0.0
  %382 = vmatprep.subr.mxu0 0.0
  %383 = vmatpush1.msra.mxu0 0.0
  %384 = vmatprep.subr.mxu0 0.0
  %385 = vmatpush1.msra.mxu0 0.0
  %386 = vmatprep.subr.mxu0 0.0
  %387 = vmatpush1.msra.mxu0 0.0
  %388 = vmatprep.subr.mxu0 0.0
  %389 = vmatpush1.msra.mxu0 0.0
  %390 = vmatprep.subr.mxu0 0.0
  %391 = vmatpush1.msra.mxu0 0.0
  %392 = vmatprep.subr.mxu0 0.0
  %393 = vmatpush1.msra.mxu0 0.0
  %394 = vmatprep.subr.mxu0 0.0
  %395 = vmatpush1.msra.mxu0 0.0
  %396 = vmatprep.subr.mxu0 0.0
  %397 = vmatpush1.msra.mxu0 0.0
  %398 = vmatprep.subr.mxu0 0.0
  %399 = vmatpush1.msra.mxu0 0.0
  %400 = vmatprep.subr.mxu0 0.0
  %401 = vmatpush1.msra.mxu0 0.0
  %402 = vmatprep.subr.mxu0 0.0
  %403 = vmatpush1.msra.mxu0 0.0
  %404 = vmatprep.subr.mxu0 0.0
  %405 = vmatpush1.msra.mxu0 0.0
  %406 = vmatprep.subr.mxu0 0.0
  %407 = vmatpush1.msra.mxu0 0.0
  %408 = vmatprep.subr.mxu0 0.0
  %409 = vmatpush1.msra.mxu0 0.0
  %410 = vmatprep.subr.mxu0 0.0
  %411 = vmatpush1.msra.mxu0 0.0
  %412 = vmatprep.subr.mxu0 0.0
  %413 = vmatpush1.msra.mxu0 0.0
  %414 = vmatprep.subr.mxu0 0.0
  %415 = vmatpush1.msra.mxu0 0.0
  %416 = vmatprep.subr.mxu0 0.0
  %417 = vmatpush1.msra.mxu0 0.0
  %418 = vmatprep.subr.mxu0 0.0
  %419 = vmatpush1.msra.mxu0 0.0
  %420 = vmatprep.subr.mxu0 0.0
  %421 = vmatpush1.msra.mxu0 0.0
  %422 = vmatprep.subr.mxu0 0.0
  %423 = vmatpush1.msra.mxu0 0.0
  %424 = vmatprep.subr.mxu0 0.0
  %425 = vmatpush1.msra.mxu0 0.0
  %426 = vmatprep.subr.mxu0 0.0
  %427 = vmatpush1.msra.mxu0 0.0
  %428 = vmatprep.subr.mxu0 0.0
  %429 = vmatpush1.msra.mxu0 0.0
  %430 = vmatprep.subr.mxu0 0.0
  %431 = vmatpush1.msra.mxu0 0.0
  %432 = vmatprep.mubr.f32.mxu0 0.0
  %433 = vmatmul.mubr.f32.gmra.mrb[0].mxu0 %v345
  %v434 = vpop.f32.mrb[0].mxu0
  %v435 = vadd.f32 0.0, %v434
  %v436 = vpop.f32.mrb[0].mxu0
  %437 = vmatprep.mubr.f32.mxu0 0.0
  %438 = vmatmul.mubr.f32.gmra.mrb[0].mxu0 %v348
  %v439 = vpop.f32.mrb[0].mxu0
  %v440 = vadd.f32 0.0, %v439
  %v441 = vpop.f32.mrb[0].mxu0
  %442 = vmatprep.mubr.f32.mxu0 0.0
  %443 = vmatmul.mubr.f32.gmra.mrb[0].mxu0 %v351
  %v444 = vpop.f32.mrb[0].mxu0
  %v445 = vadd.f32 0.0, %v444
  %v446 = vpop.f32.mrb[0].mxu0
  %447 = vmatprep.mubr.f32.mxu0 0.0
  %448 = vmatmul.mubr.f32.gmra.mrb[0].mxu0 %v354
  %v449 = vpop.f32.mrb[0].mxu0
  %v450 = vadd.f32 0.0, %v449
  %v451 = vpop.f32.mrb[0].mxu0
  %452 = vmatprep.mubr.f32.mxu0 0.0
  %453 = vmatmul.mubr.f32.gmra.mrb[0].mxu0 %v357
  %v454 = vpop.f32.mrb[0].mxu0
  %v455 = vadd.f32 0.0, %v454
  %v456 = vpop.f32.mrb[0].mxu0
  %457 = vmatprep.mubr.f32.mxu0 0.0
  %458 = vmatmul.mubr.f32.gmra.mrb[0].mxu0 %v360
  %v459 = vpop.f32.mrb[0].mxu0
  %v460 = vadd.f32 0.0, %v459
  %v461 = vpop.f32.mrb[0].mxu0
  %462 = vmatprep.mubr.f32.mxu0 0.0
  %463 = vmatmul.mubr.f32.gmra.mrb[0].mxu0 %v363
  %v464 = vpop.f32.mrb[0].mxu0
  %v465 = vadd.f32 0.0, %v464
  %v466 = vpop.f32.mrb[0].mxu0
  %467 = vmatprep.mubr.f32.mxu0 0.0
  %468 = vmatmul.mubr.f32.gmra.mrb[0].mxu0 %v366
  %v469 = vpop.f32.mrb[0].mxu0
  %v470 = vadd.f32 0.0, %v469
  %v471 = vpop.f32.mrb[0].mxu0
  %472 = vdwg.mxu0
  %v473 = vmul.f32 %v435, %v150
  %v474 = vmul.f32 %v440, %v151
  %v475 = vmul.f32 %v445, %v152
  %v476 = vmul.f32 %v450, %v153
  %v477 = vmul.f32 %v455, %v154
  %v478 = vmul.f32 %v460, %v155
  %v479 = vmul.f32 %v465, %v156
  %v480 = vmul.f32 %v470, %v157
  %v482 = vsel %vm181, %v255, 0
  %v485 = vsel %vm181, %v260, 0
  %v488 = vsel %vm181, %v473, 0
  %v491 = vsel %vm181, %v474, 0
  %v494 = vsel %vm181, %v475, 0
  %v497 = vsel %vm181, %v476, 0
  %v500 = vsel %vm181, %v477, 0
  %v503 = vsel %vm181, %v478, 0
  %v506 = vsel %vm181, %v479, 0
  %v509 = vsel %vm181, %v480, 0
  %511 = vmatprep.subr.mxu0 0.0
  %512 = vmatpush1.xpose.msra.mxu0 %v488
  %513 = vmatprep.subr.mxu0 0.0
  %514 = vmatpush1.xpose.msra.mxu0 %v491
  %515 = vmatprep.subr.mxu0 0.0
  %516 = vmatpush1.xpose.msra.mxu0 %v494
  %517 = vmatprep.subr.mxu0 0.0
  %518 = vmatpush1.xpose.msra.mxu0 %v497
  %519 = vmatprep.subr.mxu0 0.0
  %520 = vmatpush1.xpose.msra.mxu0 %v500
  %521 = vmatprep.subr.mxu0 0.0
  %522 = vmatpush1.xpose.msra.mxu0 %v503
  %523 = vmatprep.subr.mxu0 0.0
  %524 = vmatpush1.xpose.msra.mxu0 %v506
  %525 = vmatprep.subr.mxu0 0.0
  %526 = vmatpush1.xpose.msra.mxu0 %v509
  %527 = vmatprep.subr.mxu0 0.0
  %528 = vmatpush1.xpose.msra.mxu0 0.0
  %529 = vmatprep.subr.mxu0 0.0
  %530 = vmatpush1.xpose.msra.mxu0 0.0
  %531 = vmatprep.subr.mxu0 0.0
  %532 = vmatpush1.xpose.msra.mxu0 0.0
  %533 = vmatprep.subr.mxu0 0.0
  %534 = vmatpush1.xpose.msra.mxu0 0.0
  %535 = vmatprep.subr.mxu0 0.0
  %536 = vmatpush1.xpose.msra.mxu0 0.0
  %537 = vmatprep.subr.mxu0 0.0
  %538 = vmatpush1.xpose.msra.mxu0 0.0
  %539 = vmatprep.subr.mxu0 0.0
  %540 = vmatpush1.xpose.msra.mxu0 0.0
  %541 = vmatprep.subr.mxu0 0.0
  %542 = vmatpush1.xpose.msra.mxu0 0.0
  %543 = vmatprep.subr.mxu0 0.0
  %544 = vmatpush1.xpose.msra.mxu0 0.0
  %545 = vmatprep.subr.mxu0 0.0
  %546 = vmatpush1.xpose.msra.mxu0 0.0
  %547 = vmatprep.subr.mxu0 0.0
  %548 = vmatpush1.xpose.msra.mxu0 0.0
  %549 = vmatprep.subr.mxu0 0.0
  %550 = vmatpush1.xpose.msra.mxu0 0.0
  %551 = vmatprep.subr.mxu0 0.0
  %552 = vmatpush1.xpose.msra.mxu0 0.0
  %553 = vmatprep.subr.mxu0 0.0
  %554 = vmatpush1.xpose.msra.mxu0 0.0
  %555 = vmatprep.subr.mxu0 0.0
  %556 = vmatpush1.xpose.msra.mxu0 0.0
  %557 = vmatprep.subr.mxu0 0.0
  %558 = vmatpush1.xpose.msra.mxu0 0.0
  %559 = vmatprep.subr.mxu0 0.0
  %560 = vmatpush1.xpose.msra.mxu0 0.0
  %561 = vmatprep.subr.mxu0 0.0
  %562 = vmatpush1.xpose.msra.mxu0 0.0
  %563 = vmatprep.subr.mxu0 0.0
  %564 = vmatpush1.xpose.msra.mxu0 0.0
  %565 = vmatprep.subr.mxu0 0.0
  %566 = vmatpush1.xpose.msra.mxu0 0.0
  %567 = vmatprep.subr.mxu0 0.0
  %568 = vmatpush1.xpose.msra.mxu0 0.0
  %569 = vmatprep.subr.mxu0 0.0
  %570 = vmatpush1.xpose.msra.mxu0 0.0
  %571 = vmatprep.subr.mxu0 0.0
  %572 = vmatpush1.xpose.msra.mxu0 0.0
  %573 = vmatprep.subr.mxu0 0.0
  %574 = vmatpush1.xpose.msra.mxu0 0.0
  %575 = vmatprep.mubr.f32.mxu0 0.0
  %576 = vmatmul.mubr.f32.gmra.mrb[0].mxu0 %v482
  %v577 = vpop.f32.mrb[0].mxu0
  %v578 = vadd.f32 0.0, %v577
  %v579 = vpop.f32.mrb[0].mxu0
  %580 = vmatprep.mubr.f32.mxu0 0.0
  %581 = vmatmul.mubr.f32.gmra.mrb[0].mxu0 %v485
  %v582 = vpop.f32.mrb[0].mxu0
  %v583 = vadd.f32 0.0, %v582
  %v584 = vpop.f32.mrb[0].mxu0
  %585 = vdwg.mxu0
  %v586 = vmul.f32 %v578, 0.35355338
  %v587 = vmul.f32 %v583, 0.35355338
  %v588 = vadd.f32 %v586, %v166
  %v589 = vadd.f32 %v587, %v167
  %v590 = vsel %vm40, %v588, -inf
  %591 = vmax.xlane.f32.xlu0 %v590
  %v592 = vpop.xlane.xlu0 %591
  %v593 = vsel %vm40, %v589, -inf
  %594 = vmax.xlane.f32.xlu0 %v593
  %v595 = vpop.xlane.xlu0 %594
  %v596 = vsub.f32 %v588, %v592
  %v597 = vsub.f32 %v589, %v595
  %v598 = vmul.f32 %v596, 1.442695
  %v599 = vpow.pop %v598
  %v600 = vmul.f32 %v597, 1.442695
  %v601 = vpow.pop %v600
  %v603 = vsel %vm40, %v599, 0
  %v606 = vsel %vm40, %v601, 0
  %608 = vmatprep.subr.mxu0 0.0
  %609 = vmatpush1.msra.mxu0 %v158
  %610 = vmatprep.subr.mxu0 0.0
  %611 = vmatpush1.msra.mxu0 %v159
  %612 = vmatprep.subr.mxu0 0.0
  %613 = vmatpush1.msra.mxu0 %v160
  %614 = vmatprep.subr.mxu0 0.0
  %615 = vmatpush1.msra.mxu0 %v161
  %616 = vmatprep.subr.mxu0 0.0
  %617 = vmatpush1.msra.mxu0 %v162
  %618 = vmatprep.subr.mxu0 0.0
  %619 = vmatpush1.msra.mxu0 %v163
  %620 = vmatprep.subr.mxu0 0.0
  %621 = vmatpush1.msra.mxu0 %v164
  %622 = vmatprep.subr.mxu0 0.0
  %623 = vmatpush1.msra.mxu0 %v165
  %624 = vmatprep.subr.mxu0 0.0
  %625 = vmatpush1.msra.mxu0 0.0
  %626 = vmatprep.subr.mxu0 0.0
  %627 = vmatpush1.msra.mxu0 0.0
  %628 = vmatprep.subr.mxu0 0.0
  %629 = vmatpush1.msra.mxu0 0.0
  %630 = vmatprep.subr.mxu0 0.0
  %631 = vmatpush1.msra.mxu0 0.0
  %632 = vmatprep.subr.mxu0 0.0
  %633 = vmatpush1.msra.mxu0 0.0
  %634 = vmatprep.subr.mxu0 0.0
  %635 = vmatpush1.msra.mxu0 0.0
  %636 = vmatprep.subr.mxu0 0.0
  %637 = vmatpush1.msra.mxu0 0.0
  %638 = vmatprep.subr.mxu0 0.0
  %639 = vmatpush1.msra.mxu0 0.0
  %640 = vmatprep.subr.mxu0 0.0
  %641 = vmatpush1.msra.mxu0 0.0
  %642 = vmatprep.subr.mxu0 0.0
  %643 = vmatpush1.msra.mxu0 0.0
  %644 = vmatprep.subr.mxu0 0.0
  %645 = vmatpush1.msra.mxu0 0.0
  %646 = vmatprep.subr.mxu0 0.0
  %647 = vmatpush1.msra.mxu0 0.0
  %648 = vmatprep.subr.mxu0 0.0
  %649 = vmatpush1.msra.mxu0 0.0
  %650 = vmatprep.subr.mxu0 0.0
  %651 = vmatpush1.msra.mxu0 0.0
  %652 = vmatprep.subr.mxu0 0.0
  %653 = vmatpush1.msra.mxu0 0.0
  %654 = vmatprep.subr.mxu0 0.0
  %655 = vmatpush1.msra.mxu0 0.0
  %656 = vmatprep.subr.mxu0 0.0
  %657 = vmatpush1.msra.mxu0 0.0
  %658 = vmatprep.subr.mxu0 0.0
  %659 = vmatpush1.msra.mxu0 0.0
  %660 = vmatprep.subr.mxu0 0.0
  %661 = vmatpush1.msra.mxu0 0.0
  %662 = vmatprep.subr.mxu0 0.0
  %663 = vmatpush1.msra.mxu0 0.0
  %664 = vmatprep.subr.mxu0 0.0
  %665 = vmatpush1.msra.mxu0 0.0
  %666 = vmatprep.subr.mxu0 0.0
  %667 = vmatpush1.msra.mxu0 0.0
  %668 = vmatprep.subr.mxu0 0.0
  %669 = vmatpush1.msra.mxu0 0.0
  %670 = vmatprep.subr.mxu0 0.0
  %671 = vmatpush1.msra.mxu0 0.0
  %672 = vmatprep.mubr.f32.mxu0 0.0
  %673 = vmatmul.mubr.f32.gmra.mrb[0].mxu0 %v603
  %v674 = vpop.f32.mrb[0].mxu0
  %v675 = vadd.f32 0.0, %v674
  %v676 = vpop.f32.mrb[0].mxu0
  %677 = vmatprep.mubr.f32.mxu0 0.0
  %678 = vmatmul.mubr.f32.gmra.mrb[0].mxu0 %v606
  %v679 = vpop.f32.mrb[0].mxu0
  %v680 = vadd.f32 0.0, %v679
  %v681 = vpop.f32.mrb[0].mxu0
  %682 = vdwg.mxu0
  %v683 = vrcp.pop %v675
  %v684 = vrcp.pop %v680
  %v685 = vmul.f32 %v599, %v683
  %v686 = vmul.f32 %v601, %v684
  %v688 = vsel %vm40, %v685, 0
  %v691 = vsel %vm40, %v686, 0
  %693 = vmatprep.subr.mxu0 0.0
  %694 = vmatpush1.msra.mxu0 %v473
  %695 = vmatprep.subr.mxu0 0.0
  %696 = vmatpush1.msra.mxu0 %v474
  %697 = vmatprep.subr.mxu0 0.0
  %698 = vmatpush1.msra.mxu0 %v475
  %699 = vmatprep.subr.mxu0 0.0
  %700 = vmatpush1.msra.mxu0 %v476
  %701 = vmatprep.subr.mxu0 0.0
  %702 = vmatpush1.msra.mxu0 %v477
  %703 = vmatprep.subr.mxu0 0.0
  %704 = vmatpush1.msra.mxu0 %v478
  %705 = vmatprep.subr.mxu0 0.0
  %706 = vmatpush1.msra.mxu0 %v479
  %707 = vmatprep.subr.mxu0 0.0
  %708 = vmatpush1.msra.mxu0 %v480
  %709 = vmatprep.subr.mxu0 0.0
  %710 = vmatpush1.msra.mxu0 0.0
  %711 = vmatprep.subr.mxu0 0.0
  %712 = vmatpush1.msra.mxu0 0.0
  %713 = vmatprep.subr.mxu0 0.0
  %714 = vmatpush1.msra.mxu0 0.0
  %715 = vmatprep.subr.mxu0 0.0
  %716 = vmatpush1.msra.mxu0 0.0
  %717 = vmatprep.subr.mxu0 0.0
  %718 = vmatpush1.msra.mxu0 0.0
  %719 = vmatprep.subr.mxu0 0.0
  %720 = vmatpush1.msra.mxu0 0.0
  %721 = vmatprep.subr.mxu0 0.0
  %722 = vmatpush1.msra.mxu0 0.0
  %723 = vmatprep.subr.mxu0 0.0
  %724 = vmatpush1.msra.mxu0 0.0
  %725 = vmatprep.subr.mxu0 0.0
  %726 = vmatpush1.msra.mxu0 0.0
  %727 = vmatprep.subr.mxu0 0.0
  %728 = vmatpush1.msra.mxu0 0.0
  %729 = vmatprep.subr.mxu0 0.0
  %730 = vmatpush1.msra.mxu0 0.0
  %731 = vmatprep.subr.mxu0 0.0
  %732 = vmatpush1.msra.mxu0 0.0
  %733 = vmatprep.subr.mxu0 0.0
  %734 = vmatpush1.msra.mxu0 0.0
  %735 = vmatprep.subr.mxu0 0.0
  %736 = vmatpush1.msra.mxu0 0.0
  %737 = vmatprep.subr.mxu0 0.0
  %738 = vmatpush1.msra.mxu0 0.0
  %739 = vmatprep.subr.mxu0 0.0
  %740 = vmatpush1.msra.mxu0 0.0
  %741 = vmatprep.subr.mxu0 0.0
  %742 = vmatpush1.msra.mxu0 0.0
  %743 = vmatprep.subr.mxu0 0.0
  %744 = vmatpush1.msra.mxu0 0.0
  %745 = vmatprep.subr.mxu0 0.0
  %746 = vmatpush1.msra.mxu0 0.0
  %747 = vmatprep.subr.mxu0 0.0
  %748 = vmatpush1.msra.mxu0 0.0
  %749 = vmatprep.subr.mxu0 0.0
  %750 = vmatpush1.msra.mxu0 0.0
  %751 = vmatprep.subr.mxu0 0.0
  %752 = vmatpush1.msra.mxu0 0.0
  %753 = vmatprep.subr.mxu0 0.0
  %754 = vmatpush1.msra.mxu0 0.0
  %755 = vmatprep.subr.mxu0 0.0
  %756 = vmatpush1.msra.mxu0 0.0
  %757 = vmatprep.mubr.f32.mxu0 0.0
  %758 = vmatmul.mubr.f32.gmra.mrb[0].mxu0 %v688
  %v759 = vpop.f32.mrb[0].mxu0
  %v760 = vadd.f32 0.0, %v759
  %v761 = vpop.f32.mrb[0].mxu0
  %762 = vmatprep.mubr.f32.mxu0 0.0
  %763 = vmatmul.mubr.f32.gmra.mrb[0].mxu0 %v691
  %v764 = vpop.f32.mrb[0].mxu0
  %v765 = vadd.f32 0.0, %v764
  %v766 = vpop.f32.mrb[0].mxu0
  %767 = vdwg.mxu0
  %v768 = vld [vmem:[%s2 + $0x2] sm:$0x1]
  %v769 = vlaneseq
  %v770 = vshrl.u32 %v769, 7
  %v771 = vsub.s32 0, %v770
  %v772 = vrot.slane %v768, %v771
  %v774 = vsel %vm40, %v760, 0
  %v777 = vsel %vm40, %v765, 0
  %779 = vmatprep.subr.mxu0 0.0
  %780 = vmatpush1.msra.mxu0 %v130
  %781 = vmatprep.subr.mxu0 0.0
  %782 = vmatpush1.msra.mxu0 %v131
  %783 = vmatprep.subr.mxu0 0.0
  %784 = vmatpush1.msra.mxu0 %v132
  %785 = vmatprep.subr.mxu0 0.0
  %786 = vmatpush1.msra.mxu0 %v133
  %787 = vmatprep.subr.mxu0 0.0
  %788 = vmatpush1.msra.mxu0 %v134
  %789 = vmatprep.subr.mxu0 0.0
  %790 = vmatpush1.msra.mxu0 %v135
  %791 = vmatprep.subr.mxu0 0.0
  %792 = vmatpush1.msra.mxu0 %v136
  %793 = vmatprep.subr.mxu0 0.0
  %794 = vmatpush1.msra.mxu0 %v137
  %795 = vmatprep.subr.mxu0 0.0
  %796 = vmatpush1.msra.mxu0 0.0
  %797 = vmatprep.subr.mxu0 0.0
  %798 = vmatpush1.msra.mxu0 0.0
  %799 = vmatprep.subr.mxu0 0.0
  %800 = vmatpush1.msra.mxu0 0.0
  %801 = vmatprep.subr.mxu0 0.0
  %802 = vmatpush1.msra.mxu0 0.0
  %803 = vmatprep.subr.mxu0 0.0
  %804 = vmatpush1.msra.mxu0 0.0
  %805 = vmatprep.subr.mxu0 0.0
  %806 = vmatpush1.msra.mxu0 0.0
  %807 = vmatprep.subr.mxu0 0.0
  %808 = vmatpush1.msra.mxu0 0.0
  %809 = vmatprep.subr.mxu0 0.0
  %810 = vmatpush1.msra.mxu0 0.0
  %811 = vmatprep.subr.mxu0 0.0
  %812 = vmatpush1.msra.mxu0 0.0
  %813 = vmatprep.subr.mxu0 0.0
  %814 = vmatpush1.msra.mxu0 0.0
  %815 = vmatprep.subr.mxu0 0.0
  %816 = vmatpush1.msra.mxu0 0.0
  %817 = vmatprep.subr.mxu0 0.0
  %818 = vmatpush1.msra.mxu0 0.0
  %819 = vmatprep.subr.mxu0 0.0
  %820 = vmatpush1.msra.mxu0 0.0
  %821 = vmatprep.subr.mxu0 0.0
  %822 = vmatpush1.msra.mxu0 0.0
  %823 = vmatprep.subr.mxu0 0.0
  %824 = vmatpush1.msra.mxu0 0.0
  %825 = vmatprep.subr.mxu0 0.0
  %826 = vmatpush1.msra.mxu0 0.0
  %827 = vmatprep.subr.mxu0 0.0
  %828 = vmatpush1.msra.mxu0 0.0
  %829 = vmatprep.subr.mxu0 0.0
  %830 = vmatpush1.msra.mxu0 0.0
  %831 = vmatprep.subr.mxu0 0.0
  %832 = vmatpush1.msra.mxu0 0.0
  %833 = vmatprep.subr.mxu0 0.0
  %834 = vmatpush1.msra.mxu0 0.0
  %835 = vmatprep.subr.mxu0 0.0
  %836 = vmatpush1.msra.mxu0 0.0
  %837 = vmatprep.subr.mxu0 0.0
  %838 = vmatpush1.msra.mxu0 0.0
  %839 = vmatprep.subr.mxu0 0.0
  %840 = vmatpush1.msra.mxu0 0.0
  %841 = vmatprep.subr.mxu0 0.0
  %842 = vmatpush1.msra.mxu0 0.0
  %843 = vmatprep.mubr.f32.mxu0 0.0
  %844 = vmatmul.mubr.f32.gmra.mrb[0].mxu0 %v774
  %v845 = vpop.f32.mrb[0].mxu0
  %v846 = vadd.f32 %v772, %v845
  %v847 = vpop.f32.mrb[0].mxu0
  %848 = vmatprep.mubr.f32.mxu0 0.0
  %849 = vmatmul.mubr.f32.gmra.mrb[0].mxu0 %v777
  %v850 = vpop.f32.mrb[0].mxu0
  %v851 = vadd.f32 %v772, %v850
  %v852 = vpop.f32.mrb[0].mxu0
  %853 = vdwg.mxu0
  %v854 = vadd.f32 %v114, %v846
  %v855 = vadd.f32 %v119, %v851
  %v856 = vld [vmem:[%s2 + $0x5] sm:$0x1]
  %v857 = vld [vmem:[%s2 + $0x6] sm:$0x1]
  %v858 = vsel %vm181, %v854, 0.0
  %859 = vadd.xlane.f32.xlu0 %v858
  %v860 = vpop.xlane.xlu0 %859
  %v861 = vsel %vm181, %v855, 0.0
  %862 = vadd.xlane.f32.xlu0 %v861
  %v863 = vpop.xlane.xlu0 %862
  %v864 = vrcp.pop 32.0
  %v865 = vmul.f32 %v860, %v864
  %v866 = vmul.f32 %v863, %v864
  %v867 = vsub.f32 %v854, %v865
  %v868 = vsub.f32 %v855, %v866
  %v869 = vmul.f32 %v867, %v867
  %v870 = vmul.f32 %v868, %v868
  %v871 = vsel %vm181, %v869, 0.0
  %872 = vadd.xlane.f32.xlu0 %v871
  %v873 = vpop.xlane.xlu0 %872
  %v874 = vsel %vm181, %v870, 0.0
  %875 = vadd.xlane.f32.xlu0 %v874
  %v876 = vpop.xlane.xlu0 %875
  %v877 = vmul.f32 %v873, %v864
  %v878 = vmul.f32 %v876, %v864
  %v879 = vadd.f32 %v877, 1e-05
  %v880 = vadd.f32 %v878, 1e-05
  %v881 = vrsqrt.pop %v879
  %v882 = vrsqrt.pop %v880
  %v883 = vmul.f32 %v867, %v881
  %v884 = vmul.f32 %v868, %v882
  %v885 = vlaneseq
  %v886 = vshrl.u32 %v885, 7
  %v887 = vsub.s32 0, %v886
  %v888 = vrot.slane %v856, %v887
  %v889 = vmul.f32 %v883, %v888
  %v890 = vmul.f32 %v884, %v888
  %v891 = vlaneseq
  %v892 = vshrl.u32 %v891, 7
  %v893 = vsub.s32 0, %v892
  %v894 = vrot.slane %v857, %v893
  %v895 = vadd.f32 %v889, %v894
  %v896 = vadd.f32 %v890, %v894
  %v897 = vld [vmem:[%s2 + $0x3] sm:$0x1]
  %v898 = vlaneseq
  %v899 = vshrl.u32 %v898, 7
  %v900 = vsub.s32 0, %v899
  %v901 = vrot.slane %v897, %v900
  %v903 = vsel %vm181, %v895, 0
  %v906 = vsel %vm181, %v896, 0
  %908 = vmatprep.subr.mxu0 0.0
  %909 = vmatpush1.msra.mxu0 %v138
  %910 = vmatprep.subr.mxu0 0.0
  %911 = vmatpush1.msra.mxu0 %v139
  %912 = vmatprep.subr.mxu0 0.0
  %913 = vmatpush1.msra.mxu0 %v140
  %914 = vmatprep.subr.mxu0 0.0
  %915 = vmatpush1.msra.mxu0 %v141
  %916 = vmatprep.subr.mxu0 0.0
  %917 = vmatpush1.msra.mxu0 0.0
  %918 = vmatprep.subr.mxu0 0.0
  %919 = vmatpush1.msra.mxu0 0.0
  %920 = vmatprep.subr.mxu0 0.0
  %921 = vmatpush1.msra.mxu0 0.0
  %922 = vmatprep.subr.mxu0 0.0
  %923 = vmatpush1.msra.mxu0 0.0
  %924 = vmatprep.subr.mxu0 0.0
  %925 = vmatpush1.msra.mxu0 0.0
  %926 = vmatprep.subr.mxu0 0.0
  %927 = vmatpush1.msra.mxu0 0.0
  %928 = vmatprep.subr.mxu0 0.0
  %929 = vmatpush1.msra.mxu0 0.0
  %930 = vmatprep.subr.mxu0 0.0
  %931 = vmatpush1.msra.mxu0 0.0
  %932 = vmatprep.subr.mxu0 0.0
  %933 = vmatpush1.msra.mxu0 0.0
  %934 = vmatprep.subr.mxu0 0.0
  %935 = vmatpush1.msra.mxu0 0.0
  %936 = vmatprep.subr.mxu0 0.0
  %937 = vmatpush1.msra.mxu0 0.0
  %938 = vmatprep.subr.mxu0 0.0
  %939 = vmatpush1.msra.mxu0 0.0
  %940 = vmatprep.subr.mxu0 0.0
  %941 = vmatpush1.msra.mxu0 0.0
  %942 = vmatprep.subr.mxu0 0.0
  %943 = vmatpush1.msra.mxu0 0.0
  %944 = vmatprep.subr.mxu0 0.0
  %945 = vmatpush1.msra.mxu0 0.0
  %946 = vmatprep.subr.mxu0 0.0
  %947 = vmatpush1.msra.mxu0 0.0
  %948 = vmatprep.subr.mxu0 0.0
  %949 = vmatpush1.msra.mxu0 0.0
  %950 = vmatprep.subr.mxu0 0.0
  %951 = vmatpush1.msra.mxu0 0.0
  %952 = vmatprep.subr.mxu0 0.0
  %953 = vmatpush1.msra.mxu0 0.0
  %954 = vmatprep.subr.mxu0 0.0
  %955 = vmatpush1.msra.mxu0 0.0
  %956 = vmatprep.subr.mxu0 0.0
  %957 = vmatpush1.msra.mxu0 0.0
  %958 = vmatprep.subr.mxu0 0.0
  %959 = vmatpush1.msra.mxu0 0.0
  %960 = vmatprep.subr.mxu0 0.0
  %961 = vmatpush1.msra.mxu0 0.0
  %962 = vmatprep.subr.mxu0 0.0
  %963 = vmatpush1.msra.mxu0 0.0
  %964 = vmatprep.subr.mxu0 0.0
  %965 = vmatpush1.msra.mxu0 0.0
  %966 = vmatprep.subr.mxu0 0.0
  %967 = vmatpush1.msra.mxu0 0.0
  %968 = vmatprep.subr.mxu0 0.0
  %969 = vmatpush1.msra.mxu0 0.0
  %970 = vmatprep.subr.mxu0 0.0
  %971 = vmatpush1.msra.mxu0 0.0
  %972 = vmatprep.mubr.f32.mxu0 0.0
  %973 = vmatmul.mubr.f32.gmra.mrb[0].mxu0 %v903
  %v974 = vpop.f32.mrb[0].mxu0
  %v975 = vadd.f32 %v901, %v974
  %v976 = vpop.f32.mrb[0].mxu0
  %977 = vmatprep.mubr.f32.mxu0 0.0
  %978 = vmatmul.mubr.f32.gmra.mrb[0].mxu0 %v906
  %v979 = vpop.f32.mrb[0].mxu0
  %v980 = vadd.f32 %v901, %v979
  %v981 = vpop.f32.mrb[0].mxu0
  %982 = vdwg.mxu0
  %v983 = vmax.f32 %v975, 0.0
  %v984 = vmax.f32 %v980, 0.0
  %v985 = vld [vmem:[%s2 + $0x4] sm:$0x1]
  %v986 = vlaneseq
  %v987 = vshrl.u32 %v986, 7
  %v988 = vsub.s32 0, %v987
  %v989 = vrot.slane %v985, %v988
  %v991 = vsel %vm40, %v983, 0
  %v994 = vsel %vm40, %v984, 0
  %996 = vmatprep.subr.mxu0 0.0
  %997 = vmatpush1.msra.mxu0 %v142
  %998 = vmatprep.subr.mxu0 0.0
  %999 = vmatpush1.msra.mxu0 %v143
  %1000 = vmatprep.subr.mxu0 0.0
  %1001 = vmatpush1.msra.mxu0 %v144
  %1002 = vmatprep.subr.mxu0 0.0
  %1003 = vmatpush1.msra.mxu0 %v145
  %1004 = vmatprep.subr.mxu0 0.0
  %1005 = vmatpush1.msra.mxu0 %v146
  %1006 = vmatprep.subr.mxu0 0.0
  %1007 = vmatpush1.msra.mxu0 %v147
  %1008 = vmatprep.subr.mxu0 0.0
  %1009 = vmatpush1.msra.mxu0 %v148
  %1010 = vmatprep.subr.mxu0 0.0
  %1011 = vmatpush1.msra.mxu0 %v149
  %1012 = vmatprep.subr.mxu0 0.0
  %1013 = vmatpush1.msra.mxu0 0.0
  %1014 = vmatprep.subr.mxu0 0.0
  %1015 = vmatpush1.msra.mxu0 0.0
  %1016 = vmatprep.subr.mxu0 0.0
  %1017 = vmatpush1.msra.mxu0 0.0
  %1018 = vmatprep.subr.mxu0 0.0
  %1019 = vmatpush1.msra.mxu0 0.0
  %1020 = vmatprep.subr.mxu0 0.0
  %1021 = vmatpush1.msra.mxu0 0.0
  %1022 = vmatprep.subr.mxu0 0.0
  %1023 = vmatpush1.msra.mxu0 0.0
  %1024 = vmatprep.subr.mxu0 0.0
  %1025 = vmatpush1.msra.mxu0 0.0
  %1026 = vmatprep.subr.mxu0 0.0
  %1027 = vmatpush1.msra.mxu0 0.0
  %1028 = vmatprep.subr.mxu0 0.0
  %1029 = vmatpush1.msra.mxu0 0.0
  %1030 = vmatprep.subr.mxu0 0.0
  %1031 = vmatpush1.msra.mxu0 0.0
  %1032 = vmatprep.subr.mxu0 0.0
  %1033 = vmatpush1.msra.mxu0 0.0
  %1034 = vmatprep.subr.mxu0 0.0
  %1035 = vmatpush1.msra.mxu0 0.0
  %1036 = vmatprep.subr.mxu0 0.0
  %1037 = vmatpush1.msra.mxu0 0.0
  %1038 = vmatprep.subr.mxu0 0.0
  %1039 = vmatpush1.msra.mxu0 0.0
  %1040 = vmatprep.subr.mxu0 0.0
  %1041 = vmatpush1.msra.mxu0 0.0
  %1042 = vmatprep.subr.mxu0 0.0
  %1043 = vmatpush1.msra.mxu0 0.0
  %1044 = vmatprep.subr.mxu0 0.0
  %1045 = vmatpush1.msra.mxu0 0.0
  %1046 = vmatprep.subr.mxu0 0.0
  %1047 = vmatpush1.msra.mxu0 0.0
  %1048 = vmatprep.subr.mxu0 0.0
  %1049 = vmatpush1.msra.mxu0 0.0
  %1050 = vmatprep.subr.mxu0 0.0
  %1051 = vmatpush1.msra.mxu0 0.0
  %1052 = vmatprep.subr.mxu0 0.0
  %1053 = vmatpush1.msra.mxu0 0.0
  %1054 = vmatprep.subr.mxu0 0.0
  %1055 = vmatpush1.msra.mxu0 0.0
  %1056 = vmatprep.subr.mxu0 0.0
  %1057 = vmatpush1.msra.mxu0 0.0
  %1058 = vmatprep.subr.mxu0 0.0
  %1059 = vmatpush1.msra.mxu0 0.0
  %1060 = vmatprep.mubr.f32.mxu0 0.0
  %1061 = vmatmul.mubr.f32.gmra.mrb[0].mxu0 %v991
  %v1062 = vpop.f32.mrb[0].mxu0
  %v1063 = vadd.f32 %v989, %v1062
  %v1064 = vpop.f32.mrb[0].mxu0
  %1065 = vmatprep.mubr.f32.mxu0 0.0
  %1066 = vmatmul.mubr.f32.gmra.mrb[0].mxu0 %v994
  %v1067 = vpop.f32.mrb[0].mxu0
  %v1068 = vadd.f32 %v989, %v1067
  %v1069 = vpop.f32.mrb[0].mxu0
  %1070 = vdwg.mxu0
  %v1071 = vadd.f32 %v895, %v1063
  %v1072 = vadd.f32 %v896, %v1068
  %v1073 = vld [vmem:[%s2 + $0x7] sm:$0x1]
  %v1074 = vld [vmem:[%s2 + $0x8] sm:$0x1]
  %v1075 = vsel %vm181, %v1071, 0.0
  %1076 = vadd.xlane.f32.xlu0 %v1075
  %v1077 = vpop.xlane.xlu0 %1076
  %v1078 = vsel %vm181, %v1072, 0.0
  %1079 = vadd.xlane.f32.xlu0 %v1078
  %v1080 = vpop.xlane.xlu0 %1079
  %v1081 = vmul.f32 %v1077, %v864
  %v1082 = vmul.f32 %v1080, %v864
  %v1083 = vsub.f32 %v1071, %v1081
  %v1084 = vsub.f32 %v1072, %v1082
  %v1085 = vmul.f32 %v1083, %v1083
  %v1086 = vmul.f32 %v1084, %v1084
  %v1087 = vsel %vm181, %v1085, 0.0
  %1088 = vadd.xlane.f32.xlu0 %v1087
  %v1089 = vpop.xlane.xlu0 %1088
  %v1090 = vsel %vm181, %v1086, 0.0
  %1091 = vadd.xlane.f32.xlu0 %v1090
  %v1092 = vpop.xlane.xlu0 %1091
  %v1093 = vmul.f32 %v1089, %v864
  %v1094 = vmul.f32 %v1092, %v864
  %v1095 = vadd.f32 %v1093, 1e-05
  %v1096 = vadd.f32 %v1094, 1e-05
  %v1097 = vrsqrt.pop %v1095
  %v1098 = vrsqrt.pop %v1096
  %v1099 = vmul.f32 %v1083, %v1097
  %v1100 = vmul.f32 %v1084, %v1098
  %v1101 = vlaneseq
  %v1102 = vshrl.u32 %v1101, 7
  %v1103 = vsub.s32 0, %v1102
  %v1104 = vrot.slane %v1073, %v1103
  %v1105 = vmul.f32 %v1099, %v1104
  %v1106 = vmul.f32 %v1100, %v1104
  %v1107 = vlaneseq
  %v1108 = vshrl.u32 %v1107, 7
  %v1109 = vsub.s32 0, %v1108
  %v1110 = vrot.slane %v1074, %v1109
  %v1111 = vadd.f32 %v1105, %v1110
  %v1112 = vadd.f32 %v1106, %v1110
  %s1113 = scalar_lea.vmem %s1, 224
  %v1114 = vld [vmem:[%s1113] sm:$0xff]
  %v1115 = vld [vmem:[%s1113 + $0x8] sm:$0xff]
  %v1116 = vld [vmem:[%s1113 + $0x10] sm:$0xff]
  %v1117 = vld [vmem:[%s1113 + $0x18] sm:$0xff]
  %v1118 = vld [vmem:[%s1113 + $0x20] sm:$0xff]
  %v1119 = vld [vmem:[%s1113 + $0x28] sm:$0xff]
  %v1120 = vld [vmem:[%s1113 + $0x30] sm:$0xff]
  %v1121 = vld [vmem:[%s1113 + $0x38] sm:$0xff]
  %v1122 = vld [vmem:[%s1113 + $0x40] sm:$0xff]
  %v1123 = vld [vmem:[%s1113 + $0x48] sm:$0xff]
  %v1124 = vld [vmem:[%s1113 + $0x50] sm:$0xff]
  %v1125 = vld [vmem:[%s1113 + $0x58] sm:$0xff]
  %v1126 = vld [vmem:[%s1113 + $0x60] sm:$0xff]
  %v1127 = vld [vmem:[%s1113 + $0x68] sm:$0xff]
  %v1128 = vld [vmem:[%s1113 + $0x70] sm:$0xff]
  %v1129 = vld [vmem:[%s1113 + $0x78] sm:$0xff]
  %v1130 = vld [vmem:[%s1113 + $0x80] sm:$0xff]
  %v1131 = vld [vmem:[%s1113 + $0x88] sm:$0xff]
  %v1132 = vld [vmem:[%s1113 + $0x90] sm:$0xff]
  %v1133 = vld [vmem:[%s1113 + $0x98] sm:$0xff]
  %v1134 = vld [vmem:[%s1113 + $0xa0] sm:$0xff]
  %v1135 = vld [vmem:[%s1113 + $0xa8] sm:$0xff]
  %v1136 = vld [vmem:[%s1113 + $0xb0] sm:$0xff]
  %v1137 = vld [vmem:[%s1113 + $0xb8] sm:$0xff]
  %v1138 = vld [vmem:[%s1113 + $0xc0] sm:$0xff]
  %v1139 = vld [vmem:[%s1113 + $0xc8] sm:$0xff]
  %v1140 = vld [vmem:[%s1113 + $0xd0] sm:$0xff]
  %v1141 = vld [vmem:[%s1113 + $0xd8] sm:$0xff]
  %v1142 = vld [vmem:[%s2 + $0x10] sm:$0x1]
  %v1143 = vlaneseq
  %v1144 = vshrl.u32 %v1143, 7
  %v1145 = vsub.s32 0, %v1144
  %v1146 = vrot.slane %v1142, %v1145
  %v1148 = vsel %vm181, %v1111, 0
  %v1151 = vsel %vm181, %v1112, 0
  %1153 = vmatprep.subr.mxu0 0.0
  %1154 = vmatpush1.msra.mxu0 %v1114
  %1155 = vmatprep.subr.mxu0 0.0
  %1156 = vmatpush1.msra.mxu0 %v1115
  %1157 = vmatprep.subr.mxu0 0.0
  %1158 = vmatpush1.msra.mxu0 %v1116
  %1159 = vmatprep.subr.mxu0 0.0
  %1160 = vmatpush1.msra.mxu0 %v1117
  %1161 = vmatprep.subr.mxu0 0.0
  %1162 = vmatpush1.msra.mxu0 0.0
  %1163 = vmatprep.subr.mxu0 0.0
  %1164 = vmatpush1.msra.mxu0 0.0
  %1165 = vmatprep.subr.mxu0 0.0
  %1166 = vmatpush1.msra.mxu0 0.0
  %1167 = vmatprep.subr.mxu0 0.0
  %1168 = vmatpush1.msra.mxu0 0.0
  %1169 = vmatprep.subr.mxu0 0.0
  %1170 = vmatpush1.msra.mxu0 0.0
  %1171 = vmatprep.subr.mxu0 0.0
  %1172 = vmatpush1.msra.mxu0 0.0
  %1173 = vmatprep.subr.mxu0 0.0
  %1174 = vmatpush1.msra.mxu0 0.0
  %1175 = vmatprep.subr.mxu0 0.0
  %1176 = vmatpush1.msra.mxu0 0.0
  %1177 = vmatprep.subr.mxu0 0.0
  %1178 = vmatpush1.msra.mxu0 0.0
  %1179 = vmatprep.subr.mxu0 0.0
  %1180 = vmatpush1.msra.mxu0 0.0
  %1181 = vmatprep.subr.mxu0 0.0
  %1182 = vmatpush1.msra.mxu0 0.0
  %1183 = vmatprep.subr.mxu0 0.0
  %1184 = vmatpush1.msra.mxu0 0.0
  %1185 = vmatprep.subr.mxu0 0.0
  %1186 = vmatpush1.msra.mxu0 0.0
  %1187 = vmatprep.subr.mxu0 0.0
  %1188 = vmatpush1.msra.mxu0 0.0
  %1189 = vmatprep.subr.mxu0 0.0
  %1190 = vmatpush1.msra.mxu0 0.0
  %1191 = vmatprep.subr.mxu0 0.0
  %1192 = vmatpush1.msra.mxu0 0.0
  %1193 = vmatprep.subr.mxu0 0.0
  %1194 = vmatpush1.msra.mxu0 0.0
  %1195 = vmatprep.subr.mxu0 0.0
  %1196 = vmatpush1.msra.mxu0 0.0
  %1197 = vmatprep.subr.mxu0 0.0
  %1198 = vmatpush1.msra.mxu0 0.0
  %1199 = vmatprep.subr.mxu0 0.0
  %1200 = vmatpush1.msra.mxu0 0.0
  %1201 = vmatprep.subr.mxu0 0.0
  %1202 = vmatpush1.msra.mxu0 0.0
  %1203 = vmatprep.subr.mxu0 0.0
  %1204 = vmatpush1.msra.mxu0 0.0
  %1205 = vmatprep.subr.mxu0 0.0
  %1206 = vmatpush1.msra.mxu0 0.0
  %1207 = vmatprep.subr.mxu0 0.0
  %1208 = vmatpush1.msra.mxu0 0.0
  %1209 = vmatprep.subr.mxu0 0.0
  %1210 = vmatpush1.msra.mxu0 0.0
  %1211 = vmatprep.subr.mxu0 0.0
  %1212 = vmatpush1.msra.mxu0 0.0
  %1213 = vmatprep.subr.mxu0 0.0
  %1214 = vmatpush1.msra.mxu0 0.0
  %1215 = vmatprep.subr.mxu0 0.0
  %1216 = vmatpush1.msra.mxu0 0.0
  %1217 = vmatprep.mubr.f32.mxu0 0.0
  %1218 = vmatmul.mubr.f32.gmra.mrb[0].mxu0 %v1148
  %v1219 = vpop.f32.mrb[0].mxu0
  %v1220 = vadd.f32 %v1146, %v1219
  %v1221 = vpop.f32.mrb[0].mxu0
  %1222 = vmatprep.mubr.f32.mxu0 0.0
  %1223 = vmatmul.mubr.f32.gmra.mrb[0].mxu0 %v1151
  %v1224 = vpop.f32.mrb[0].mxu0
  %v1225 = vadd.f32 %v1146, %v1224
  %v1226 = vpop.f32.mrb[0].mxu0
  %1227 = vdwg.mxu0
  %v1228 = vld [vmem:[%s2 + $0x11] sm:$0x1]
  %v1229 = vlaneseq
  %v1230 = vshrl.u32 %v1229, 7
  %v1231 = vsub.s32 0, %v1230
  %v1232 = vrot.slane %v1228, %v1231
  %1233 = vmatprep.subr.mxu0 0.0
  %1234 = vmatpush1.msra.mxu0 %v1118
  %1235 = vmatprep.subr.mxu0 0.0
  %1236 = vmatpush1.msra.mxu0 %v1119
  %1237 = vmatprep.subr.mxu0 0.0
  %1238 = vmatpush1.msra.mxu0 %v1120
  %1239 = vmatprep.subr.mxu0 0.0
  %1240 = vmatpush1.msra.mxu0 %v1121
  %1241 = vmatprep.subr.mxu0 0.0
  %1242 = vmatpush1.msra.mxu0 0.0
  %1243 = vmatprep.subr.mxu0 0.0
  %1244 = vmatpush1.msra.mxu0 0.0
  %1245 = vmatprep.subr.mxu0 0.0
  %1246 = vmatpush1.msra.mxu0 0.0
  %1247 = vmatprep.subr.mxu0 0.0
  %1248 = vmatpush1.msra.mxu0 0.0
  %1249 = vmatprep.subr.mxu0 0.0
  %1250 = vmatpush1.msra.mxu0 0.0
  %1251 = vmatprep.subr.mxu0 0.0
  %1252 = vmatpush1.msra.mxu0 0.0
  %1253 = vmatprep.subr.mxu0 0.0
  %1254 = vmatpush1.msra.mxu0 0.0
  %1255 = vmatprep.subr.mxu0 0.0
  %1256 = vmatpush1.msra.mxu0 0.0
  %1257 = vmatprep.subr.mxu0 0.0
  %1258 = vmatpush1.msra.mxu0 0.0
  %1259 = vmatprep.subr.mxu0 0.0
  %1260 = vmatpush1.msra.mxu0 0.0
  %1261 = vmatprep.subr.mxu0 0.0
  %1262 = vmatpush1.msra.mxu0 0.0
  %1263 = vmatprep.subr.mxu0 0.0
  %1264 = vmatpush1.msra.mxu0 0.0
  %1265 = vmatprep.subr.mxu0 0.0
  %1266 = vmatpush1.msra.mxu0 0.0
  %1267 = vmatprep.subr.mxu0 0.0
  %1268 = vmatpush1.msra.mxu0 0.0
  %1269 = vmatprep.subr.mxu0 0.0
  %1270 = vmatpush1.msra.mxu0 0.0
  %1271 = vmatprep.subr.mxu0 0.0
  %1272 = vmatpush1.msra.mxu0 0.0
  %1273 = vmatprep.subr.mxu0 0.0
  %1274 = vmatpush1.msra.mxu0 0.0
  %1275 = vmatprep.subr.mxu0 0.0
  %1276 = vmatpush1.msra.mxu0 0.0
  %1277 = vmatprep.subr.mxu0 0.0
  %1278 = vmatpush1.msra.mxu0 0.0
  %1279 = vmatprep.subr.mxu0 0.0
  %1280 = vmatpush1.msra.mxu0 0.0
  %1281 = vmatprep.subr.mxu0 0.0
  %1282 = vmatpush1.msra.mxu0 0.0
  %1283 = vmatprep.subr.mxu0 0.0
  %1284 = vmatpush1.msra.mxu0 0.0
  %1285 = vmatprep.subr.mxu0 0.0
  %1286 = vmatpush1.msra.mxu0 0.0
  %1287 = vmatprep.subr.mxu0 0.0
  %1288 = vmatpush1.msra.mxu0 0.0
  %1289 = vmatprep.subr.mxu0 0.0
  %1290 = vmatpush1.msra.mxu0 0.0
  %1291 = vmatprep.subr.mxu0 0.0
  %1292 = vmatpush1.msra.mxu0 0.0
  %1293 = vmatprep.subr.mxu0 0.0
  %1294 = vmatpush1.msra.mxu0 0.0
  %1295 = vmatprep.subr.mxu0 0.0
  %1296 = vmatpush1.msra.mxu0 0.0
  %1297 = vmatprep.mubr.f32.mxu0 0.0
  %1298 = vmatmul.mubr.f32.gmra.mrb[0].mxu0 %v1148
  %v1299 = vpop.f32.mrb[0].mxu0
  %v1300 = vadd.f32 %v1232, %v1299
  %v1301 = vpop.f32.mrb[0].mxu0
  %1302 = vmatprep.mubr.f32.mxu0 0.0
  %1303 = vmatmul.mubr.f32.gmra.mrb[0].mxu0 %v1151
  %v1304 = vpop.f32.mrb[0].mxu0
  %v1305 = vadd.f32 %v1232, %v1304
  %v1306 = vpop.f32.mrb[0].mxu0
  %1307 = vdwg.mxu0
  %1308 = vmatprep.subr.mxu0 0.0
  %1309 = vmatpush1.msra.mxu0 %v1300
  %1310 = vmatprep.subr.mxu0 0.0
  %1311 = vmatpush1.msra.mxu0 %v1305
  %1312 = vmatprep.subr.mxu0 0.0
  %1313 = vmatpush1.msra.mxu0 0.0
  %1314 = vmatprep.subr.mxu0 0.0
  %1315 = vmatpush1.msra.mxu0 0.0
  %1316 = vmatprep.subr.mxu0 0.0
  %1317 = vmatpush1.msra.mxu0 0.0
  %1318 = vmatprep.subr.mxu0 0.0
  %1319 = vmatpush1.msra.mxu0 0.0
  %1320 = vmatprep.subr.mxu0 0.0
  %1321 = vmatpush1.msra.mxu0 0.0
  %1322 = vmatprep.subr.mxu0 0.0
  %1323 = vmatpush1.msra.mxu0 0.0
  %1324 = vmatprep.subr.mxu0 0.0
  %1325 = vmatpush1.msra.mxu0 0.0
  %1326 = vmatprep.subr.mxu0 0.0
  %1327 = vmatpush1.msra.mxu0 0.0
  %1328 = vmatprep.subr.mxu0 0.0
  %1329 = vmatpush1.msra.mxu0 0.0
  %1330 = vmatprep.subr.mxu0 0.0
  %1331 = vmatpush1.msra.mxu0 0.0
  %1332 = vmatprep.subr.mxu0 0.0
  %1333 = vmatpush1.msra.mxu0 0.0
  %1334 = vmatprep.subr.mxu0 0.0
  %1335 = vmatpush1.msra.mxu0 0.0
  %1336 = vmatprep.subr.mxu0 0.0
  %1337 = vmatpush1.msra.mxu0 0.0
  %1338 = vmatprep.subr.mxu0 0.0
  %1339 = vmatpush1.msra.mxu0 0.0
  %1340 = vmatprep.subr.mxu0 0.0
  %1341 = vmatpush1.msra.mxu0 0.0
  %1342 = vmatprep.subr.mxu0 0.0
  %1343 = vmatpush1.msra.mxu0 0.0
  %1344 = vmatprep.subr.mxu0 0.0
  %1345 = vmatpush1.msra.mxu0 0.0
  %1346 = vmatprep.subr.mxu0 0.0
  %1347 = vmatpush1.msra.mxu0 0.0
  %1348 = vmatprep.subr.mxu0 0.0
  %1349 = vmatpush1.msra.mxu0 0.0
  %1350 = vmatprep.subr.mxu0 0.0
  %1351 = vmatpush1.msra.mxu0 0.0
  %1352 = vmatprep.subr.mxu0 0.0
  %1353 = vmatpush1.msra.mxu0 0.0
  %1354 = vmatprep.subr.mxu0 0.0
  %1355 = vmatpush1.msra.mxu0 0.0
  %1356 = vmatprep.subr.mxu0 0.0
  %1357 = vmatpush1.msra.mxu0 0.0
  %1358 = vmatprep.subr.mxu0 0.0
  %1359 = vmatpush1.msra.mxu0 0.0
  %1360 = vmatprep.subr.mxu0 0.0
  %1361 = vmatpush1.msra.mxu0 0.0
  %1362 = vmatprep.subr.mxu0 0.0
  %1363 = vmatpush1.msra.mxu0 0.0
  %1364 = vmatprep.subr.mxu0 0.0
  %1365 = vmatpush1.msra.mxu0 0.0
  %1366 = vmatprep.subr.mxu0 0.0
  %1367 = vmatpush1.msra.mxu0 0.0
  %1368 = vmatprep.subr.mxu0 0.0
  %1369 = vmatpush1.msra.mxu0 0.0
  %1370 = vmatprep.subr.mxu0 0.0
  %1371 = vmatpush1.msra.mxu0 0.0
  %1372 = vmatprep.mubr.f32.mxu0 0.0
  %1373 = vmatmul.mubr.f32.gmra.mrb[0].mxu0 %v345
  %v1374 = vpop.f32.mrb[0].mxu0
  %v1375 = vadd.f32 0.0, %v1374
  %v1376 = vpop.f32.mrb[0].mxu0
  %1377 = vmatprep.mubr.f32.mxu0 0.0
  %1378 = vmatmul.mubr.f32.gmra.mrb[0].mxu0 %v348
  %v1379 = vpop.f32.mrb[0].mxu0
  %v1380 = vadd.f32 0.0, %v1379
  %v1381 = vpop.f32.mrb[0].mxu0
  %1382 = vmatprep.mubr.f32.mxu0 0.0
  %1383 = vmatmul.mubr.f32.gmra.mrb[0].mxu0 %v351
  %v1384 = vpop.f32.mrb[0].mxu0
  %v1385 = vadd.f32 0.0, %v1384
  %v1386 = vpop.f32.mrb[0].mxu0
  %1387 = vmatprep.mubr.f32.mxu0 0.0
  %1388 = vmatmul.mubr.f32.gmra.mrb[0].mxu0 %v354
  %v1389 = vpop.f32.mrb[0].mxu0
  %v1390 = vadd.f32 0.0, %v1389
  %v1391 = vpop.f32.mrb[0].mxu0
  %1392 = vmatprep.mubr.f32.mxu0 0.0
  %1393 = vmatmul.mubr.f32.gmra.mrb[0].mxu0 %v357
  %v1394 = vpop.f32.mrb[0].mxu0
  %v1395 = vadd.f32 0.0, %v1394
  %v1396 = vpop.f32.mrb[0].mxu0
  %1397 = vmatprep.mubr.f32.mxu0 0.0
  %1398 = vmatmul.mubr.f32.gmra.mrb[0].mxu0 %v360
  %v1399 = vpop.f32.mrb[0].mxu0
  %v1400 = vadd.f32 0.0, %v1399
  %v1401 = vpop.f32.mrb[0].mxu0
  %1402 = vmatprep.mubr.f32.mxu0 0.0
  %1403 = vmatmul.mubr.f32.gmra.mrb[0].mxu0 %v363
  %v1404 = vpop.f32.mrb[0].mxu0
  %v1405 = vadd.f32 0.0, %v1404
  %v1406 = vpop.f32.mrb[0].mxu0
  %1407 = vmatprep.mubr.f32.mxu0 0.0
  %1408 = vmatmul.mubr.f32.gmra.mrb[0].mxu0 %v366
  %v1409 = vpop.f32.mrb[0].mxu0
  %v1410 = vadd.f32 0.0, %v1409
  %v1411 = vpop.f32.mrb[0].mxu0
  %1412 = vdwg.mxu0
  %v1413 = vmul.f32 %v1375, %v150
  %v1414 = vmul.f32 %v1380, %v151
  %v1415 = vmul.f32 %v1385, %v152
  %v1416 = vmul.f32 %v1390, %v153
  %v1417 = vmul.f32 %v1395, %v154
  %v1418 = vmul.f32 %v1400, %v155
  %v1419 = vmul.f32 %v1405, %v156
  %v1420 = vmul.f32 %v1410, %v157
  %v1422 = vsel %vm181, %v1220, 0
  %v1425 = vsel %vm181, %v1225, 0
  %v1428 = vsel %vm181, %v1413, 0
  %v1431 = vsel %vm181, %v1414, 0
  %v1434 = vsel %vm181, %v1415, 0
  %v1437 = vsel %vm181, %v1416, 0
  %v1440 = vsel %vm181, %v1417, 0
  %v1443 = vsel %vm181, %v1418, 0
  %v1446 = vsel %vm181, %v1419, 0
  %v1449 = vsel %vm181, %v1420, 0
  %1451 = vmatprep.subr.mxu0 0.0
  %1452 = vmatpush1.xpose.msra.mxu0 %v1428
  %1453 = vmatprep.subr.mxu0 0.0
  %1454 = vmatpush1.xpose.msra.mxu0 %v1431
  %1455 = vmatprep.subr.mxu0 0.0
  %1456 = vmatpush1.xpose.msra.mxu0 %v1434
  %1457 = vmatprep.subr.mxu0 0.0
  %1458 = vmatpush1.xpose.msra.mxu0 %v1437
  %1459 = vmatprep.subr.mxu0 0.0
  %1460 = vmatpush1.xpose.msra.mxu0 %v1440
  %1461 = vmatprep.subr.mxu0 0.0
  %1462 = vmatpush1.xpose.msra.mxu0 %v1443
  %1463 = vmatprep.subr.mxu0 0.0
  %1464 = vmatpush1.xpose.msra.mxu0 %v1446
  %1465 = vmatprep.subr.mxu0 0.0
  %1466 = vmatpush1.xpose.msra.mxu0 %v1449
  %1467 = vmatprep.subr.mxu0 0.0
  %1468 = vmatpush1.xpose.msra.mxu0 0.0
  %1469 = vmatprep.subr.mxu0 0.0
  %1470 = vmatpush1.xpose.msra.mxu0 0.0
  %1471 = vmatprep.subr.mxu0 0.0
  %1472 = vmatpush1.xpose.msra.mxu0 0.0
  %1473 = vmatprep.subr.mxu0 0.0
  %1474 = vmatpush1.xpose.msra.mxu0 0.0
  %1475 = vmatprep.subr.mxu0 0.0
  %1476 = vmatpush1.xpose.msra.mxu0 0.0
  %1477 = vmatprep.subr.mxu0 0.0
  %1478 = vmatpush1.xpose.msra.mxu0 0.0
  %1479 = vmatprep.subr.mxu0 0.0
  %1480 = vmatpush1.xpose.msra.mxu0 0.0
  %1481 = vmatprep.subr.mxu0 0.0
  %1482 = vmatpush1.xpose.msra.mxu0 0.0
  %1483 = vmatprep.subr.mxu0 0.0
  %1484 = vmatpush1.xpose.msra.mxu0 0.0
  %1485 = vmatprep.subr.mxu0 0.0
  %1486 = vmatpush1.xpose.msra.mxu0 0.0
  %1487 = vmatprep.subr.mxu0 0.0
  %1488 = vmatpush1.xpose.msra.mxu0 0.0
  %1489 = vmatprep.subr.mxu0 0.0
  %1490 = vmatpush1.xpose.msra.mxu0 0.0
  %1491 = vmatprep.subr.mxu0 0.0
  %1492 = vmatpush1.xpose.msra.mxu0 0.0
  %1493 = vmatprep.subr.mxu0 0.0
  %1494 = vmatpush1.xpose.msra.mxu0 0.0
  %1495 = vmatprep.subr.mxu0 0.0
  %1496 = vmatpush1.xpose.msra.mxu0 0.0
  %1497 = vmatprep.subr.mxu0 0.0
  %1498 = vmatpush1.xpose.msra.mxu0 0.0
  %1499 = vmatprep.subr.mxu0 0.0
  %1500 = vmatpush1.xpose.msra.mxu0 0.0
  %1501 = vmatprep.subr.mxu0 0.0
  %1502 = vmatpush1.xpose.msra.mxu0 0.0
  %1503 = vmatprep.subr.mxu0 0.0
  %1504 = vmatpush1.xpose.msra.mxu0 0.0
  %1505 = vmatprep.subr.mxu0 0.0
  %1506 = vmatpush1.xpose.msra.mxu0 0.0
  %1507 = vmatprep.subr.mxu0 0.0
  %1508 = vmatpush1.xpose.msra.mxu0 0.0
  %1509 = vmatprep.subr.mxu0 0.0
  %1510 = vmatpush1.xpose.msra.mxu0 0.0
  %1511 = vmatprep.subr.mxu0 0.0
  %1512 = vmatpush1.xpose.msra.mxu0 0.0
  %1513 = vmatprep.subr.mxu0 0.0
  %1514 = vmatpush1.xpose.msra.mxu0 0.0
  %1515 = vmatprep.mubr.f32.mxu0 0.0
  %1516 = vmatmul.mubr.f32.gmra.mrb[0].mxu0 %v1422
  %v1517 = vpop.f32.mrb[0].mxu0
  %v1518 = vadd.f32 0.0, %v1517
  %v1519 = vpop.f32.mrb[0].mxu0
  %1520 = vmatprep.mubr.f32.mxu0 0.0
  %1521 = vmatmul.mubr.f32.gmra.mrb[0].mxu0 %v1425
  %v1522 = vpop.f32.mrb[0].mxu0
  %v1523 = vadd.f32 0.0, %v1522
  %v1524 = vpop.f32.mrb[0].mxu0
  %1525 = vdwg.mxu0
  %v1526 = vmul.f32 %v1518, 0.35355338
  %v1527 = vmul.f32 %v1523, 0.35355338
  %v1528 = vadd.f32 %v1526, %v166
  %v1529 = vadd.f32 %v1527, %v167
  %v1530 = vsel %vm40, %v1528, -inf
  %1531 = vmax.xlane.f32.xlu0 %v1530
  %v1532 = vpop.xlane.xlu0 %1531
  %v1533 = vsel %vm40, %v1529, -inf
  %1534 = vmax.xlane.f32.xlu0 %v1533
  %v1535 = vpop.xlane.xlu0 %1534
  %v1536 = vsub.f32 %v1528, %v1532
  %v1537 = vsub.f32 %v1529, %v1535
  %v1538 = vmul.f32 %v1536, 1.442695
  %v1539 = vpow.pop %v1538
  %v1540 = vmul.f32 %v1537, 1.442695
  %v1541 = vpow.pop %v1540
  %v1543 = vsel %vm40, %v1539, 0
  %v1546 = vsel %vm40, %v1541, 0
  %1548 = vmatprep.subr.mxu0 0.0
  %1549 = vmatpush1.msra.mxu0 %v158
  %1550 = vmatprep.subr.mxu0 0.0
  %1551 = vmatpush1.msra.mxu0 %v159
  %1552 = vmatprep.subr.mxu0 0.0
  %1553 = vmatpush1.msra.mxu0 %v160
  %1554 = vmatprep.subr.mxu0 0.0
  %1555 = vmatpush1.msra.mxu0 %v161
  %1556 = vmatprep.subr.mxu0 0.0
  %1557 = vmatpush1.msra.mxu0 %v162
  %1558 = vmatprep.subr.mxu0 0.0
  %1559 = vmatpush1.msra.mxu0 %v163
  %1560 = vmatprep.subr.mxu0 0.0
  %1561 = vmatpush1.msra.mxu0 %v164
  %1562 = vmatprep.subr.mxu0 0.0
  %1563 = vmatpush1.msra.mxu0 %v165
  %1564 = vmatprep.subr.mxu0 0.0
  %1565 = vmatpush1.msra.mxu0 0.0
  %1566 = vmatprep.subr.mxu0 0.0
  %1567 = vmatpush1.msra.mxu0 0.0
  %1568 = vmatprep.subr.mxu0 0.0
  %1569 = vmatpush1.msra.mxu0 0.0
  %1570 = vmatprep.subr.mxu0 0.0
  %1571 = vmatpush1.msra.mxu0 0.0
  %1572 = vmatprep.subr.mxu0 0.0
  %1573 = vmatpush1.msra.mxu0 0.0
  %1574 = vmatprep.subr.mxu0 0.0
  %1575 = vmatpush1.msra.mxu0 0.0
  %1576 = vmatprep.subr.mxu0 0.0
  %1577 = vmatpush1.msra.mxu0 0.0
  %1578 = vmatprep.subr.mxu0 0.0
  %1579 = vmatpush1.msra.mxu0 0.0
  %1580 = vmatprep.subr.mxu0 0.0
  %1581 = vmatpush1.msra.mxu0 0.0
  %1582 = vmatprep.subr.mxu0 0.0
  %1583 = vmatpush1.msra.mxu0 0.0
  %1584 = vmatprep.subr.mxu0 0.0
  %1585 = vmatpush1.msra.mxu0 0.0
  %1586 = vmatprep.subr.mxu0 0.0
  %1587 = vmatpush1.msra.mxu0 0.0
  %1588 = vmatprep.subr.mxu0 0.0
  %1589 = vmatpush1.msra.mxu0 0.0
  %1590 = vmatprep.subr.mxu0 0.0
  %1591 = vmatpush1.msra.mxu0 0.0
  %1592 = vmatprep.subr.mxu0 0.0
  %1593 = vmatpush1.msra.mxu0 0.0
  %1594 = vmatprep.subr.mxu0 0.0
  %1595 = vmatpush1.msra.mxu0 0.0
  %1596 = vmatprep.subr.mxu0 0.0
  %1597 = vmatpush1.msra.mxu0 0.0
  %1598 = vmatprep.subr.mxu0 0.0
  %1599 = vmatpush1.msra.mxu0 0.0
  %1600 = vmatprep.subr.mxu0 0.0
  %1601 = vmatpush1.msra.mxu0 0.0
  %1602 = vmatprep.subr.mxu0 0.0
  %1603 = vmatpush1.msra.mxu0 0.0
  %1604 = vmatprep.subr.mxu0 0.0
  %1605 = vmatpush1.msra.mxu0 0.0
  %1606 = vmatprep.subr.mxu0 0.0
  %1607 = vmatpush1.msra.mxu0 0.0
  %1608 = vmatprep.subr.mxu0 0.0
  %1609 = vmatpush1.msra.mxu0 0.0
  %1610 = vmatprep.subr.mxu0 0.0
  %1611 = vmatpush1.msra.mxu0 0.0
  %1612 = vmatprep.mubr.f32.mxu0 0.0
  %1613 = vmatmul.mubr.f32.gmra.mrb[0].mxu0 %v1543
  %v1614 = vpop.f32.mrb[0].mxu0
  %v1615 = vadd.f32 0.0, %v1614
  %v1616 = vpop.f32.mrb[0].mxu0
  %1617 = vmatprep.mubr.f32.mxu0 0.0
  %1618 = vmatmul.mubr.f32.gmra.mrb[0].mxu0 %v1546
  %v1619 = vpop.f32.mrb[0].mxu0
  %v1620 = vadd.f32 0.0, %v1619
  %v1621 = vpop.f32.mrb[0].mxu0
  %1622 = vdwg.mxu0
  %v1623 = vrcp.pop %v1615
  %v1624 = vrcp.pop %v1620
  %v1625 = vmul.f32 %v1539, %v1623
  %v1626 = vmul.f32 %v1541, %v1624
  %v1628 = vsel %vm40, %v1625, 0
  %v1631 = vsel %vm40, %v1626, 0
  %1633 = vmatprep.subr.mxu0 0.0
  %1634 = vmatpush1.msra.mxu0 %v1413
  %1635 = vmatprep.subr.mxu0 0.0
  %1636 = vmatpush1.msra.mxu0 %v1414
  %1637 = vmatprep.subr.mxu0 0.0
  %1638 = vmatpush1.msra.mxu0 %v1415
  %1639 = vmatprep.subr.mxu0 0.0
  %1640 = vmatpush1.msra.mxu0 %v1416
  %1641 = vmatprep.subr.mxu0 0.0
  %1642 = vmatpush1.msra.mxu0 %v1417
  %1643 = vmatprep.subr.mxu0 0.0
  %1644 = vmatpush1.msra.mxu0 %v1418
  %1645 = vmatprep.subr.mxu0 0.0
  %1646 = vmatpush1.msra.mxu0 %v1419
  %1647 = vmatprep.subr.mxu0 0.0
  %1648 = vmatpush1.msra.mxu0 %v1420
  %1649 = vmatprep.subr.mxu0 0.0
  %1650 = vmatpush1.msra.mxu0 0.0
  %1651 = vmatprep.subr.mxu0 0.0
  %1652 = vmatpush1.msra.mxu0 0.0
  %1653 = vmatprep.subr.mxu0 0.0
  %1654 = vmatpush1.msra.mxu0 0.0
  %1655 = vmatprep.subr.mxu0 0.0
  %1656 = vmatpush1.msra.mxu0 0.0
  %1657 = vmatprep.subr.mxu0 0.0
  %1658 = vmatpush1.msra.mxu0 0.0
  %1659 = vmatprep.subr.mxu0 0.0
  %1660 = vmatpush1.msra.mxu0 0.0
  %1661 = vmatprep.subr.mxu0 0.0
  %1662 = vmatpush1.msra.mxu0 0.0
  %1663 = vmatprep.subr.mxu0 0.0
  %1664 = vmatpush1.msra.mxu0 0.0
  %1665 = vmatprep.subr.mxu0 0.0
  %1666 = vmatpush1.msra.mxu0 0.0
  %1667 = vmatprep.subr.mxu0 0.0
  %1668 = vmatpush1.msra.mxu0 0.0
  %1669 = vmatprep.subr.mxu0 0.0
  %1670 = vmatpush1.msra.mxu0 0.0
  %1671 = vmatprep.subr.mxu0 0.0
  %1672 = vmatpush1.msra.mxu0 0.0
  %1673 = vmatprep.subr.mxu0 0.0
  %1674 = vmatpush1.msra.mxu0 0.0
  %1675 = vmatprep.subr.mxu0 0.0
  %1676 = vmatpush1.msra.mxu0 0.0
  %1677 = vmatprep.subr.mxu0 0.0
  %1678 = vmatpush1.msra.mxu0 0.0
  %1679 = vmatprep.subr.mxu0 0.0
  %1680 = vmatpush1.msra.mxu0 0.0
  %1681 = vmatprep.subr.mxu0 0.0
  %1682 = vmatpush1.msra.mxu0 0.0
  %1683 = vmatprep.subr.mxu0 0.0
  %1684 = vmatpush1.msra.mxu0 0.0
  %1685 = vmatprep.subr.mxu0 0.0
  %1686 = vmatpush1.msra.mxu0 0.0
  %1687 = vmatprep.subr.mxu0 0.0
  %1688 = vmatpush1.msra.mxu0 0.0
  %1689 = vmatprep.subr.mxu0 0.0
  %1690 = vmatpush1.msra.mxu0 0.0
  %1691 = vmatprep.subr.mxu0 0.0
  %1692 = vmatpush1.msra.mxu0 0.0
  %1693 = vmatprep.subr.mxu0 0.0
  %1694 = vmatpush1.msra.mxu0 0.0
  %1695 = vmatprep.subr.mxu0 0.0
  %1696 = vmatpush1.msra.mxu0 0.0
  %1697 = vmatprep.mubr.f32.mxu0 0.0
  %1698 = vmatmul.mubr.f32.gmra.mrb[0].mxu0 %v1628
  %v1699 = vpop.f32.mrb[0].mxu0
  %v1700 = vadd.f32 0.0, %v1699
  %v1701 = vpop.f32.mrb[0].mxu0
  %1702 = vmatprep.mubr.f32.mxu0 0.0
  %1703 = vmatmul.mubr.f32.gmra.mrb[0].mxu0 %v1631
  %v1704 = vpop.f32.mrb[0].mxu0
  %v1705 = vadd.f32 0.0, %v1704
  %v1706 = vpop.f32.mrb[0].mxu0
  %1707 = vdwg.mxu0
  %v1708 = vld [vmem:[%s2 + $0x12] sm:$0x1]
  %v1709 = vlaneseq
  %v1710 = vshrl.u32 %v1709, 7
  %v1711 = vsub.s32 0, %v1710
  %v1712 = vrot.slane %v1708, %v1711
  %v1714 = vsel %vm40, %v1700, 0
  %v1717 = vsel %vm40, %v1705, 0
  %1719 = vmatprep.subr.mxu0 0.0
  %1720 = vmatpush1.msra.mxu0 %v1122
  %1721 = vmatprep.subr.mxu0 0.0
  %1722 = vmatpush1.msra.mxu0 %v1123
  %1723 = vmatprep.subr.mxu0 0.0
  %1724 = vmatpush1.msra.mxu0 %v1124
  %1725 = vmatprep.subr.mxu0 0.0
  %1726 = vmatpush1.msra.mxu0 %v1125
  %1727 = vmatprep.subr.mxu0 0.0
  %1728 = vmatpush1.msra.mxu0 %v1126
  %1729 = vmatprep.subr.mxu0 0.0
  %1730 = vmatpush1.msra.mxu0 %v1127
  %1731 = vmatprep.subr.mxu0 0.0
  %1732 = vmatpush1.msra.mxu0 %v1128
  %1733 = vmatprep.subr.mxu0 0.0
  %1734 = vmatpush1.msra.mxu0 %v1129
  %1735 = vmatprep.subr.mxu0 0.0
  %1736 = vmatpush1.msra.mxu0 0.0
  %1737 = vmatprep.subr.mxu0 0.0
  %1738 = vmatpush1.msra.mxu0 0.0
  %1739 = vmatprep.subr.mxu0 0.0
  %1740 = vmatpush1.msra.mxu0 0.0
  %1741 = vmatprep.subr.mxu0 0.0
  %1742 = vmatpush1.msra.mxu0 0.0
  %1743 = vmatprep.subr.mxu0 0.0
  %1744 = vmatpush1.msra.mxu0 0.0
  %1745 = vmatprep.subr.mxu0 0.0
  %1746 = vmatpush1.msra.mxu0 0.0
  %1747 = vmatprep.subr.mxu0 0.0
  %1748 = vmatpush1.msra.mxu0 0.0
  %1749 = vmatprep.subr.mxu0 0.0
  %1750 = vmatpush1.msra.mxu0 0.0
  %1751 = vmatprep.subr.mxu0 0.0
  %1752 = vmatpush1.msra.mxu0 0.0
  %1753 = vmatprep.subr.mxu0 0.0
  %1754 = vmatpush1.msra.mxu0 0.0
  %1755 = vmatprep.subr.mxu0 0.0
  %1756 = vmatpush1.msra.mxu0 0.0
  %1757 = vmatprep.subr.mxu0 0.0
  %1758 = vmatpush1.msra.mxu0 0.0
  %1759 = vmatprep.subr.mxu0 0.0
  %1760 = vmatpush1.msra.mxu0 0.0
  %1761 = vmatprep.subr.mxu0 0.0
  %1762 = vmatpush1.msra.mxu0 0.0
  %1763 = vmatprep.subr.mxu0 0.0
  %1764 = vmatpush1.msra.mxu0 0.0
  %1765 = vmatprep.subr.mxu0 0.0
  %1766 = vmatpush1.msra.mxu0 0.0
  %1767 = vmatprep.subr.mxu0 0.0
  %1768 = vmatpush1.msra.mxu0 0.0
  %1769 = vmatprep.subr.mxu0 0.0
  %1770 = vmatpush1.msra.mxu0 0.0
  %1771 = vmatprep.subr.mxu0 0.0
  %1772 = vmatpush1.msra.mxu0 0.0
  %1773 = vmatprep.subr.mxu0 0.0
  %1774 = vmatpush1.msra.mxu0 0.0
  %1775 = vmatprep.subr.mxu0 0.0
  %1776 = vmatpush1.msra.mxu0 0.0
  %1777 = vmatprep.subr.mxu0 0.0
  %1778 = vmatpush1.msra.mxu0 0.0
  %1779 = vmatprep.subr.mxu0 0.0
  %1780 = vmatpush1.msra.mxu0 0.0
  %1781 = vmatprep.subr.mxu0 0.0
  %1782 = vmatpush1.msra.mxu0 0.0
  %1783 = vmatprep.mubr.f32.mxu0 0.0
  %1784 = vmatmul.mubr.f32.gmra.mrb[0].mxu0 %v1714
  %v1785 = vpop.f32.mrb[0].mxu0
  %v1786 = vadd.f32 %v1712, %v1785
  %v1787 = vpop.f32.mrb[0].mxu0
  %1788 = vmatprep.mubr.f32.mxu0 0.0
  %1789 = vmatmul.mubr.f32.gmra.mrb[0].mxu0 %v1717
  %v1790 = vpop.f32.mrb[0].mxu0
  %v1791 = vadd.f32 %v1712, %v1790
  %v1792 = vpop.f32.mrb[0].mxu0
  %1793 = vdwg.mxu0
  %v1794 = vadd.f32 %v1111, %v1786
  %v1795 = vadd.f32 %v1112, %v1791
  %v1796 = vld [vmem:[%s2 + $0x15] sm:$0x1]
  %v1797 = vld [vmem:[%s2 + $0x16] sm:$0x1]
  %v1798 = vsel %vm181, %v1794, 0.0
  %1799 = vadd.xlane.f32.xlu0 %v1798
  %v1800 = vpop.xlane.xlu0 %1799
  %v1801 = vsel %vm181, %v1795, 0.0
  %1802 = vadd.xlane.f32.xlu0 %v1801
  %v1803 = vpop.xlane.xlu0 %1802
  %v1804 = vmul.f32 %v1800, %v864
  %v1805 = vmul.f32 %v1803, %v864
  %v1806 = vsub.f32 %v1794, %v1804
  %v1807 = vsub.f32 %v1795, %v1805
  %v1808 = vmul.f32 %v1806, %v1806
  %v1809 = vmul.f32 %v1807, %v1807
  %v1810 = vsel %vm181, %v1808, 0.0
  %1811 = vadd.xlane.f32.xlu0 %v1810
  %v1812 = vpop.xlane.xlu0 %1811
  %v1813 = vsel %vm181, %v1809, 0.0
  %1814 = vadd.xlane.f32.xlu0 %v1813
  %v1815 = vpop.xlane.xlu0 %1814
  %v1816 = vmul.f32 %v1812, %v864
  %v1817 = vmul.f32 %v1815, %v864
  %v1818 = vadd.f32 %v1816, 1e-05
  %v1819 = vadd.f32 %v1817, 1e-05
  %v1820 = vrsqrt.pop %v1818
  %v1821 = vrsqrt.pop %v1819
  %v1822 = vmul.f32 %v1806, %v1820
  %v1823 = vmul.f32 %v1807, %v1821
  %v1824 = vlaneseq
  %v1825 = vshrl.u32 %v1824, 7
  %v1826 = vsub.s32 0, %v1825
  %v1827 = vrot.slane %v1796, %v1826
  %v1828 = vmul.f32 %v1822, %v1827
  %v1829 = vmul.f32 %v1823, %v1827
  %v1830 = vlaneseq
  %v1831 = vshrl.u32 %v1830, 7
  %v1832 = vsub.s32 0, %v1831
  %v1833 = vrot.slane %v1797, %v1832
  %v1834 = vadd.f32 %v1828, %v1833
  %v1835 = vadd.f32 %v1829, %v1833
  %v1836 = vld [vmem:[%s2 + $0x13] sm:$0x1]
  %v1837 = vlaneseq
  %v1838 = vshrl.u32 %v1837, 7
  %v1839 = vsub.s32 0, %v1838
  %v1840 = vrot.slane %v1836, %v1839
  %v1842 = vsel %vm181, %v1834, 0
  %v1845 = vsel %vm181, %v1835, 0
  %1847 = vmatprep.subr.mxu0 0.0
  %1848 = vmatpush1.msra.mxu0 %v1130
  %1849 = vmatprep.subr.mxu0 0.0
  %1850 = vmatpush1.msra.mxu0 %v1131
  %1851 = vmatprep.subr.mxu0 0.0
  %1852 = vmatpush1.msra.mxu0 %v1132
  %1853 = vmatprep.subr.mxu0 0.0
  %1854 = vmatpush1.msra.mxu0 %v1133
  %1855 = vmatprep.subr.mxu0 0.0
  %1856 = vmatpush1.msra.mxu0 0.0
  %1857 = vmatprep.subr.mxu0 0.0
  %1858 = vmatpush1.msra.mxu0 0.0
  %1859 = vmatprep.subr.mxu0 0.0
  %1860 = vmatpush1.msra.mxu0 0.0
  %1861 = vmatprep.subr.mxu0 0.0
  %1862 = vmatpush1.msra.mxu0 0.0
  %1863 = vmatprep.subr.mxu0 0.0
  %1864 = vmatpush1.msra.mxu0 0.0
  %1865 = vmatprep.subr.mxu0 0.0
  %1866 = vmatpush1.msra.mxu0 0.0
  %1867 = vmatprep.subr.mxu0 0.0
  %1868 = vmatpush1.msra.mxu0 0.0
  %1869 = vmatprep.subr.mxu0 0.0
  %1870 = vmatpush1.msra.mxu0 0.0
  %1871 = vmatprep.subr.mxu0 0.0
  %1872 = vmatpush1.msra.mxu0 0.0
  %1873 = vmatprep.subr.mxu0 0.0
  %1874 = vmatpush1.msra.mxu0 0.0
  %1875 = vmatprep.subr.mxu0 0.0
  %1876 = vmatpush1.msra.mxu0 0.0
  %1877 = vmatprep.subr.mxu0 0.0
  %1878 = vmatpush1.msra.mxu0 0.0
  %1879 = vmatprep.subr.mxu0 0.0
  %1880 = vmatpush1.msra.mxu0 0.0
  %1881 = vmatprep.subr.mxu0 0.0
  %1882 = vmatpush1.msra.mxu0 0.0
  %1883 = vmatprep.subr.mxu0 0.0
  %1884 = vmatpush1.msra.mxu0 0.0
  %1885 = vmatprep.subr.mxu0 0.0
  %1886 = vmatpush1.msra.mxu0 0.0
  %1887 = vmatprep.subr.mxu0 0.0
  %1888 = vmatpush1.msra.mxu0 0.0
  %1889 = vmatprep.subr.mxu0 0.0
  %1890 = vmatpush1.msra.mxu0 0.0
  %1891 = vmatprep.subr.mxu0 0.0
  %1892 = vmatpush1.msra.mxu0 0.0
  %1893 = vmatprep.subr.mxu0 0.0
  %1894 = vmatpush1.msra.mxu0 0.0
  %1895 = vmatprep.subr.mxu0 0.0
  %1896 = vmatpush1.msra.mxu0 0.0
  %1897 = vmatprep.subr.mxu0 0.0
  %1898 = vmatpush1.msra.mxu0 0.0
  %1899 = vmatprep.subr.mxu0 0.0
  %1900 = vmatpush1.msra.mxu0 0.0
  %1901 = vmatprep.subr.mxu0 0.0
  %1902 = vmatpush1.msra.mxu0 0.0
  %1903 = vmatprep.subr.mxu0 0.0
  %1904 = vmatpush1.msra.mxu0 0.0
  %1905 = vmatprep.subr.mxu0 0.0
  %1906 = vmatpush1.msra.mxu0 0.0
  %1907 = vmatprep.subr.mxu0 0.0
  %1908 = vmatpush1.msra.mxu0 0.0
  %1909 = vmatprep.subr.mxu0 0.0
  %1910 = vmatpush1.msra.mxu0 0.0
  %1911 = vmatprep.mubr.f32.mxu0 0.0
  %1912 = vmatmul.mubr.f32.gmra.mrb[0].mxu0 %v1842
  %v1913 = vpop.f32.mrb[0].mxu0
  %v1914 = vadd.f32 %v1840, %v1913
  %v1915 = vpop.f32.mrb[0].mxu0
  %1916 = vmatprep.mubr.f32.mxu0 0.0
  %1917 = vmatmul.mubr.f32.gmra.mrb[0].mxu0 %v1845
  %v1918 = vpop.f32.mrb[0].mxu0
  %v1919 = vadd.f32 %v1840, %v1918
  %v1920 = vpop.f32.mrb[0].mxu0
  %1921 = vdwg.mxu0
  %v1922 = vmax.f32 %v1914, 0.0
  %v1923 = vmax.f32 %v1919, 0.0
  %v1924 = vld [vmem:[%s2 + $0x14] sm:$0x1]
  %v1925 = vlaneseq
  %v1926 = vshrl.u32 %v1925, 7
  %v1927 = vsub.s32 0, %v1926
  %v1928 = vrot.slane %v1924, %v1927
  %v1930 = vsel %vm40, %v1922, 0
  %v1933 = vsel %vm40, %v1923, 0
  %1935 = vmatprep.subr.mxu0 0.0
  %1936 = vmatpush1.msra.mxu0 %v1134
  %1937 = vmatprep.subr.mxu0 0.0
  %1938 = vmatpush1.msra.mxu0 %v1135
  %1939 = vmatprep.subr.mxu0 0.0
  %1940 = vmatpush1.msra.mxu0 %v1136
  %1941 = vmatprep.subr.mxu0 0.0
  %1942 = vmatpush1.msra.mxu0 %v1137
  %1943 = vmatprep.subr.mxu0 0.0
  %1944 = vmatpush1.msra.mxu0 %v1138
  %1945 = vmatprep.subr.mxu0 0.0
  %1946 = vmatpush1.msra.mxu0 %v1139
  %1947 = vmatprep.subr.mxu0 0.0
  %1948 = vmatpush1.msra.mxu0 %v1140
  %1949 = vmatprep.subr.mxu0 0.0
  %1950 = vmatpush1.msra.mxu0 %v1141
  %1951 = vmatprep.subr.mxu0 0.0
  %1952 = vmatpush1.msra.mxu0 0.0
  %1953 = vmatprep.subr.mxu0 0.0
  %1954 = vmatpush1.msra.mxu0 0.0
  %1955 = vmatprep.subr.mxu0 0.0
  %1956 = vmatpush1.msra.mxu0 0.0
  %1957 = vmatprep.subr.mxu0 0.0
  %1958 = vmatpush1.msra.mxu0 0.0
  %1959 = vmatprep.subr.mxu0 0.0
  %1960 = vmatpush1.msra.mxu0 0.0
  %1961 = vmatprep.subr.mxu0 0.0
  %1962 = vmatpush1.msra.mxu0 0.0
  %1963 = vmatprep.subr.mxu0 0.0
  %1964 = vmatpush1.msra.mxu0 0.0
  %1965 = vmatprep.subr.mxu0 0.0
  %1966 = vmatpush1.msra.mxu0 0.0
  %1967 = vmatprep.subr.mxu0 0.0
  %1968 = vmatpush1.msra.mxu0 0.0
  %1969 = vmatprep.subr.mxu0 0.0
  %1970 = vmatpush1.msra.mxu0 0.0
  %1971 = vmatprep.subr.mxu0 0.0
  %1972 = vmatpush1.msra.mxu0 0.0
  %1973 = vmatprep.subr.mxu0 0.0
  %1974 = vmatpush1.msra.mxu0 0.0
  %1975 = vmatprep.subr.mxu0 0.0
  %1976 = vmatpush1.msra.mxu0 0.0
  %1977 = vmatprep.subr.mxu0 0.0
  %1978 = vmatpush1.msra.mxu0 0.0
  %1979 = vmatprep.subr.mxu0 0.0
  %1980 = vmatpush1.msra.mxu0 0.0
  %1981 = vmatprep.subr.mxu0 0.0
  %1982 = vmatpush1.msra.mxu0 0.0
  %1983 = vmatprep.subr.mxu0 0.0
  %1984 = vmatpush1.msra.mxu0 0.0
  %1985 = vmatprep.subr.mxu0 0.0
  %1986 = vmatpush1.msra.mxu0 0.0
  %1987 = vmatprep.subr.mxu0 0.0
  %1988 = vmatpush1.msra.mxu0 0.0
  %1989 = vmatprep.subr.mxu0 0.0
  %1990 = vmatpush1.msra.mxu0 0.0
  %1991 = vmatprep.subr.mxu0 0.0
  %1992 = vmatpush1.msra.mxu0 0.0
  %1993 = vmatprep.subr.mxu0 0.0
  %1994 = vmatpush1.msra.mxu0 0.0
  %1995 = vmatprep.subr.mxu0 0.0
  %1996 = vmatpush1.msra.mxu0 0.0
  %1997 = vmatprep.subr.mxu0 0.0
  %1998 = vmatpush1.msra.mxu0 0.0
  %1999 = vmatprep.mubr.f32.mxu0 0.0
  %2000 = vmatmul.mubr.f32.gmra.mrb[0].mxu0 %v1930
  %v2001 = vpop.f32.mrb[0].mxu0
  %v2002 = vadd.f32 %v1928, %v2001
  %v2003 = vpop.f32.mrb[0].mxu0
  %2004 = vmatprep.mubr.f32.mxu0 0.0
  %2005 = vmatmul.mubr.f32.gmra.mrb[0].mxu0 %v1933
  %v2006 = vpop.f32.mrb[0].mxu0
  %v2007 = vadd.f32 %v1928, %v2006
  %v2008 = vpop.f32.mrb[0].mxu0
  %2009 = vdwg.mxu0
  %v2010 = vadd.f32 %v1834, %v2002
  %v2011 = vadd.f32 %v1835, %v2007
  %v2012 = vld [vmem:[%s2 + $0x17] sm:$0x1]
  %v2013 = vld [vmem:[%s2 + $0x18] sm:$0x1]
  %v2014 = vsel %vm181, %v2010, 0.0
  %2015 = vadd.xlane.f32.xlu0 %v2014
  %v2016 = vpop.xlane.xlu0 %2015
  %v2017 = vsel %vm181, %v2011, 0.0
  %2018 = vadd.xlane.f32.xlu0 %v2017
  %v2019 = vpop.xlane.xlu0 %2018
  %v2020 = vmul.f32 %v2016, %v864
  %v2021 = vmul.f32 %v2019, %v864
  %v2022 = vsub.f32 %v2010, %v2020
  %v2023 = vsub.f32 %v2011, %v2021
  %v2024 = vmul.f32 %v2022, %v2022
  %v2025 = vmul.f32 %v2023, %v2023
  %v2026 = vsel %vm181, %v2024, 0.0
  %2027 = vadd.xlane.f32.xlu0 %v2026
  %v2028 = vpop.xlane.xlu0 %2027
  %v2029 = vsel %vm181, %v2025, 0.0
  %2030 = vadd.xlane.f32.xlu0 %v2029
  %v2031 = vpop.xlane.xlu0 %2030
  %v2032 = vmul.f32 %v2028, %v864
  %v2033 = vmul.f32 %v2031, %v864
  %v2034 = vadd.f32 %v2032, 1e-05
  %v2035 = vadd.f32 %v2033, 1e-05
  %v2036 = vrsqrt.pop %v2034
  %v2037 = vrsqrt.pop %v2035
  %v2038 = vmul.f32 %v2022, %v2036
  %v2039 = vmul.f32 %v2023, %v2037
  %v2040 = vlaneseq
  %v2041 = vshrl.u32 %v2040, 7
  %v2042 = vsub.s32 0, %v2041
  %v2043 = vrot.slane %v2012, %v2042
  %v2044 = vmul.f32 %v2038, %v2043
  %v2045 = vmul.f32 %v2039, %v2043
  %v2046 = vlaneseq
  %v2047 = vshrl.u32 %v2046, 7
  %v2048 = vsub.s32 0, %v2047
  %v2049 = vrot.slane %v2013, %v2048
  %v2050 = vadd.f32 %v2044, %v2049
  %v2051 = vadd.f32 %v2045, %v2049
  %s2052 = scalar_lea.vmem %s1, 448
  %v2053 = vld [vmem:[%s2052] sm:$0xff]
  %v2054 = vld [vmem:[%s2052 + $0x8] sm:$0xff]
  %v2055 = vld [vmem:[%s2052 + $0x10] sm:$0xff]
  %v2056 = vld [vmem:[%s2052 + $0x18] sm:$0xff]
  %v2057 = vld [vmem:[%s2052 + $0x20] sm:$0xff]
  %v2058 = vld [vmem:[%s2052 + $0x28] sm:$0xff]
  %v2059 = vld [vmem:[%s2052 + $0x30] sm:$0xff]
  %v2060 = vld [vmem:[%s2052 + $0x38] sm:$0xff]
  %v2061 = vld [vmem:[%s2052 + $0x40] sm:$0xff]
  %v2062 = vld [vmem:[%s2052 + $0x48] sm:$0xff]
  %v2063 = vld [vmem:[%s2052 + $0x50] sm:$0xff]
  %v2064 = vld [vmem:[%s2052 + $0x58] sm:$0xff]
  %v2065 = vld [vmem:[%s2052 + $0x60] sm:$0xff]
  %v2066 = vld [vmem:[%s2052 + $0x68] sm:$0xff]
  %v2067 = vld [vmem:[%s2052 + $0x70] sm:$0xff]
  %v2068 = vld [vmem:[%s2052 + $0x78] sm:$0xff]
  %v2069 = vld [vmem:[%s2052 + $0x80] sm:$0xff]
  %v2070 = vld [vmem:[%s2052 + $0x88] sm:$0xff]
  %v2071 = vld [vmem:[%s2052 + $0x90] sm:$0xff]
  %v2072 = vld [vmem:[%s2052 + $0x98] sm:$0xff]
  %v2073 = vld [vmem:[%s2052 + $0xa0] sm:$0xff]
  %v2074 = vld [vmem:[%s2052 + $0xa8] sm:$0xff]
  %v2075 = vld [vmem:[%s2052 + $0xb0] sm:$0xff]
  %v2076 = vld [vmem:[%s2052 + $0xb8] sm:$0xff]
  %v2077 = vld [vmem:[%s2052 + $0xc0] sm:$0xff]
  %v2078 = vld [vmem:[%s2052 + $0xc8] sm:$0xff]
  %v2079 = vld [vmem:[%s2052 + $0xd0] sm:$0xff]
  %v2080 = vld [vmem:[%s2052 + $0xd8] sm:$0xff]
  %v2081 = vld [vmem:[%s2 + $0x20] sm:$0x1]
  %v2082 = vlaneseq
  %v2083 = vshrl.u32 %v2082, 7
  %v2084 = vsub.s32 0, %v2083
  %v2085 = vrot.slane %v2081, %v2084
  %v2087 = vsel %vm181, %v2050, 0
  %v2090 = vsel %vm181, %v2051, 0
  %2092 = vmatprep.subr.mxu0 0.0
  %2093 = vmatpush1.msra.mxu0 %v2053
  %2094 = vmatprep.subr.mxu0 0.0
  %2095 = vmatpush1.msra.mxu0 %v2054
  %2096 = vmatprep.subr.mxu0 0.0
  %2097 = vmatpush1.msra.mxu0 %v2055
  %2098 = vmatprep.subr.mxu0 0.0
  %2099 = vmatpush1.msra.mxu0 %v2056
  %2100 = vmatprep.subr.mxu0 0.0
  %2101 = vmatpush1.msra.mxu0 0.0
  %2102 = vmatprep.subr.mxu0 0.0
  %2103 = vmatpush1.msra.mxu0 0.0
  %2104 = vmatprep.subr.mxu0 0.0
  %2105 = vmatpush1.msra.mxu0 0.0
  %2106 = vmatprep.subr.mxu0 0.0
  %2107 = vmatpush1.msra.mxu0 0.0
  %2108 = vmatprep.subr.mxu0 0.0
  %2109 = vmatpush1.msra.mxu0 0.0
  %2110 = vmatprep.subr.mxu0 0.0
  %2111 = vmatpush1.msra.mxu0 0.0
  %2112 = vmatprep.subr.mxu0 0.0
  %2113 = vmatpush1.msra.mxu0 0.0
  %2114 = vmatprep.subr.mxu0 0.0
  %2115 = vmatpush1.msra.mxu0 0.0
  %2116 = vmatprep.subr.mxu0 0.0
  %2117 = vmatpush1.msra.mxu0 0.0
  %2118 = vmatprep.subr.mxu0 0.0
  %2119 = vmatpush1.msra.mxu0 0.0
  %2120 = vmatprep.subr.mxu0 0.0
  %2121 = vmatpush1.msra.mxu0 0.0
  %2122 = vmatprep.subr.mxu0 0.0
  %2123 = vmatpush1.msra.mxu0 0.0
  %2124 = vmatprep.subr.mxu0 0.0
  %2125 = vmatpush1.msra.mxu0 0.0
  %2126 = vmatprep.subr.mxu0 0.0
  %2127 = vmatpush1.msra.mxu0 0.0
  %2128 = vmatprep.subr.mxu0 0.0
  %2129 = vmatpush1.msra.mxu0 0.0
  %2130 = vmatprep.subr.mxu0 0.0
  %2131 = vmatpush1.msra.mxu0 0.0
  %2132 = vmatprep.subr.mxu0 0.0
  %2133 = vmatpush1.msra.mxu0 0.0
  %2134 = vmatprep.subr.mxu0 0.0
  %2135 = vmatpush1.msra.mxu0 0.0
  %2136 = vmatprep.subr.mxu0 0.0
  %2137 = vmatpush1.msra.mxu0 0.0
  %2138 = vmatprep.subr.mxu0 0.0
  %2139 = vmatpush1.msra.mxu0 0.0
  %2140 = vmatprep.subr.mxu0 0.0
  %2141 = vmatpush1.msra.mxu0 0.0
  %2142 = vmatprep.subr.mxu0 0.0
  %2143 = vmatpush1.msra.mxu0 0.0
  %2144 = vmatprep.subr.mxu0 0.0
  %2145 = vmatpush1.msra.mxu0 0.0
  %2146 = vmatprep.subr.mxu0 0.0
  %2147 = vmatpush1.msra.mxu0 0.0
  %2148 = vmatprep.subr.mxu0 0.0
  %2149 = vmatpush1.msra.mxu0 0.0
  %2150 = vmatprep.subr.mxu0 0.0
  %2151 = vmatpush1.msra.mxu0 0.0
  %2152 = vmatprep.subr.mxu0 0.0
  %2153 = vmatpush1.msra.mxu0 0.0
  %2154 = vmatprep.subr.mxu0 0.0
  %2155 = vmatpush1.msra.mxu0 0.0
  %2156 = vmatprep.mubr.f32.mxu0 0.0
  %2157 = vmatmul.mubr.f32.gmra.mrb[0].mxu0 %v2087
  %v2158 = vpop.f32.mrb[0].mxu0
  %v2159 = vadd.f32 %v2085, %v2158
  %v2160 = vpop.f32.mrb[0].mxu0
  %2161 = vmatprep.mubr.f32.mxu0 0.0
  %2162 = vmatmul.mubr.f32.gmra.mrb[0].mxu0 %v2090
  %v2163 = vpop.f32.mrb[0].mxu0
  %v2164 = vadd.f32 %v2085, %v2163
  %v2165 = vpop.f32.mrb[0].mxu0
  %2166 = vdwg.mxu0
  %v2167 = vld [vmem:[%s2 + $0x21] sm:$0x1]
  %v2168 = vlaneseq
  %v2169 = vshrl.u32 %v2168, 7
  %v2170 = vsub.s32 0, %v2169
  %v2171 = vrot.slane %v2167, %v2170
  %2172 = vmatprep.subr.mxu0 0.0
  %2173 = vmatpush1.msra.mxu0 %v2057
  %2174 = vmatprep.subr.mxu0 0.0
  %2175 = vmatpush1.msra.mxu0 %v2058
  %2176 = vmatprep.subr.mxu0 0.0
  %2177 = vmatpush1.msra.mxu0 %v2059
  %2178 = vmatprep.subr.mxu0 0.0
  %2179 = vmatpush1.msra.mxu0 %v2060
  %2180 = vmatprep.subr.mxu0 0.0
  %2181 = vmatpush1.msra.mxu0 0.0
  %2182 = vmatprep.subr.mxu0 0.0
  %2183 = vmatpush1.msra.mxu0 0.0
  %2184 = vmatprep.subr.mxu0 0.0
  %2185 = vmatpush1.msra.mxu0 0.0
  %2186 = vmatprep.subr.mxu0 0.0
  %2187 = vmatpush1.msra.mxu0 0.0
  %2188 = vmatprep.subr.mxu0 0.0
  %2189 = vmatpush1.msra.mxu0 0.0
  %2190 = vmatprep.subr.mxu0 0.0
  %2191 = vmatpush1.msra.mxu0 0.0
  %2192 = vmatprep.subr.mxu0 0.0
  %2193 = vmatpush1.msra.mxu0 0.0
  %2194 = vmatprep.subr.mxu0 0.0
  %2195 = vmatpush1.msra.mxu0 0.0
  %2196 = vmatprep.subr.mxu0 0.0
  %2197 = vmatpush1.msra.mxu0 0.0
  %2198 = vmatprep.subr.mxu0 0.0
  %2199 = vmatpush1.msra.mxu0 0.0
  %2200 = vmatprep.subr.mxu0 0.0
  %2201 = vmatpush1.msra.mxu0 0.0
  %2202 = vmatprep.subr.mxu0 0.0
  %2203 = vmatpush1.msra.mxu0 0.0
  %2204 = vmatprep.subr.mxu0 0.0
  %2205 = vmatpush1.msra.mxu0 0.0
  %2206 = vmatprep.subr.mxu0 0.0
  %2207 = vmatpush1.msra.mxu0 0.0
  %2208 = vmatprep.subr.mxu0 0.0
  %2209 = vmatpush1.msra.mxu0 0.0
  %2210 = vmatprep.subr.mxu0 0.0
  %2211 = vmatpush1.msra.mxu0 0.0
  %2212 = vmatprep.subr.mxu0 0.0
  %2213 = vmatpush1.msra.mxu0 0.0
  %2214 = vmatprep.subr.mxu0 0.0
  %2215 = vmatpush1.msra.mxu0 0.0
  %2216 = vmatprep.subr.mxu0 0.0
  %2217 = vmatpush1.msra.mxu0 0.0
  %2218 = vmatprep.subr.mxu0 0.0
  %2219 = vmatpush1.msra.mxu0 0.0
  %2220 = vmatprep.subr.mxu0 0.0
  %2221 = vmatpush1.msra.mxu0 0.0
  %2222 = vmatprep.subr.mxu0 0.0
  %2223 = vmatpush1.msra.mxu0 0.0
  %2224 = vmatprep.subr.mxu0 0.0
  %2225 = vmatpush1.msra.mxu0 0.0
  %2226 = vmatprep.subr.mxu0 0.0
  %2227 = vmatpush1.msra.mxu0 0.0
  %2228 = vmatprep.subr.mxu0 0.0
  %2229 = vmatpush1.msra.mxu0 0.0
  %2230 = vmatprep.subr.mxu0 0.0
  %2231 = vmatpush1.msra.mxu0 0.0
  %2232 = vmatprep.subr.mxu0 0.0
  %2233 = vmatpush1.msra.mxu0 0.0
  %2234 = vmatprep.subr.mxu0 0.0
  %2235 = vmatpush1.msra.mxu0 0.0
  %2236 = vmatprep.mubr.f32.mxu0 0.0
  %2237 = vmatmul.mubr.f32.gmra.mrb[0].mxu0 %v2087
  %v2238 = vpop.f32.mrb[0].mxu0
  %v2239 = vadd.f32 %v2171, %v2238
  %v2240 = vpop.f32.mrb[0].mxu0
  %2241 = vmatprep.mubr.f32.mxu0 0.0
  %2242 = vmatmul.mubr.f32.gmra.mrb[0].mxu0 %v2090
  %v2243 = vpop.f32.mrb[0].mxu0
  %v2244 = vadd.f32 %v2171, %v2243
  %v2245 = vpop.f32.mrb[0].mxu0
  %2246 = vdwg.mxu0
  %2247 = vmatprep.subr.mxu0 0.0
  %2248 = vmatpush1.msra.mxu0 %v2239
  %2249 = vmatprep.subr.mxu0 0.0
  %2250 = vmatpush1.msra.mxu0 %v2244
  %2251 = vmatprep.subr.mxu0 0.0
  %2252 = vmatpush1.msra.mxu0 0.0
  %2253 = vmatprep.subr.mxu0 0.0
  %2254 = vmatpush1.msra.mxu0 0.0
  %2255 = vmatprep.subr.mxu0 0.0
  %2256 = vmatpush1.msra.mxu0 0.0
  %2257 = vmatprep.subr.mxu0 0.0
  %2258 = vmatpush1.msra.mxu0 0.0
  %2259 = vmatprep.subr.mxu0 0.0
  %2260 = vmatpush1.msra.mxu0 0.0
  %2261 = vmatprep.subr.mxu0 0.0
  %2262 = vmatpush1.msra.mxu0 0.0
  %2263 = vmatprep.subr.mxu0 0.0
  %2264 = vmatpush1.msra.mxu0 0.0
  %2265 = vmatprep.subr.mxu0 0.0
  %2266 = vmatpush1.msra.mxu0 0.0
  %2267 = vmatprep.subr.mxu0 0.0
  %2268 = vmatpush1.msra.mxu0 0.0
  %2269 = vmatprep.subr.mxu0 0.0
  %2270 = vmatpush1.msra.mxu0 0.0
  %2271 = vmatprep.subr.mxu0 0.0
  %2272 = vmatpush1.msra.mxu0 0.0
  %2273 = vmatprep.subr.mxu0 0.0
  %2274 = vmatpush1.msra.mxu0 0.0
  %2275 = vmatprep.subr.mxu0 0.0
  %2276 = vmatpush1.msra.mxu0 0.0
  %2277 = vmatprep.subr.mxu0 0.0
  %2278 = vmatpush1.msra.mxu0 0.0
  %2279 = vmatprep.subr.mxu0 0.0
  %2280 = vmatpush1.msra.mxu0 0.0
  %2281 = vmatprep.subr.mxu0 0.0
  %2282 = vmatpush1.msra.mxu0 0.0
  %2283 = vmatprep.subr.mxu0 0.0
  %2284 = vmatpush1.msra.mxu0 0.0
  %2285 = vmatprep.subr.mxu0 0.0
  %2286 = vmatpush1.msra.mxu0 0.0
  %2287 = vmatprep.subr.mxu0 0.0
  %2288 = vmatpush1.msra.mxu0 0.0
  %2289 = vmatprep.subr.mxu0 0.0
  %2290 = vmatpush1.msra.mxu0 0.0
  %2291 = vmatprep.subr.mxu0 0.0
  %2292 = vmatpush1.msra.mxu0 0.0
  %2293 = vmatprep.subr.mxu0 0.0
  %2294 = vmatpush1.msra.mxu0 0.0
  %2295 = vmatprep.subr.mxu0 0.0
  %2296 = vmatpush1.msra.mxu0 0.0
  %2297 = vmatprep.subr.mxu0 0.0
  %2298 = vmatpush1.msra.mxu0 0.0
  %2299 = vmatprep.subr.mxu0 0.0
  %2300 = vmatpush1.msra.mxu0 0.0
  %2301 = vmatprep.subr.mxu0 0.0
  %2302 = vmatpush1.msra.mxu0 0.0
  %2303 = vmatprep.subr.mxu0 0.0
  %2304 = vmatpush1.msra.mxu0 0.0
  %2305 = vmatprep.subr.mxu0 0.0
  %2306 = vmatpush1.msra.mxu0 0.0
  %2307 = vmatprep.subr.mxu0 0.0
  %2308 = vmatpush1.msra.mxu0 0.0
  %2309 = vmatprep.subr.mxu0 0.0
  %2310 = vmatpush1.msra.mxu0 0.0
  %2311 = vmatprep.mubr.f32.mxu0 0.0
  %2312 = vmatmul.mubr.f32.gmra.mrb[0].mxu0 %v345
  %v2313 = vpop.f32.mrb[0].mxu0
  %v2314 = vadd.f32 0.0, %v2313
  %v2315 = vpop.f32.mrb[0].mxu0
  %2316 = vmatprep.mubr.f32.mxu0 0.0
  %2317 = vmatmul.mubr.f32.gmra.mrb[0].mxu0 %v348
  %v2318 = vpop.f32.mrb[0].mxu0
  %v2319 = vadd.f32 0.0, %v2318
  %v2320 = vpop.f32.mrb[0].mxu0
  %2321 = vmatprep.mubr.f32.mxu0 0.0
  %2322 = vmatmul.mubr.f32.gmra.mrb[0].mxu0 %v351
  %v2323 = vpop.f32.mrb[0].mxu0
  %v2324 = vadd.f32 0.0, %v2323
  %v2325 = vpop.f32.mrb[0].mxu0
  %2326 = vmatprep.mubr.f32.mxu0 0.0
  %2327 = vmatmul.mubr.f32.gmra.mrb[0].mxu0 %v354
  %v2328 = vpop.f32.mrb[0].mxu0
  %v2329 = vadd.f32 0.0, %v2328
  %v2330 = vpop.f32.mrb[0].mxu0
  %2331 = vmatprep.mubr.f32.mxu0 0.0
  %2332 = vmatmul.mubr.f32.gmra.mrb[0].mxu0 %v357
  %v2333 = vpop.f32.mrb[0].mxu0
  %v2334 = vadd.f32 0.0, %v2333
  %v2335 = vpop.f32.mrb[0].mxu0
  %2336 = vmatprep.mubr.f32.mxu0 0.0
  %2337 = vmatmul.mubr.f32.gmra.mrb[0].mxu0 %v360
  %v2338 = vpop.f32.mrb[0].mxu0
  %v2339 = vadd.f32 0.0, %v2338
  %v2340 = vpop.f32.mrb[0].mxu0
  %2341 = vmatprep.mubr.f32.mxu0 0.0
  %2342 = vmatmul.mubr.f32.gmra.mrb[0].mxu0 %v363
  %v2343 = vpop.f32.mrb[0].mxu0
  %v2344 = vadd.f32 0.0, %v2343
  %v2345 = vpop.f32.mrb[0].mxu0
  %2346 = vmatprep.mubr.f32.mxu0 0.0
  %2347 = vmatmul.mubr.f32.gmra.mrb[0].mxu0 %v366
  %v2348 = vpop.f32.mrb[0].mxu0
  %v2349 = vadd.f32 0.0, %v2348
  %v2350 = vpop.f32.mrb[0].mxu0
  %2351 = vdwg.mxu0
  %v2352 = vmul.f32 %v2314, %v150
  %v2353 = vmul.f32 %v2319, %v151
  %v2354 = vmul.f32 %v2324, %v152
  %v2355 = vmul.f32 %v2329, %v153
  %v2356 = vmul.f32 %v2334, %v154
  %v2357 = vmul.f32 %v2339, %v155
  %v2358 = vmul.f32 %v2344, %v156
  %v2359 = vmul.f32 %v2349, %v157
  %v2361 = vsel %vm181, %v2159, 0
  %v2364 = vsel %vm181, %v2164, 0
  %v2367 = vsel %vm181, %v2352, 0
  %v2370 = vsel %vm181, %v2353, 0
  %v2373 = vsel %vm181, %v2354, 0
  %v2376 = vsel %vm181, %v2355, 0
  %v2379 = vsel %vm181, %v2356, 0
  %v2382 = vsel %vm181, %v2357, 0
  %v2385 = vsel %vm181, %v2358, 0
  %v2388 = vsel %vm181, %v2359, 0
  %2390 = vmatprep.subr.mxu0 0.0
  %2391 = vmatpush1.xpose.msra.mxu0 %v2367
  %2392 = vmatprep.subr.mxu0 0.0
  %2393 = vmatpush1.xpose.msra.mxu0 %v2370
  %2394 = vmatprep.subr.mxu0 0.0
  %2395 = vmatpush1.xpose.msra.mxu0 %v2373
  %2396 = vmatprep.subr.mxu0 0.0
  %2397 = vmatpush1.xpose.msra.mxu0 %v2376
  %2398 = vmatprep.subr.mxu0 0.0
  %2399 = vmatpush1.xpose.msra.mxu0 %v2379
  %2400 = vmatprep.subr.mxu0 0.0
  %2401 = vmatpush1.xpose.msra.mxu0 %v2382
  %2402 = vmatprep.subr.mxu0 0.0
  %2403 = vmatpush1.xpose.msra.mxu0 %v2385
  %2404 = vmatprep.subr.mxu0 0.0
  %2405 = vmatpush1.xpose.msra.mxu0 %v2388
  %2406 = vmatprep.subr.mxu0 0.0
  %2407 = vmatpush1.xpose.msra.mxu0 0.0
  %2408 = vmatprep.subr.mxu0 0.0
  %2409 = vmatpush1.xpose.msra.mxu0 0.0
  %2410 = vmatprep.subr.mxu0 0.0
  %2411 = vmatpush1.xpose.msra.mxu0 0.0
  %2412 = vmatprep.subr.mxu0 0.0
  %2413 = vmatpush1.xpose.msra.mxu0 0.0
  %2414 = vmatprep.subr.mxu0 0.0
  %2415 = vmatpush1.xpose.msra.mxu0 0.0
  %2416 = vmatprep.subr.mxu0 0.0
  %2417 = vmatpush1.xpose.msra.mxu0 0.0
  %2418 = vmatprep.subr.mxu0 0.0
  %2419 = vmatpush1.xpose.msra.mxu0 0.0
  %2420 = vmatprep.subr.mxu0 0.0
  %2421 = vmatpush1.xpose.msra.mxu0 0.0
  %2422 = vmatprep.subr.mxu0 0.0
  %2423 = vmatpush1.xpose.msra.mxu0 0.0
  %2424 = vmatprep.subr.mxu0 0.0
  %2425 = vmatpush1.xpose.msra.mxu0 0.0
  %2426 = vmatprep.subr.mxu0 0.0
  %2427 = vmatpush1.xpose.msra.mxu0 0.0
  %2428 = vmatprep.subr.mxu0 0.0
  %2429 = vmatpush1.xpose.msra.mxu0 0.0
  %2430 = vmatprep.subr.mxu0 0.0
  %2431 = vmatpush1.xpose.msra.mxu0 0.0
  %2432 = vmatprep.subr.mxu0 0.0
  %2433 = vmatpush1.xpose.msra.mxu0 0.0
  %2434 = vmatprep.subr.mxu0 0.0
  %2435 = vmatpush1.xpose.msra.mxu0 0.0
  %2436 = vmatprep.subr.mxu0 0.0
  %2437 = vmatpush1.xpose.msra.mxu0 0.0
  %2438 = vmatprep.subr.mxu0 0.0
  %2439 = vmatpush1.xpose.msra.mxu0 0.0
  %2440 = vmatprep.subr.mxu0 0.0
  %2441 = vmatpush1.xpose.msra.mxu0 0.0
  %2442 = vmatprep.subr.mxu0 0.0
  %2443 = vmatpush1.xpose.msra.mxu0 0.0
  %2444 = vmatprep.subr.mxu0 0.0
  %2445 = vmatpush1.xpose.msra.mxu0 0.0
  %2446 = vmatprep.subr.mxu0 0.0
  %2447 = vmatpush1.xpose.msra.mxu0 0.0
  %2448 = vmatprep.subr.mxu0 0.0
  %2449 = vmatpush1.xpose.msra.mxu0 0.0
  %2450 = vmatprep.subr.mxu0 0.0
  %2451 = vmatpush1.xpose.msra.mxu0 0.0
  %2452 = vmatprep.subr.mxu0 0.0
  %2453 = vmatpush1.xpose.msra.mxu0 0.0
  %2454 = vmatprep.mubr.f32.mxu0 0.0
  %2455 = vmatmul.mubr.f32.gmra.mrb[0].mxu0 %v2361
  %v2456 = vpop.f32.mrb[0].mxu0
  %v2457 = vadd.f32 0.0, %v2456
  %v2458 = vpop.f32.mrb[0].mxu0
  %2459 = vmatprep.mubr.f32.mxu0 0.0
  %2460 = vmatmul.mubr.f32.gmra.mrb[0].mxu0 %v2364
  %v2461 = vpop.f32.mrb[0].mxu0
  %v2462 = vadd.f32 0.0, %v2461
  %v2463 = vpop.f32.mrb[0].mxu0
  %2464 = vdwg.mxu0
  %v2465 = vmul.f32 %v2457, 0.35355338
  %v2466 = vmul.f32 %v2462, 0.35355338
  %v2467 = vadd.f32 %v2465, %v166
  %v2468 = vadd.f32 %v2466, %v167
  %v2469 = vsel %vm40, %v2467, -inf
  %2470 = vmax.xlane.f32.xlu0 %v2469
  %v2471 = vpop.xlane.xlu0 %2470
  %v2472 = vsel %vm40, %v2468, -inf
  %2473 = vmax.xlane.f32.xlu0 %v2472
  %v2474 = vpop.xlane.xlu0 %2473
  %v2475 = vsub.f32 %v2467, %v2471
  %v2476 = vsub.f32 %v2468, %v2474
  %v2477 = vmul.f32 %v2475, 1.442695
  %v2478 = vpow.pop %v2477
  %v2479 = vmul.f32 %v2476, 1.442695
  %v2480 = vpow.pop %v2479
  %v2482 = vsel %vm40, %v2478, 0
  %v2485 = vsel %vm40, %v2480, 0
  %2487 = vmatprep.subr.mxu0 0.0
  %2488 = vmatpush1.msra.mxu0 %v158
  %2489 = vmatprep.subr.mxu0 0.0
  %2490 = vmatpush1.msra.mxu0 %v159
  %2491 = vmatprep.subr.mxu0 0.0
  %2492 = vmatpush1.msra.mxu0 %v160
  %2493 = vmatprep.subr.mxu0 0.0
  %2494 = vmatpush1.msra.mxu0 %v161
  %2495 = vmatprep.subr.mxu0 0.0
  %2496 = vmatpush1.msra.mxu0 %v162
  %2497 = vmatprep.subr.mxu0 0.0
  %2498 = vmatpush1.msra.mxu0 %v163
  %2499 = vmatprep.subr.mxu0 0.0
  %2500 = vmatpush1.msra.mxu0 %v164
  %2501 = vmatprep.subr.mxu0 0.0
  %2502 = vmatpush1.msra.mxu0 %v165
  %2503 = vmatprep.subr.mxu0 0.0
  %2504 = vmatpush1.msra.mxu0 0.0
  %2505 = vmatprep.subr.mxu0 0.0
  %2506 = vmatpush1.msra.mxu0 0.0
  %2507 = vmatprep.subr.mxu0 0.0
  %2508 = vmatpush1.msra.mxu0 0.0
  %2509 = vmatprep.subr.mxu0 0.0
  %2510 = vmatpush1.msra.mxu0 0.0
  %2511 = vmatprep.subr.mxu0 0.0
  %2512 = vmatpush1.msra.mxu0 0.0
  %2513 = vmatprep.subr.mxu0 0.0
  %2514 = vmatpush1.msra.mxu0 0.0
  %2515 = vmatprep.subr.mxu0 0.0
  %2516 = vmatpush1.msra.mxu0 0.0
  %2517 = vmatprep.subr.mxu0 0.0
  %2518 = vmatpush1.msra.mxu0 0.0
  %2519 = vmatprep.subr.mxu0 0.0
  %2520 = vmatpush1.msra.mxu0 0.0
  %2521 = vmatprep.subr.mxu0 0.0
  %2522 = vmatpush1.msra.mxu0 0.0
  %2523 = vmatprep.subr.mxu0 0.0
  %2524 = vmatpush1.msra.mxu0 0.0
  %2525 = vmatprep.subr.mxu0 0.0
  %2526 = vmatpush1.msra.mxu0 0.0
  %2527 = vmatprep.subr.mxu0 0.0
  %2528 = vmatpush1.msra.mxu0 0.0
  %2529 = vmatprep.subr.mxu0 0.0
  %2530 = vmatpush1.msra.mxu0 0.0
  %2531 = vmatprep.subr.mxu0 0.0
  %2532 = vmatpush1.msra.mxu0 0.0
  %2533 = vmatprep.subr.mxu0 0.0
  %2534 = vmatpush1.msra.mxu0 0.0
  %2535 = vmatprep.subr.mxu0 0.0
  %2536 = vmatpush1.msra.mxu0 0.0
  %2537 = vmatprep.subr.mxu0 0.0
  %2538 = vmatpush1.msra.mxu0 0.0
  %2539 = vmatprep.subr.mxu0 0.0
  %2540 = vmatpush1.msra.mxu0 0.0
  %2541 = vmatprep.subr.mxu0 0.0
  %2542 = vmatpush1.msra.mxu0 0.0
  %2543 = vmatprep.subr.mxu0 0.0
  %2544 = vmatpush1.msra.mxu0 0.0
  %2545 = vmatprep.subr.mxu0 0.0
  %2546 = vmatpush1.msra.mxu0 0.0
  %2547 = vmatprep.subr.mxu0 0.0
  %2548 = vmatpush1.msra.mxu0 0.0
  %2549 = vmatprep.subr.mxu0 0.0
  %2550 = vmatpush1.msra.mxu0 0.0
  %2551 = vmatprep.mubr.f32.mxu0 0.0
  %2552 = vmatmul.mubr.f32.gmra.mrb[0].mxu0 %v2482
  %v2553 = vpop.f32.mrb[0].mxu0
  %v2554 = vadd.f32 0.0, %v2553
  %v2555 = vpop.f32.mrb[0].mxu0
  %2556 = vmatprep.mubr.f32.mxu0 0.0
  %2557 = vmatmul.mubr.f32.gmra.mrb[0].mxu0 %v2485
  %v2558 = vpop.f32.mrb[0].mxu0
  %v2559 = vadd.f32 0.0, %v2558
  %v2560 = vpop.f32.mrb[0].mxu0
  %2561 = vdwg.mxu0
  %v2562 = vrcp.pop %v2554
  %v2563 = vrcp.pop %v2559
  %v2564 = vmul.f32 %v2478, %v2562
  %v2565 = vmul.f32 %v2480, %v2563
  %v2567 = vsel %vm40, %v2564, 0
  %v2570 = vsel %vm40, %v2565, 0
  %2572 = vmatprep.subr.mxu0 0.0
  %2573 = vmatpush1.msra.mxu0 %v2352
  %2574 = vmatprep.subr.mxu0 0.0
  %2575 = vmatpush1.msra.mxu0 %v2353
  %2576 = vmatprep.subr.mxu0 0.0
  %2577 = vmatpush1.msra.mxu0 %v2354
  %2578 = vmatprep.subr.mxu0 0.0
  %2579 = vmatpush1.msra.mxu0 %v2355
  %2580 = vmatprep.subr.mxu0 0.0
  %2581 = vmatpush1.msra.mxu0 %v2356
  %2582 = vmatprep.subr.mxu0 0.0
  %2583 = vmatpush1.msra.mxu0 %v2357
  %2584 = vmatprep.subr.mxu0 0.0
  %2585 = vmatpush1.msra.mxu0 %v2358
  %2586 = vmatprep.subr.mxu0 0.0
  %2587 = vmatpush1.msra.mxu0 %v2359
  %2588 = vmatprep.subr.mxu0 0.0
  %2589 = vmatpush1.msra.mxu0 0.0
  %2590 = vmatprep.subr.mxu0 0.0
  %2591 = vmatpush1.msra.mxu0 0.0
  %2592 = vmatprep.subr.mxu0 0.0
  %2593 = vmatpush1.msra.mxu0 0.0
  %2594 = vmatprep.subr.mxu0 0.0
  %2595 = vmatpush1.msra.mxu0 0.0
  %2596 = vmatprep.subr.mxu0 0.0
  %2597 = vmatpush1.msra.mxu0 0.0
  %2598 = vmatprep.subr.mxu0 0.0
  %2599 = vmatpush1.msra.mxu0 0.0
  %2600 = vmatprep.subr.mxu0 0.0
  %2601 = vmatpush1.msra.mxu0 0.0
  %2602 = vmatprep.subr.mxu0 0.0
  %2603 = vmatpush1.msra.mxu0 0.0
  %2604 = vmatprep.subr.mxu0 0.0
  %2605 = vmatpush1.msra.mxu0 0.0
  %2606 = vmatprep.subr.mxu0 0.0
  %2607 = vmatpush1.msra.mxu0 0.0
  %2608 = vmatprep.subr.mxu0 0.0
  %2609 = vmatpush1.msra.mxu0 0.0
  %2610 = vmatprep.subr.mxu0 0.0
  %2611 = vmatpush1.msra.mxu0 0.0
  %2612 = vmatprep.subr.mxu0 0.0
  %2613 = vmatpush1.msra.mxu0 0.0
  %2614 = vmatprep.subr.mxu0 0.0
  %2615 = vmatpush1.msra.mxu0 0.0
  %2616 = vmatprep.subr.mxu0 0.0
  %2617 = vmatpush1.msra.mxu0 0.0
  %2618 = vmatprep.subr.mxu0 0.0
  %2619 = vmatpush1.msra.mxu0 0.0
  %2620 = vmatprep.subr.mxu0 0.0
  %2621 = vmatpush1.msra.mxu0 0.0
  %2622 = vmatprep.subr.mxu0 0.0
  %2623 = vmatpush1.msra.mxu0 0.0
  %2624 = vmatprep.subr.mxu0 0.0
  %2625 = vmatpush1.msra.mxu0 0.0
  %2626 = vmatprep.subr.mxu0 0.0
  %2627 = vmatpush1.msra.mxu0 0.0
  %2628 = vmatprep.subr.mxu0 0.0
  %2629 = vmatpush1.msra.mxu0 0.0
  %2630 = vmatprep.subr.mxu0 0.0
  %2631 = vmatpush1.msra.mxu0 0.0
  %2632 = vmatprep.subr.mxu0 0.0
  %2633 = vmatpush1.msra.mxu0 0.0
  %2634 = vmatprep.subr.mxu0 0.0
  %2635 = vmatpush1.msra.mxu0 0.0
  %2636 = vmatprep.mubr.f32.mxu0 0.0
  %2637 = vmatmul.mubr.f32.gmra.mrb[0].mxu0 %v2567
  %v2638 = vpop.f32.mrb[0].mxu0
  %v2639 = vadd.f32 0.0, %v2638
  %v2640 = vpop.f32.mrb[0].mxu0
  %2641 = vmatprep.mubr.f32.mxu0 0.0
  %2642 = vmatmul.mubr.f32.gmra.mrb[0].mxu0 %v2570
  %v2643 = vpop.f32.mrb[0].mxu0
  %v2644 = vadd.f32 0.0, %v2643
  %v2645 = vpop.f32.mrb[0].mxu0
  %2646 = vdwg.mxu0
  %v2647 = vld [vmem:[%s2 + $0x22] sm:$0x1]
  %v2648 = vlaneseq
  %v2649 = vshrl.u32 %v2648, 7
  %v2650 = vsub.s32 0, %v2649
  %v2651 = vrot.slane %v2647, %v2650
  %v2653 = vsel %vm40, %v2639, 0
  %v2656 = vsel %vm40, %v2644, 0
  %2658 = vmatprep.subr.mxu0 0.0
  %2659 = vmatpush1.msra.mxu0 %v2061
  %2660 = vmatprep.subr.mxu0 0.0
  %2661 = vmatpush1.msra.mxu0 %v2062
  %2662 = vmatprep.subr.mxu0 0.0
  %2663 = vmatpush1.msra.mxu0 %v2063
  %2664 = vmatprep.subr.mxu0 0.0
  %2665 = vmatpush1.msra.mxu0 %v2064
  %2666 = vmatprep.subr.mxu0 0.0
  %2667 = vmatpush1.msra.mxu0 %v2065
  %2668 = vmatprep.subr.mxu0 0.0
  %2669 = vmatpush1.msra.mxu0 %v2066
  %2670 = vmatprep.subr.mxu0 0.0
  %2671 = vmatpush1.msra.mxu0 %v2067
  %2672 = vmatprep.subr.mxu0 0.0
  %2673 = vmatpush1.msra.mxu0 %v2068
  %2674 = vmatprep.subr.mxu0 0.0
  %2675 = vmatpush1.msra.mxu0 0.0
  %2676 = vmatprep.subr.mxu0 0.0
  %2677 = vmatpush1.msra.mxu0 0.0
  %2678 = vmatprep.subr.mxu0 0.0
  %2679 = vmatpush1.msra.mxu0 0.0
  %2680 = vmatprep.subr.mxu0 0.0
  %2681 = vmatpush1.msra.mxu0 0.0
  %2682 = vmatprep.subr.mxu0 0.0
  %2683 = vmatpush1.msra.mxu0 0.0
  %2684 = vmatprep.subr.mxu0 0.0
  %2685 = vmatpush1.msra.mxu0 0.0
  %2686 = vmatprep.subr.mxu0 0.0
  %2687 = vmatpush1.msra.mxu0 0.0
  %2688 = vmatprep.subr.mxu0 0.0
  %2689 = vmatpush1.msra.mxu0 0.0
  %2690 = vmatprep.subr.mxu0 0.0
  %2691 = vmatpush1.msra.mxu0 0.0
  %2692 = vmatprep.subr.mxu0 0.0
  %2693 = vmatpush1.msra.mxu0 0.0
  %2694 = vmatprep.subr.mxu0 0.0
  %2695 = vmatpush1.msra.mxu0 0.0
  %2696 = vmatprep.subr.mxu0 0.0
  %2697 = vmatpush1.msra.mxu0 0.0
  %2698 = vmatprep.subr.mxu0 0.0
  %2699 = vmatpush1.msra.mxu0 0.0
  %2700 = vmatprep.subr.mxu0 0.0
  %2701 = vmatpush1.msra.mxu0 0.0
  %2702 = vmatprep.subr.mxu0 0.0
  %2703 = vmatpush1.msra.mxu0 0.0
  %2704 = vmatprep.subr.mxu0 0.0
  %2705 = vmatpush1.msra.mxu0 0.0
  %2706 = vmatprep.subr.mxu0 0.0
  %2707 = vmatpush1.msra.mxu0 0.0
  %2708 = vmatprep.subr.mxu0 0.0
  %2709 = vmatpush1.msra.mxu0 0.0
  %2710 = vmatprep.subr.mxu0 0.0
  %2711 = vmatpush1.msra.mxu0 0.0
  %2712 = vmatprep.subr.mxu0 0.0
  %2713 = vmatpush1.msra.mxu0 0.0
  %2714 = vmatprep.subr.mxu0 0.0
  %2715 = vmatpush1.msra.mxu0 0.0
  %2716 = vmatprep.subr.mxu0 0.0
  %2717 = vmatpush1.msra.mxu0 0.0
  %2718 = vmatprep.subr.mxu0 0.0
  %2719 = vmatpush1.msra.mxu0 0.0
  %2720 = vmatprep.subr.mxu0 0.0
  %2721 = vmatpush1.msra.mxu0 0.0
  %2722 = vmatprep.mubr.f32.mxu0 0.0
  %2723 = vmatmul.mubr.f32.gmra.mrb[0].mxu0 %v2653
  %v2724 = vpop.f32.mrb[0].mxu0
  %v2725 = vadd.f32 %v2651, %v2724
  %v2726 = vpop.f32.mrb[0].mxu0
  %2727 = vmatprep.mubr.f32.mxu0 0.0
  %2728 = vmatmul.mubr.f32.gmra.mrb[0].mxu0 %v2656
  %v2729 = vpop.f32.mrb[0].mxu0
  %v2730 = vadd.f32 %v2651, %v2729
  %v2731 = vpop.f32.mrb[0].mxu0
  %2732 = vdwg.mxu0
  %v2733 = vadd.f32 %v2050, %v2725
  %v2734 = vadd.f32 %v2051, %v2730
  %v2735 = vld [vmem:[%s2 + $0x25] sm:$0x1]
  %v2736 = vld [vmem:[%s2 + $0x26] sm:$0x1]
  %v2737 = vsel %vm181, %v2733, 0.0
  %2738 = vadd.xlane.f32.xlu0 %v2737
  %v2739 = vpop.xlane.xlu0 %2738
  %v2740 = vsel %vm181, %v2734, 0.0
  %2741 = vadd.xlane.f32.xlu0 %v2740
  %v2742 = vpop.xlane.xlu0 %2741
  %v2743 = vmul.f32 %v2739, %v864
  %v2744 = vmul.f32 %v2742, %v864
  %v2745 = vsub.f32 %v2733, %v2743
  %v2746 = vsub.f32 %v2734, %v2744
  %v2747 = vmul.f32 %v2745, %v2745
  %v2748 = vmul.f32 %v2746, %v2746
  %v2749 = vsel %vm181, %v2747, 0.0
  %2750 = vadd.xlane.f32.xlu0 %v2749
  %v2751 = vpop.xlane.xlu0 %2750
  %v2752 = vsel %vm181, %v2748, 0.0
  %2753 = vadd.xlane.f32.xlu0 %v2752
  %v2754 = vpop.xlane.xlu0 %2753
  %v2755 = vmul.f32 %v2751, %v864
  %v2756 = vmul.f32 %v2754, %v864
  %v2757 = vadd.f32 %v2755, 1e-05
  %v2758 = vadd.f32 %v2756, 1e-05
  %v2759 = vrsqrt.pop %v2757
  %v2760 = vrsqrt.pop %v2758
  %v2761 = vmul.f32 %v2745, %v2759
  %v2762 = vmul.f32 %v2746, %v2760
  %v2763 = vlaneseq
  %v2764 = vshrl.u32 %v2763, 7
  %v2765 = vsub.s32 0, %v2764
  %v2766 = vrot.slane %v2735, %v2765
  %v2767 = vmul.f32 %v2761, %v2766
  %v2768 = vmul.f32 %v2762, %v2766
  %v2769 = vlaneseq
  %v2770 = vshrl.u32 %v2769, 7
  %v2771 = vsub.s32 0, %v2770
  %v2772 = vrot.slane %v2736, %v2771
  %v2773 = vadd.f32 %v2767, %v2772
  %v2774 = vadd.f32 %v2768, %v2772
  %v2775 = vld [vmem:[%s2 + $0x23] sm:$0x1]
  %v2776 = vlaneseq
  %v2777 = vshrl.u32 %v2776, 7
  %v2778 = vsub.s32 0, %v2777
  %v2779 = vrot.slane %v2775, %v2778
  %v2781 = vsel %vm181, %v2773, 0
  %v2784 = vsel %vm181, %v2774, 0
  %2786 = vmatprep.subr.mxu0 0.0
  %2787 = vmatpush1.msra.mxu0 %v2069
  %2788 = vmatprep.subr.mxu0 0.0
  %2789 = vmatpush1.msra.mxu0 %v2070
  %2790 = vmatprep.subr.mxu0 0.0
  %2791 = vmatpush1.msra.mxu0 %v2071
  %2792 = vmatprep.subr.mxu0 0.0
  %2793 = vmatpush1.msra.mxu0 %v2072
  %2794 = vmatprep.subr.mxu0 0.0
  %2795 = vmatpush1.msra.mxu0 0.0
  %2796 = vmatprep.subr.mxu0 0.0
  %2797 = vmatpush1.msra.mxu0 0.0
  %2798 = vmatprep.subr.mxu0 0.0
  %2799 = vmatpush1.msra.mxu0 0.0
  %2800 = vmatprep.subr.mxu0 0.0
  %2801 = vmatpush1.msra.mxu0 0.0
  %2802 = vmatprep.subr.mxu0 0.0
  %2803 = vmatpush1.msra.mxu0 0.0
  %2804 = vmatprep.subr.mxu0 0.0
  %2805 = vmatpush1.msra.mxu0 0.0
  %2806 = vmatprep.subr.mxu0 0.0
  %2807 = vmatpush1.msra.mxu0 0.0
  %2808 = vmatprep.subr.mxu0 0.0
  %2809 = vmatpush1.msra.mxu0 0.0
  %2810 = vmatprep.subr.mxu0 0.0
  %2811 = vmatpush1.msra.mxu0 0.0
  %2812 = vmatprep.subr.mxu0 0.0
  %2813 = vmatpush1.msra.mxu0 0.0
  %2814 = vmatprep.subr.mxu0 0.0
  %2815 = vmatpush1.msra.mxu0 0.0
  %2816 = vmatprep.subr.mxu0 0.0
  %2817 = vmatpush1.msra.mxu0 0.0
  %2818 = vmatprep.subr.mxu0 0.0
  %2819 = vmatpush1.msra.mxu0 0.0
  %2820 = vmatprep.subr.mxu0 0.0
  %2821 = vmatpush1.msra.mxu0 0.0
  %2822 = vmatprep.subr.mxu0 0.0
  %2823 = vmatpush1.msra.mxu0 0.0
  %2824 = vmatprep.subr.mxu0 0.0
  %2825 = vmatpush1.msra.mxu0 0.0
  %2826 = vmatprep.subr.mxu0 0.0
  %2827 = vmatpush1.msra.mxu0 0.0
  %2828 = vmatprep.subr.mxu0 0.0
  %2829 = vmatpush1.msra.mxu0 0.0
  %2830 = vmatprep.subr.mxu0 0.0
  %2831 = vmatpush1.msra.mxu0 0.0
  %2832 = vmatprep.subr.mxu0 0.0
  %2833 = vmatpush1.msra.mxu0 0.0
  %2834 = vmatprep.subr.mxu0 0.0
  %2835 = vmatpush1.msra.mxu0 0.0
  %2836 = vmatprep.subr.mxu0 0.0
  %2837 = vmatpush1.msra.mxu0 0.0
  %2838 = vmatprep.subr.mxu0 0.0
  %2839 = vmatpush1.msra.mxu0 0.0
  %2840 = vmatprep.subr.mxu0 0.0
  %2841 = vmatpush1.msra.mxu0 0.0
  %2842 = vmatprep.subr.mxu0 0.0
  %2843 = vmatpush1.msra.mxu0 0.0
  %2844 = vmatprep.subr.mxu0 0.0
  %2845 = vmatpush1.msra.mxu0 0.0
  %2846 = vmatprep.subr.mxu0 0.0
  %2847 = vmatpush1.msra.mxu0 0.0
  %2848 = vmatprep.subr.mxu0 0.0
  %2849 = vmatpush1.msra.mxu0 0.0
  %2850 = vmatprep.mubr.f32.mxu0 0.0
  %2851 = vmatmul.mubr.f32.gmra.mrb[0].mxu0 %v2781
  %v2852 = vpop.f32.mrb[0].mxu0
  %v2853 = vadd.f32 %v2779, %v2852
  %v2854 = vpop.f32.mrb[0].mxu0
  %2855 = vmatprep.mubr.f32.mxu0 0.0
  %2856 = vmatmul.mubr.f32.gmra.mrb[0].mxu0 %v2784
  %v2857 = vpop.f32.mrb[0].mxu0
  %v2858 = vadd.f32 %v2779, %v2857
  %v2859 = vpop.f32.mrb[0].mxu0
  %2860 = vdwg.mxu0
  %v2861 = vmax.f32 %v2853, 0.0
  %v2862 = vmax.f32 %v2858, 0.0
  %v2863 = vld [vmem:[%s2 + $0x24] sm:$0x1]
  %v2864 = vlaneseq
  %v2865 = vshrl.u32 %v2864, 7
  %v2866 = vsub.s32 0, %v2865
  %v2867 = vrot.slane %v2863, %v2866
  %v2869 = vsel %vm40, %v2861, 0
  %v2872 = vsel %vm40, %v2862, 0
  %2874 = vmatprep.subr.mxu0 0.0
  %2875 = vmatpush1.msra.mxu0 %v2073
  %2876 = vmatprep.subr.mxu0 0.0
  %2877 = vmatpush1.msra.mxu0 %v2074
  %2878 = vmatprep.subr.mxu0 0.0
  %2879 = vmatpush1.msra.mxu0 %v2075
  %2880 = vmatprep.subr.mxu0 0.0
  %2881 = vmatpush1.msra.mxu0 %v2076
  %2882 = vmatprep.subr.mxu0 0.0
  %2883 = vmatpush1.msra.mxu0 %v2077
  %2884 = vmatprep.subr.mxu0 0.0
  %2885 = vmatpush1.msra.mxu0 %v2078
  %2886 = vmatprep.subr.mxu0 0.0
  %2887 = vmatpush1.msra.mxu0 %v2079
  %2888 = vmatprep.subr.mxu0 0.0
  %2889 = vmatpush1.msra.mxu0 %v2080
  %2890 = vmatprep.subr.mxu0 0.0
  %2891 = vmatpush1.msra.mxu0 0.0
  %2892 = vmatprep.subr.mxu0 0.0
  %2893 = vmatpush1.msra.mxu0 0.0
  %2894 = vmatprep.subr.mxu0 0.0
  %2895 = vmatpush1.msra.mxu0 0.0
  %2896 = vmatprep.subr.mxu0 0.0
  %2897 = vmatpush1.msra.mxu0 0.0
  %2898 = vmatprep.subr.mxu0 0.0
  %2899 = vmatpush1.msra.mxu0 0.0
  %2900 = vmatprep.subr.mxu0 0.0
  %2901 = vmatpush1.msra.mxu0 0.0
  %2902 = vmatprep.subr.mxu0 0.0
  %2903 = vmatpush1.msra.mxu0 0.0
  %2904 = vmatprep.subr.mxu0 0.0
  %2905 = vmatpush1.msra.mxu0 0.0
  %2906 = vmatprep.subr.mxu0 0.0
  %2907 = vmatpush1.msra.mxu0 0.0
  %2908 = vmatprep.subr.mxu0 0.0
  %2909 = vmatpush1.msra.mxu0 0.0
  %2910 = vmatprep.subr.mxu0 0.0
  %2911 = vmatpush1.msra.mxu0 0.0
  %2912 = vmatprep.subr.mxu0 0.0
  %2913 = vmatpush1.msra.mxu0 0.0
  %2914 = vmatprep.subr.mxu0 0.0
  %2915 = vmatpush1.msra.mxu0 0.0
  %2916 = vmatprep.subr.mxu0 0.0
  %2917 = vmatpush1.msra.mxu0 0.0
  %2918 = vmatprep.subr.mxu0 0.0
  %2919 = vmatpush1.msra.mxu0 0.0
  %2920 = vmatprep.subr.mxu0 0.0
  %2921 = vmatpush1.msra.mxu0 0.0
  %2922 = vmatprep.subr.mxu0 0.0
  %2923 = vmatpush1.msra.mxu0 0.0
  %2924 = vmatprep.subr.mxu0 0.0
  %2925 = vmatpush1.msra.mxu0 0.0
  %2926 = vmatprep.subr.mxu0 0.0
  %2927 = vmatpush1.msra.mxu0 0.0
  %2928 = vmatprep.subr.mxu0 0.0
  %2929 = vmatpush1.msra.mxu0 0.0
  %2930 = vmatprep.subr.mxu0 0.0
  %2931 = vmatpush1.msra.mxu0 0.0
  %2932 = vmatprep.subr.mxu0 0.0
  %2933 = vmatpush1.msra.mxu0 0.0
  %2934 = vmatprep.subr.mxu0 0.0
  %2935 = vmatpush1.msra.mxu0 0.0
  %2936 = vmatprep.subr.mxu0 0.0
  %2937 = vmatpush1.msra.mxu0 0.0
  %2938 = vmatprep.mubr.f32.mxu0 0.0
  %2939 = vmatmul.mubr.f32.gmra.mrb[0].mxu0 %v2869
  %v2940 = vpop.f32.mrb[0].mxu0
  %v2941 = vadd.f32 %v2867, %v2940
  %v2942 = vpop.f32.mrb[0].mxu0
  %2943 = vmatprep.mubr.f32.mxu0 0.0
  %2944 = vmatmul.mubr.f32.gmra.mrb[0].mxu0 %v2872
  %v2945 = vpop.f32.mrb[0].mxu0
  %v2946 = vadd.f32 %v2867, %v2945
  %v2947 = vpop.f32.mrb[0].mxu0
  %2948 = vdwg.mxu0
  %v2949 = vadd.f32 %v2773, %v2941
  %v2950 = vadd.f32 %v2774, %v2946
  %v2951 = vld [vmem:[%s2 + $0x27] sm:$0x1]
  %v2952 = vld [vmem:[%s2 + $0x28] sm:$0x1]
  %v2953 = vsel %vm181, %v2949, 0.0
  %2954 = vadd.xlane.f32.xlu0 %v2953
  %v2955 = vpop.xlane.xlu0 %2954
  %v2956 = vsel %vm181, %v2950, 0.0
  %2957 = vadd.xlane.f32.xlu0 %v2956
  %v2958 = vpop.xlane.xlu0 %2957
  %v2959 = vmul.f32 %v2955, %v864
  %v2960 = vmul.f32 %v2958, %v864
  %v2961 = vsub.f32 %v2949, %v2959
  %v2962 = vsub.f32 %v2950, %v2960
  %v2963 = vmul.f32 %v2961, %v2961
  %v2964 = vmul.f32 %v2962, %v2962
  %v2965 = vsel %vm181, %v2963, 0.0
  %2966 = vadd.xlane.f32.xlu0 %v2965
  %v2967 = vpop.xlane.xlu0 %2966
  %v2968 = vsel %vm181, %v2964, 0.0
  %2969 = vadd.xlane.f32.xlu0 %v2968
  %v2970 = vpop.xlane.xlu0 %2969
  %v2971 = vmul.f32 %v2967, %v864
  %v2972 = vmul.f32 %v2970, %v864
  %v2973 = vadd.f32 %v2971, 1e-05
  %v2974 = vadd.f32 %v2972, 1e-05
  %v2975 = vrsqrt.pop %v2973
  %v2976 = vrsqrt.pop %v2974
  %v2977 = vmul.f32 %v2961, %v2975
  %v2978 = vmul.f32 %v2962, %v2976
  %v2979 = vlaneseq
  %v2980 = vshrl.u32 %v2979, 7
  %v2981 = vsub.s32 0, %v2980
  %v2982 = vrot.slane %v2951, %v2981
  %v2983 = vmul.f32 %v2977, %v2982
  %v2984 = vmul.f32 %v2978, %v2982
  %v2985 = vlaneseq
  %v2986 = vshrl.u32 %v2985, 7
  %v2987 = vsub.s32 0, %v2986
  %v2988 = vrot.slane %v2952, %v2987
  %v2989 = vadd.f32 %v2983, %v2988
  %v2990 = vadd.f32 %v2984, %v2988
  %v2991 = vld [vmem:[%s2 + $0x158] sm:$0x3]
  %v2993 = vsel %vm343, %v2991, 0
  %2995 = vmatprep.subr.mxu0 0.0
  %2996 = vmatpush1.msra.mxu0 %v2989
  %2997 = vmatprep.subr.mxu0 0.0
  %2998 = vmatpush1.msra.mxu0 %v2990
  %2999 = vmatprep.subr.mxu0 0.0
  %3000 = vmatpush1.msra.mxu0 0.0
  %3001 = vmatprep.subr.mxu0 0.0
  %3002 = vmatpush1.msra.mxu0 0.0
  %3003 = vmatprep.subr.mxu0 0.0
  %3004 = vmatpush1.msra.mxu0 0.0
  %3005 = vmatprep.subr.mxu0 0.0
  %3006 = vmatpush1.msra.mxu0 0.0
  %3007 = vmatprep.subr.mxu0 0.0
  %3008 = vmatpush1.msra.mxu0 0.0
  %3009 = vmatprep.subr.mxu0 0.0
  %3010 = vmatpush1.msra.mxu0 0.0
  %3011 = vmatprep.subr.mxu0 0.0
  %3012 = vmatpush1.msra.mxu0 0.0
  %3013 = vmatprep.subr.mxu0 0.0
  %3014 = vmatpush1.msra.mxu0 0.0
  %3015 = vmatprep.subr.mxu0 0.0
  %3016 = vmatpush1.msra.mxu0 0.0
  %3017 = vmatprep.subr.mxu0 0.0
  %3018 = vmatpush1.msra.mxu0 0.0
  %3019 = vmatprep.subr.mxu0 0.0
  %3020 = vmatpush1.msra.mxu0 0.0
  %3021 = vmatprep.subr.mxu0 0.0
  %3022 = vmatpush1.msra.mxu0 0.0
  %3023 = vmatprep.subr.mxu0 0.0
  %3024 = vmatpush1.msra.mxu0 0.0
  %3025 = vmatprep.subr.mxu0 0.0
  %3026 = vmatpush1.msra.mxu0 0.0
  %3027 = vmatprep.subr.mxu0 0.0
  %3028 = vmatpush1.msra.mxu0 0.0
  %3029 = vmatprep.subr.mxu0 0.0
  %3030 = vmatpush1.msra.mxu0 0.0
  %3031 = vmatprep.subr.mxu0 0.0
  %3032 = vmatpush1.msra.mxu0 0.0
  %3033 = vmatprep.subr.mxu0 0.0
  %3034 = vmatpush1.msra.mxu0 0.0
  %3035 = vmatprep.subr.mxu0 0.0
  %3036 = vmatpush1.msra.mxu0 0.0
  %3037 = vmatprep.subr.mxu0 0.0
  %3038 = vmatpush1.msra.mxu0 0.0
  %3039 = vmatprep.subr.mxu0 0.0
  %3040 = vmatpush1.msra.mxu0 0.0
  %3041 = vmatprep.subr.mxu0 0.0
  %3042 = vmatpush1.msra.mxu0 0.0
  %3043 = vmatprep.subr.mxu0 0.0
  %3044 = vmatpush1.msra.mxu0 0.0
  %3045 = vmatprep.subr.mxu0 0.0
  %3046 = vmatpush1.msra.mxu0 0.0
  %3047 = vmatprep.subr.mxu0 0.0
  %3048 = vmatpush1.msra.mxu0 0.0
  %3049 = vmatprep.subr.mxu0 0.0
  %3050 = vmatpush1.msra.mxu0 0.0
  %3051 = vmatprep.subr.mxu0 0.0
  %3052 = vmatpush1.msra.mxu0 0.0
  %3053 = vmatprep.subr.mxu0 0.0
  %3054 = vmatpush1.msra.mxu0 0.0
  %3055 = vmatprep.subr.mxu0 0.0
  %3056 = vmatpush1.msra.mxu0 0.0
  %3057 = vmatprep.subr.mxu0 0.0
  %3058 = vmatpush1.msra.mxu0 0.0
  %3059 = vmatprep.mubr.f32.mxu0 0.0
  %3060 = vmatmul.mubr.f32.gmra.mrb[0].mxu0 %v2993
  %v3061 = vpop.f32.mrb[0].mxu0
  %v3062 = vadd.f32 0.0, %v3061
  %v3063 = vpop.f32.mrb[0].mxu0
  %3064 = vdwg.mxu0
  %v3065 = vld [vmem:[%s2 + $0x30] sm:$0x1]
  %v3066 = vld [vmem:[%s2 + $0x31] sm:$0x1]
  %vm3067 = vcmask 254976
  %v3068 = vsel %vm3067, %v3062, 0.0
  %3069 = vadd.xlane.f32.xlu0 %v3068
  %v3070 = vpop.xlane.xlu0 %3069
  %v3071 = vmul.f32 %v3070, %v864
  %v3072 = vsub.f32 %v3062, %v3071
  %v3073 = vmul.f32 %v3072, %v3072
  %v3074 = vsel %vm3067, %v3073, 0.0
  %3075 = vadd.xlane.f32.xlu0 %v3074
  %v3076 = vpop.xlane.xlu0 %3075
  %v3077 = vmul.f32 %v3076, %v864
  %v3078 = vadd.f32 %v3077, 1e-05
  %v3079 = vrsqrt.pop %v3078
  %v3080 = vmul.f32 %v3072, %v3079
  %v3081 = vlaneseq
  %v3082 = vshrl.u32 %v3081, 7
  %v3083 = vsub.s32 0, %v3082
  %v3084 = vrot.slane %v3065, %v3083
  %v3085 = vmul.f32 %v3080, %v3084
  %v3086 = vlaneseq
  %v3087 = vshrl.u32 %v3086, 7
  %v3088 = vsub.s32 0, %v3087
  %v3089 = vrot.slane %v3066, %v3088
  %v3090 = vadd.f32 %v3085, %v3089
  %v3091 = vld [vmem:[%s2 + $0x32] sm:$0x1]
  %v3092 = vlaneseq
  %v3093 = vshrl.u32 %v3092, 7
  %v3094 = vsub.s32 0, %v3093
  %v3095 = vrot.slane %v3091, %v3094
  %v3096 = vmul.f32 %v3090, %v3095
  %v3097 = vsel %vm3067, %v3096, 0.0
  %3098 = vadd.xlane.f32.xlu0 %v3097
  %v3099 = vpop.xlane.xlu0 %3098
  %v3100 = vld [vmem:[%s2 + $0x33] sm:$0x1]
  %v3101 = vlaneseq
  %v3102 = vshrl.u32 %v3101, 7
  %v3103 = vsub.s32 0, %v3102
  %v3104 = vrot.slane %v3100, %v3103
  %v3105 = vadd.f32 %v3099, %v3104
  %v3106 = vsub.f32 0.0, %v3105
  %v3107 = vmul.f32 %v3106, 1.442695
  %v3108 = vpow.pop %v3107
  %v3109 = vadd.f32 %v3108, 1.0
  %v3110 = vrcp.pop %v3109
  %v3111 = vmul.f32 1.0, %v3110
  %vm3112 = vcmask 1024
  %3113 = vst.msk [vmem:[%s3] sm:$0x3] %vm3112, %v3111
  // Predicated region
  $region14: #{tpu_custom_call.1} parent=0 // pred_check
    _
  $region15: #{tpu_custom_call.1} parent=0 // pred_check_branch
    %3115 = sbr.rel (0) target = $region17
  $region16: #{tpu_custom_call.1} parent=0 // pred_region
    _
  $region17: #{tpu_custom_call.1} parent=0 // pred_fallthru
    _
  // Predicated region
  $region18: #{tpu_custom_call.1} parent=0 // pred_check
    _
  $region19: #{tpu_custom_call.1} parent=0 // pred_check_branch
    %3117 = sbr.rel (0) target = $region21
  $region20: #{tpu_custom_call.1} parent=0 // pred_region
    _
  $region21: #{tpu_custom_call.1} parent=0 // pred_fallthru
    _

</llo_original>
